<compile_context>
chip_gen: v7x
topology: tpu7x:2x2x1
jax: 0.10.0
libtpu: 0.0.40
codegen_flags: <defaults>
</compile_context>

<pallas_src>
import functools

import jax
import jax.numpy as jnp
from jax.experimental import pallas as pl
from jax.experimental.pallas import tpu as pltpu


def _round_up(x, m):
    return (x + m - 1) // m * m


# ----------------------------------------------------------------------------
# Fused Pallas kernel: (conv3x3 + folded BN + ReLU) x 2 on one flat row-tile
# ----------------------------------------------------------------------------
def _double_conv_kernel(x_ref, w1_ref, s1_ref, b1_ref, w2_ref, s2_ref, b2_ref,
                        o_ref, *, TH, Wp, W):
    """
    x_ref : (1, 1, Pin, Cin)     bf16  flat zero-padded slab, Pin = (TH+4)*Wp + 4
    w1_ref: (9, Cin, Cmid_p)     bf16  conv1 weights, tap-major (dy, dx)
    s1/b1 : (1, Cmid_p)          f32   folded BN1 scale / bias (zeros in padded lanes)
    w2_ref: (9, Cmid_p, Cout_p)  bf16  conv2 weights
    s2/b2 : (1, Cout_p)          f32   folded BN2 scale / bias
    o_ref : (1, 1, Pout, Cout_p) bf16  Pout = TH*Wp (padded cols/channels cut outside)
    """
    Ph = (TH + 2) * Wp + 2          # flat h-halo length (one halo row top & bottom)
    Pout = TH * Wp                  # flat output length per tile

    xs = x_ref[0, 0]                # (Pin, Cin) bf16

    # ---- conv1: nine shifted flat-window slices accumulated into ONE f32 acc ------
    acc1 = None
    for dy in range(3):
        for dx in range(3):
            off = dy * Wp + dx      # dy offsets are 8-aligned since Wp % 8 == 0
            part = jnp.dot(xs[off:off + Ph, :], w1_ref[3 * dy + dx],
                           preferred_element_type=jnp.float32)
            acc1 = part if acc1 is None else acc1 + part
    h = jnp.maximum(acc1 * s1_ref[0] + b1_ref[0], 0.0)        # folded BN1 + ReLU (f32)

    # ---- in-kernel h-halo validity mask (conv2's zero SAME padding) ---------------
    # Rows of the halo grid that fall outside the image form a contiguous flat-index
    # interval per tile (top halo invalid only for the first tile, bottom halo only
    # for the last); columns need a single remainder against the padded width.
    p = jax.lax.broadcasted_iota(jnp.int32, (Ph, 1), 0)
    c = p % Wp
    t = pl.program_id(1)
    lo = jnp.where(t == 0, Wp, 0)
    hi = jnp.where(t == pl.num_programs(1) - 1, (TH + 1) * Wp, (TH + 2) * Wp)
    valid = (p >= lo) & (p < hi) & (c >= 1) & (c <= W)
    h = jnp.where(valid, h, 0.0)
    hb = h.astype(w2_ref.dtype)                               # bf16 for the MXU

    # ---- conv2: nine shifted flat windows of h, accumulated in f32 ----------------
    acc2 = None
    for dy in range(3):
        for dx in range(3):
            off = dy * Wp + dx
            part = jnp.dot(hb[off:off + Pout, :], w2_ref[3 * dy + dx],
                           preferred_element_type=jnp.float32)
            acc2 = part if acc2 is None else acc2 + part
    y = jnp.maximum(acc2 * s2_ref[0] + b2_ref[0], 0.0)        # folded BN2 + ReLU (f32)
    o_ref[0, 0] = y.astype(o_ref.dtype)


# ----------------------------------------------------------------------------
# Wrapper glue
# ----------------------------------------------------------------------------
def fold_bn(b_conv, gamma, beta, mean, var, eps=1e-5):
    scale = gamma / jnp.sqrt(var + eps)
    return scale, beta + scale * (b_conv - mean)


def _vmem_capacity_bytes():
    try:
        return int(pltpu.get_tpu_info().vmem_capacity_bytes)
    except Exception:
        return 128 * 1024 * 1024    # v5e/v6e default; v7x handled by the min() below


def _est_tile_vmem(TH, Wp, Cin, Cmid_p, Cout_p, out_itemsize):
    """Rough per-grid-step VMEM working set (double-buffered in/out + live temps)."""
    Pin = (TH + 4) * Wp + 4
    Ph = (TH + 2) * Wp + 2
    Pout = TH * Wp
    slab = Pin * Cin * 2 * 2                    # bf16 input slab, double-buffered
    out = Pout * Cout_p * out_itemsize * 2      # output block, double-buffered
    h = Ph * Cmid_p * (4 + 2)                   # f32 acc + bf16 copy of mid activation
    acc2 = Pout * Cout_p * 4
    wts = (9 * Cin * Cmid_p + 9 * Cmid_p * Cout_p) * 2 * 2
    mask = Ph * 512 * 2                         # (Ph,1) iota/mask temps lane-pad to 128
    return int((slab + out + h + acc2 + wts + mask) * 1.25)   # slice/relayout headroom


def _pick_row_tile(H, fits):
    """Largest divisor of H that fits the VMEM budget, preferring >= 2 row tiles."""
    divs = [d for d in range(1, H + 1) if H % d == 0]
    ok = [d for d in divs if fits(d)]
    if not ok:
        return 1
    multi = [d for d in ok if d < H]            # >= 2 tiles: megacore + pipeline depth
    pref = [d for d in multi if d >= 8]
    if pref:
        return max(pref)
    if H in ok:
        return H
    return max(multi)


def double_conv(x_nchw, params, *, eps=1e-5, row_tile=None,
                out_dtype=jnp.bfloat16, nhwc_out=False):
    w1, w2 = params["w1"], params["w2"]
    B, Cin, H, W = x_nchw.shape
    Cmid, Cout = w1.shape[-1], w2.shape[-1]
    assert w1.shape == (3, 3, Cin, Cmid) and w2.shape == (3, 3, Cmid, Cout)

    # Fold eval-mode BatchNorm (+ conv bias) into per-channel scale/bias.
    s1, b1 = fold_bn(params["b1"], params["g1"], params["beta1"],
                     params["mean1"], params["var1"], eps)
    s2, b2 = fold_bn(params["b2"], params["g2"], params["beta2"],
                     params["mean2"], params["var2"], eps)

    # Lane-dense channel padding (Cmid/Cout < 128 would force masked vst stores).
    Cmid_p = _round_up(Cmid, 128)
    Cout_p = _round_up(Cout, 128)

    # Padded width rounded to a sublane multiple so dy tap offsets are 8-aligned.
    Wp = _round_up(W + 4, 8)
    out_itemsize = jnp.dtype(out_dtype).itemsize

    # Generation-aware VMEM budget (v5e/v6e: 128 MiB physical, v7x: 64 MiB).
    cap = _vmem_capacity_bytes()
    vmem_limit = int(min(100 * 2 ** 20, max(32 * 2 ** 20, cap - 8 * 2 ** 20)))
    budget = int(vmem_limit * 0.85)

    if row_tile is None:
        TH = _pick_row_tile(
            H, lambda d: _est_tile_vmem(d, Wp, Cin, Cmid_p, Cout_p, out_itemsize) <= budget)
    else:
        TH = row_tile
    assert H % TH == 0
    NT = H // TH
    Pin = (TH + 4) * Wp + 4
    Ph = (TH + 2) * Wp + 2
    Pout = TH * Wp

    # NCHW -> NHWC bf16, zero-pad (2 rows top/bottom, 2 cols left, >=2 cols right so
    # Wp % 8 == 0), cut overlapping (TH+4)-row slabs per row tile, flatten spatially.
    x = jnp.transpose(x_nchw, (0, 2, 3, 1)).astype(jnp.bfloat16)
    xp = jnp.pad(x, ((0, 0), (2, 2), (2, Wp - W - 2), (0, 0)))          # (B, H+4, Wp, Cin)
    slabs = jnp.stack([xp[:, t * TH: t * TH + TH + 4] for t in range(NT)], axis=1)
    xflat = slabs.reshape(B, NT, (TH + 4) * Wp, Cin)
    xflat = jnp.pad(xflat, ((0, 0), (0, 0), (0, 4), (0, 0)))            # (B, NT, Pin, Cin)

    # Weights / folded BN affine, tap-major, padded to the lane-dense channel widths.
    w1p = jnp.pad(w1, ((0, 0), (0, 0), (0, 0), (0, Cmid_p - Cmid)))
    w1p = w1p.reshape(9, Cin, Cmid_p).astype(jnp.bfloat16)
    w2p = jnp.pad(w2, ((0, 0), (0, 0), (0, Cmid_p - Cmid), (0, Cout_p - Cout)))
    w2p = w2p.reshape(9, Cmid_p, Cout_p).astype(jnp.bfloat16)
    s1p = jnp.pad(s1, (0, Cmid_p - Cmid)).reshape(1, Cmid_p).astype(jnp.float32)
    b1p = jnp.pad(b1, (0, Cmid_p - Cmid)).reshape(1, Cmid_p).astype(jnp.float32)
    s2p = jnp.pad(s2, (0, Cout_p - Cout)).reshape(1, Cout_p).astype(jnp.float32)
    b2p = jnp.pad(b2, (0, Cout_p - Cout)).reshape(1, Cout_p).astype(jnp.float32)

    flops = 2 * B * NT * (Ph * 9 * Cin * Cmid_p + Pout * 9 * Cmid_p * Cout_p)
    bytes_accessed = (xflat.size * 2 + B * NT * Pout * Cout_p * out_itemsize
                      + (w1p.size + w2p.size) * 2 + (Cmid_p + Cout_p) * 2 * 4)

    kernel = functools.partial(_double_conv_kernel, TH=TH, Wp=Wp, W=W)
    out = pl.pallas_call(
        kernel,
        out_shape=jax.ShapeDtypeStruct((B, NT, Pout, Cout_p), out_dtype),
        grid=(B, NT),
        in_specs=[
            pl.BlockSpec((1, 1, Pin, Cin), lambda b, t: (b, t, 0, 0)),
            pl.BlockSpec((9, Cin, Cmid_p), lambda b, t: (0, 0, 0)),
            pl.BlockSpec((1, Cmid_p), lambda b, t: (0, 0)),
            pl.BlockSpec((1, Cmid_p), lambda b, t: (0, 0)),
            pl.BlockSpec((9, Cmid_p, Cout_p), lambda b, t: (0, 0, 0)),
            pl.BlockSpec((1, Cout_p), lambda b, t: (0, 0)),
            pl.BlockSpec((1, Cout_p), lambda b, t: (0, 0)),
        ],
        out_specs=pl.BlockSpec((1, 1, Pout, Cout_p), lambda b, t: (b, t, 0, 0)),
        compiler_params=pltpu.CompilerParams(
            dimension_semantics=("parallel", "parallel"),   # batch x row-tile, independent
            vmem_limit_bytes=vmem_limit,
        ),
        cost_estimate=pl.CostEstimate(flops=int(flops), transcendentals=0,
                                      bytes_accessed=int(bytes_accessed)),
    )(xflat, w1p, s1p, b1p, w2p, s2p, b2p)

    # (B, NT, TH*Wp, Cout_p) -> drop padded columns/channels -> NHWC / NCHW.
    out = out.reshape(B, NT, TH, Wp, Cout_p)[:, :, :, :W, :Cout].reshape(B, H, W, Cout)
    if nhwc_out:
        return out
    # TODO(synk): downstream UNet layers should consume NHWC bf16 directly; the NCHW
    #             transpose is kept only to match the nn.Module output layout.
    return jnp.transpose(out, (0, 3, 1, 2))


# ----------------------------------------------------------------------------
# Pure-JAX f32 reference (same forward semantics, eval-mode BatchNorm)
# ----------------------------------------------------------------------------
def double_conv_reference(x_nchw, p, eps=1e-5):
    x = jnp.transpose(x_nchw, (0, 2, 3, 1))

    def block(xin, w, b, gamma, beta, mean, var):
        y = jax.lax.conv_general_dilated(
            xin, w, (1, 1), "SAME",
            dimension_numbers=("NHWC", "HWIO", "NHWC")) + b
        y = (y - mean) / jnp.sqrt(var + eps) * gamma + beta
        return jnp.maximum(y, 0.0)

    h = block(x, p["w1"], p["b1"], p["g1"], p["beta1"], p["mean1"], p["var1"])
    o = block(h, p["w2"], p["b2"], p["g2"], p["beta2"], p["mean2"], p["var2"])
    return jnp.transpose(o, (0, 3, 1, 2))


# ----------------------------------------------------------------------------
# Deterministic parameter init  (DoubleConv(in_channels, out_channels, mid_channels))
# ----------------------------------------------------------------------------
def make_params(key, in_ch, out_ch, mid_ch=None):
    if mid_ch is None:
        mid_ch = out_ch
    ks = jax.random.split(key, 12)
    f32 = jnp.float32
    return {
        "w1": 0.1 * jax.random.normal(ks[0], (3, 3, in_ch, mid_ch), f32),
        "b1": 0.05 * jax.random.normal(ks[1], (mid_ch,), f32),
        "g1": 1.0 + 0.1 * jax.random.normal(ks[2], (mid_ch,), f32),
        "beta1": 0.1 * jax.random.normal(ks[3], (mid_ch,), f32),
        "mean1": 0.1 * jax.random.normal(ks[4], (mid_ch,), f32),
        "var1": 1.0 + 0.1 * jnp.abs(jax.random.normal(ks[5], (mid_ch,), f32)),
        "w2": 0.1 * jax.random.normal(ks[6], (3, 3, mid_ch, out_ch), f32),
        "b2": 0.05 * jax.random.normal(ks[7], (out_ch,), f32),
        "g2": 1.0 + 0.1 * jax.random.normal(ks[8], (out_ch,), f32),
        "beta2": 0.1 * jax.random.normal(ks[9], (out_ch,), f32),
        "mean2": 0.1 * jax.random.normal(ks[10], (out_ch,), f32),
        "var2": 1.0 + 0.1 * jnp.abs(jax.random.normal(ks[11], (out_ch,), f32)),
    }


if __name__ == "__main__":
    key = jax.random.PRNGKey(0)
    configs = [
        dict(B=2, cin=4, cout=8, mid=None, H=16, W=16),   # multi-tile path (TH=8, NT=2)
        dict(B=1, cin=3, cout=5, mid=6, H=8, W=8),        # single-tile path, odd channels
    ]
    for cfg in configs:
        key, kx, kp = jax.random.split(key, 3)
        x = jax.random.normal(kx, (cfg["B"], cfg["cin"], cfg["H"], cfg["W"]), jnp.float32)
        p = make_params(kp, cfg["cin"], cfg["cout"], cfg["mid"])

        out = jax.block_until_ready(double_conv(x, p))
        ref = jax.block_until_ready(double_conv_reference(x, p))

        assert out.shape == ref.shape, (out.shape, ref.shape)
        err = float(jnp.max(jnp.abs(out.astype(jnp.float32) - ref)))
        # bf16 inputs/weights/output with f32 accumulation -> loosened tolerance vs f32 ref
        assert err < 6e-2, f"max abs err {err}"
    print("KERNEL_OK")
</pallas_src>

<mosaic_0001>
module attributes {stable_mosaic.version = 11 : i64} {
  func.func @_double_conv_kernel(%arg0: i32, %arg1: i32, %arg2: memref<1x1x292x4xbf16, #tpu.memory_space<vmem>>, %arg3: memref<9x4x128xbf16, #tpu.memory_space<vmem>>, %arg4: memref<1x128xf32, #tpu.memory_space<vmem>>, %arg5: memref<1x128xf32, #tpu.memory_space<vmem>>, %arg6: memref<9x128x128xbf16, #tpu.memory_space<vmem>>, %arg7: memref<1x128xf32, #tpu.memory_space<vmem>>, %arg8: memref<1x128xf32, #tpu.memory_space<vmem>>, %arg9: memref<1x1x192x128xbf16, #tpu.memory_space<vmem>>) attributes {dimension_semantics = [#tpu.dimension_semantics<parallel>, #tpu.dimension_semantics<parallel>], iteration_bounds = array<i64: 2, 2>, scalar_prefetch = 0 : i64, scratch_operands = 0 : i64, tpu.core_type = #tpu.core_type<tc>, window_params = [{transform_indices = @transform_0, window_bounds = array<i64: 1, 1, 292, 4>}, {pipeline_mode = #tpu.pipeline_mode<synchronous>, transform_indices = @transform_1, window_bounds = array<i64: 9, 4, 128>}, {pipeline_mode = #tpu.pipeline_mode<synchronous>, transform_indices = @transform_2, window_bounds = array<i64: 1, 128>}, {pipeline_mode = #tpu.pipeline_mode<synchronous>, transform_indices = @transform_3, window_bounds = array<i64: 1, 128>}, {pipeline_mode = #tpu.pipeline_mode<synchronous>, transform_indices = @transform_4, window_bounds = array<i64: 9, 128, 128>}, {pipeline_mode = #tpu.pipeline_mode<synchronous>, transform_indices = @transform_5, window_bounds = array<i64: 1, 128>}, {pipeline_mode = #tpu.pipeline_mode<synchronous>, transform_indices = @transform_6, window_bounds = array<i64: 1, 128>}, {transform_indices = @transform_7, window_bounds = array<i64: 1, 1, 192, 128>}]} {
    %c0 = arith.constant 0 : index
    %c0_0 = arith.constant 0 : index
    %c0_1 = arith.constant 0 : index
    %c0_2 = arith.constant 0 : index
    %0 = vector.load %arg2[%c0, %c0_0, %c0_1, %c0_2] : memref<1x1x292x4xbf16, #tpu.memory_space<vmem>>, vector<1x1x292x4xbf16>
    %1 = vector.shape_cast %0 : vector<1x1x292x4xbf16> to vector<292x4xbf16>
    %2 = vector.extract_strided_slice %1 {offsets = [0, 0], sizes = [242, 4], strides = [1, 1]} : vector<292x4xbf16> to vector<242x4xbf16>
    %c0_3 = arith.constant 0 : index
    %c0_4 = arith.constant 0 : index
    %c0_5 = arith.constant 0 : index
    %3 = vector.load %arg3[%c0_3, %c0_4, %c0_5] : memref<9x4x128xbf16, #tpu.memory_space<vmem>>, vector<1x4x128xbf16>
    %4 = vector.shape_cast %3 : vector<1x4x128xbf16> to vector<4x128xbf16>
    %cst = arith.constant dense<0.000000e+00> : vector<242x128xf32>
    %5 = tpu.matmul %2, %4, %cst {dimension_numbers = #tpu.dot_dimension_numbers<[1], [0], [0], [1], [0, 0, 1, 1], [], []>} : vector<242x4xbf16>, vector<4x128xbf16>, vector<242x128xf32> -> vector<242x128xf32>
    %6 = vector.extract_strided_slice %1 {offsets = [1, 0], sizes = [242, 4], strides = [1, 1]} : vector<292x4xbf16> to vector<242x4xbf16>
    %c1 = arith.constant 1 : index
    %c0_6 = arith.constant 0 : index
    %c0_7 = arith.constant 0 : index
    %7 = vector.load %arg3[%c1, %c0_6, %c0_7] : memref<9x4x128xbf16, #tpu.memory_space<vmem>>, vector<1x4x128xbf16>
    %8 = vector.shape_cast %7 : vector<1x4x128xbf16> to vector<4x128xbf16>
    %cst_8 = arith.constant dense<0.000000e+00> : vector<242x128xf32>
    %9 = tpu.matmul %6, %8, %cst_8 {dimension_numbers = #tpu.dot_dimension_numbers<[1], [0], [0], [1], [0, 0, 1, 1], [], []>} : vector<242x4xbf16>, vector<4x128xbf16>, vector<242x128xf32> -> vector<242x128xf32>
    %10 = arith.addf %5, %9 : vector<242x128xf32>
    %11 = vector.extract_strided_slice %1 {offsets = [2, 0], sizes = [242, 4], strides = [1, 1]} : vector<292x4xbf16> to vector<242x4xbf16>
    %c2 = arith.constant 2 : index
    %c0_9 = arith.constant 0 : index
    %c0_10 = arith.constant 0 : index
    %12 = vector.load %arg3[%c2, %c0_9, %c0_10] : memref<9x4x128xbf16, #tpu.memory_space<vmem>>, vector<1x4x128xbf16>
    %13 = vector.shape_cast %12 : vector<1x4x128xbf16> to vector<4x128xbf16>
    %cst_11 = arith.constant dense<0.000000e+00> : vector<242x128xf32>
    %14 = tpu.matmul %11, %13, %cst_11 {dimension_numbers = #tpu.dot_dimension_numbers<[1], [0], [0], [1], [0, 0, 1, 1], [], []>} : vector<242x4xbf16>, vector<4x128xbf16>, vector<242x128xf32> -> vector<242x128xf32>
    %15 = arith.addf %10, %14 : vector<242x128xf32>
    %16 = vector.extract_strided_slice %1 {offsets = [24, 0], sizes = [242, 4], strides = [1, 1]} : vector<292x4xbf16> to vector<242x4xbf16>
    %c3 = arith.constant 3 : index
    %c0_12 = arith.constant 0 : index
    %c0_13 = arith.constant 0 : index
    %17 = vector.load %arg3[%c3, %c0_12, %c0_13] : memref<9x4x128xbf16, #tpu.memory_space<vmem>>, vector<1x4x128xbf16>
    %18 = vector.shape_cast %17 : vector<1x4x128xbf16> to vector<4x128xbf16>
    %cst_14 = arith.constant dense<0.000000e+00> : vector<242x128xf32>
    %19 = tpu.matmul %16, %18, %cst_14 {dimension_numbers = #tpu.dot_dimension_numbers<[1], [0], [0], [1], [0, 0, 1, 1], [], []>} : vector<242x4xbf16>, vector<4x128xbf16>, vector<242x128xf32> -> vector<242x128xf32>
    %20 = arith.addf %15, %19 : vector<242x128xf32>
    %21 = vector.extract_strided_slice %1 {offsets = [25, 0], sizes = [242, 4], strides = [1, 1]} : vector<292x4xbf16> to vector<242x4xbf16>
    %c4 = arith.constant 4 : index
    %c0_15 = arith.constant 0 : index
    %c0_16 = arith.constant 0 : index
    %22 = vector.load %arg3[%c4, %c0_15, %c0_16] : memref<9x4x128xbf16, #tpu.memory_space<vmem>>, vector<1x4x128xbf16>
    %23 = vector.shape_cast %22 : vector<1x4x128xbf16> to vector<4x128xbf16>
    %cst_17 = arith.constant dense<0.000000e+00> : vector<242x128xf32>
    %24 = tpu.matmul %21, %23, %cst_17 {dimension_numbers = #tpu.dot_dimension_numbers<[1], [0], [0], [1], [0, 0, 1, 1], [], []>} : vector<242x4xbf16>, vector<4x128xbf16>, vector<242x128xf32> -> vector<242x128xf32>
    %25 = arith.addf %20, %24 : vector<242x128xf32>
    %26 = vector.extract_strided_slice %1 {offsets = [26, 0], sizes = [242, 4], strides = [1, 1]} : vector<292x4xbf16> to vector<242x4xbf16>
    %c5 = arith.constant 5 : index
    %c0_18 = arith.constant 0 : index
    %c0_19 = arith.constant 0 : index
    %27 = vector.load %arg3[%c5, %c0_18, %c0_19] : memref<9x4x128xbf16, #tpu.memory_space<vmem>>, vector<1x4x128xbf16>
    %28 = vector.shape_cast %27 : vector<1x4x128xbf16> to vector<4x128xbf16>
    %cst_20 = arith.constant dense<0.000000e+00> : vector<242x128xf32>
    %29 = tpu.matmul %26, %28, %cst_20 {dimension_numbers = #tpu.dot_dimension_numbers<[1], [0], [0], [1], [0, 0, 1, 1], [], []>} : vector<242x4xbf16>, vector<4x128xbf16>, vector<242x128xf32> -> vector<242x128xf32>
    %30 = arith.addf %25, %29 : vector<242x128xf32>
    %31 = vector.extract_strided_slice %1 {offsets = [48, 0], sizes = [242, 4], strides = [1, 1]} : vector<292x4xbf16> to vector<242x4xbf16>
    %c6 = arith.constant 6 : index
    %c0_21 = arith.constant 0 : index
    %c0_22 = arith.constant 0 : index
    %32 = vector.load %arg3[%c6, %c0_21, %c0_22] : memref<9x4x128xbf16, #tpu.memory_space<vmem>>, vector<1x4x128xbf16>
    %33 = vector.shape_cast %32 : vector<1x4x128xbf16> to vector<4x128xbf16>
    %cst_23 = arith.constant dense<0.000000e+00> : vector<242x128xf32>
    %34 = tpu.matmul %31, %33, %cst_23 {dimension_numbers = #tpu.dot_dimension_numbers<[1], [0], [0], [1], [0, 0, 1, 1], [], []>} : vector<242x4xbf16>, vector<4x128xbf16>, vector<242x128xf32> -> vector<242x128xf32>
    %35 = arith.addf %30, %34 : vector<242x128xf32>
    %36 = vector.extract_strided_slice %1 {offsets = [49, 0], sizes = [242, 4], strides = [1, 1]} : vector<292x4xbf16> to vector<242x4xbf16>
    %c7 = arith.constant 7 : index
    %c0_24 = arith.constant 0 : index
    %c0_25 = arith.constant 0 : index
    %37 = vector.load %arg3[%c7, %c0_24, %c0_25] : memref<9x4x128xbf16, #tpu.memory_space<vmem>>, vector<1x4x128xbf16>
    %38 = vector.shape_cast %37 : vector<1x4x128xbf16> to vector<4x128xbf16>
    %cst_26 = arith.constant dense<0.000000e+00> : vector<242x128xf32>
    %39 = tpu.matmul %36, %38, %cst_26 {dimension_numbers = #tpu.dot_dimension_numbers<[1], [0], [0], [1], [0, 0, 1, 1], [], []>} : vector<242x4xbf16>, vector<4x128xbf16>, vector<242x128xf32> -> vector<242x128xf32>
    %40 = arith.addf %35, %39 : vector<242x128xf32>
    %41 = vector.extract_strided_slice %1 {offsets = [50, 0], sizes = [242, 4], strides = [1, 1]} : vector<292x4xbf16> to vector<242x4xbf16>
    %c8 = arith.constant 8 : index
    %c0_27 = arith.constant 0 : index
    %c0_28 = arith.constant 0 : index
    %42 = vector.load %arg3[%c8, %c0_27, %c0_28] : memref<9x4x128xbf16, #tpu.memory_space<vmem>>, vector<1x4x128xbf16>
    %43 = vector.shape_cast %42 : vector<1x4x128xbf16> to vector<4x128xbf16>
    %cst_29 = arith.constant dense<0.000000e+00> : vector<242x128xf32>
    %44 = tpu.matmul %41, %43, %cst_29 {dimension_numbers = #tpu.dot_dimension_numbers<[1], [0], [0], [1], [0, 0, 1, 1], [], []>} : vector<242x4xbf16>, vector<4x128xbf16>, vector<242x128xf32> -> vector<242x128xf32>
    %45 = arith.addf %40, %44 : vector<242x128xf32>
    %c0_30 = arith.constant 0 : index
    %c0_31 = arith.constant 0 : index
    %46 = vector.load %arg4[%c0_30, %c0_31] : memref<1x128xf32, #tpu.memory_space<vmem>>, vector<1x128xf32>
    %47 = vector.shape_cast %46 : vector<1x128xf32> to vector<128xf32>
    %48 = vector.shape_cast %47 : vector<128xf32> to vector<1x128xf32>
    %49 = vector.broadcast %48 : vector<1x128xf32> to vector<242x128xf32>
    %50 = arith.mulf %45, %49 : vector<242x128xf32>
    %c0_32 = arith.constant 0 : index
    %c0_33 = arith.constant 0 : index
    %51 = vector.load %arg5[%c0_32, %c0_33] : memref<1x128xf32, #tpu.memory_space<vmem>>, vector<1x128xf32>
    %52 = vector.shape_cast %51 : vector<1x128xf32> to vector<128xf32>
    %53 = vector.shape_cast %52 : vector<128xf32> to vector<1x128xf32>
    %54 = vector.broadcast %53 : vector<1x128xf32> to vector<242x128xf32>
    %55 = arith.addf %50, %54 : vector<242x128xf32>
    %cst_34 = arith.constant 0.000000e+00 : f32
    %56 = vector.broadcast %cst_34 : f32 to vector<242x128xf32>
    %57 = arith.maximumf %55, %56 : vector<242x128xf32>
    %58 = tpu.iota {dimensions = array<i32: 0>} : vector<242x1xi32>
    %c24_i32 = arith.constant 24 : i32
    %c0_i32 = arith.constant 0 : i32
    %59 = arith.cmpi eq, %c24_i32, %c0_i32 : i32
    %c1_i32 = arith.constant 1 : i32
    %60 = arith.select %59, %c1_i32, %c24_i32 : i32
    %61 = vector.broadcast %60 : i32 to vector<242x1xi32>
    %62 = arith.remsi %58, %61 : vector<242x1xi32>
    %c0_i32_35 = arith.constant 0 : i32
    %63 = vector.broadcast %c0_i32_35 : i32 to vector<242x1xi32>
    %64 = arith.cmpi ne, %62, %63 : vector<242x1xi32>
    %c0_i32_36 = arith.constant 0 : i32
    %65 = vector.broadcast %c0_i32_36 : i32 to vector<242x1xi32>
    %66 = arith.cmpi slt, %62, %65 : vector<242x1xi32>
    %c0_i32_37 = arith.constant 0 : i32
    %67 = arith.cmpi slt, %60, %c0_i32_37 : i32
    %68 = vector.broadcast %67 : i1 to vector<242x1xi1>
    %69 = vector.broadcast %68 : vector<242x1xi1> to vector<242x1xi1>
    %70 = arith.xori %66, %69 : vector<242x1xi1>
    %71 = arith.andi %70, %64 : vector<242x1xi1>
    %72 = vector.broadcast %60 : i32 to vector<242x1xi32>
    %73 = arith.addi %62, %72 : vector<242x1xi32>
    %74 = arith.select %71, %73, %62 : vector<242x1xi1>, vector<242x1xi32>
    %c0_i32_38 = arith.constant 0 : i32
    %75 = arith.cmpi eq, %arg1, %c0_i32_38 : i32
    %c24_i32_39 = arith.constant 24 : i32
    %c0_i32_40 = arith.constant 0 : i32
    %76 = arith.select %75, %c24_i32_39, %c0_i32_40 : i32
    %c1_i32_41 = arith.constant 1 : i32
    %77 = arith.cmpi eq, %arg1, %c1_i32_41 : i32
    %c216_i32 = arith.constant 216 : i32
    %c240_i32 = arith.constant 240 : i32
    %78 = arith.select %77, %c216_i32, %c240_i32 : i32
    %79 = vector.broadcast %76 : i32 to vector<242x1xi32>
    %80 = arith.cmpi sge, %58, %79 : vector<242x1xi32>
    %81 = vector.broadcast %78 : i32 to vector<242x1xi32>
    %82 = arith.cmpi slt, %58, %81 : vector<242x1xi32>
    %83 = arith.andi %80, %82 : vector<242x1xi1>
    %c1_i32_42 = arith.constant 1 : i32
    %84 = vector.broadcast %c1_i32_42 : i32 to vector<242x1xi32>
    %85 = arith.cmpi sge, %74, %84 : vector<242x1xi32>
    %86 = arith.andi %83, %85 : vector<242x1xi1>
    %c16_i32 = arith.constant 16 : i32
    %87 = vector.broadcast %c16_i32 : i32 to vector<242x1xi32>
    %88 = arith.cmpi sle, %74, %87 : vector<242x1xi32>
    %89 = arith.andi %86, %88 : vector<242x1xi1>
    %cst_43 = arith.constant 0.000000e+00 : f32
    %90 = vector.shape_cast %89 : vector<242x1xi1> to vector<242x1xi1>
    %91 = vector.broadcast %90 : vector<242x1xi1> to vector<242x128xi1>
    %92 = vector.broadcast %cst_43 : f32 to vector<242x128xf32>
    %93 = arith.select %91, %57, %92 : vector<242x128xi1>, vector<242x128xf32>
    %94 = arith.truncf %93 : vector<242x128xf32> to vector<242x128xbf16>
    %95 = vector.extract_strided_slice %94 {offsets = [0, 0], sizes = [192, 128], strides = [1, 1]} : vector<242x128xbf16> to vector<192x128xbf16>
    %c0_44 = arith.constant 0 : index
    %c0_45 = arith.constant 0 : index
    %c0_46 = arith.constant 0 : index
    %96 = vector.load %arg6[%c0_44, %c0_45, %c0_46] : memref<9x128x128xbf16, #tpu.memory_space<vmem>>, vector<1x128x128xbf16>
    %97 = vector.shape_cast %96 : vector<1x128x128xbf16> to vector<128x128xbf16>
    %cst_47 = arith.constant dense<0.000000e+00> : vector<192x128xf32>
    %98 = tpu.matmul %95, %97, %cst_47 {dimension_numbers = #tpu.dot_dimension_numbers<[1], [0], [0], [1], [0, 0, 1, 1], [], []>} : vector<192x128xbf16>, vector<128x128xbf16>, vector<192x128xf32> -> vector<192x128xf32>
    %99 = vector.extract_strided_slice %94 {offsets = [1, 0], sizes = [192, 128], strides = [1, 1]} : vector<242x128xbf16> to vector<192x128xbf16>
    %c1_48 = arith.constant 1 : index
    %c0_49 = arith.constant 0 : index
    %c0_50 = arith.constant 0 : index
    %100 = vector.load %arg6[%c1_48, %c0_49, %c0_50] : memref<9x128x128xbf16, #tpu.memory_space<vmem>>, vector<1x128x128xbf16>
    %101 = vector.shape_cast %100 : vector<1x128x128xbf16> to vector<128x128xbf16>
    %cst_51 = arith.constant dense<0.000000e+00> : vector<192x128xf32>
    %102 = tpu.matmul %99, %101, %cst_51 {dimension_numbers = #tpu.dot_dimension_numbers<[1], [0], [0], [1], [0, 0, 1, 1], [], []>} : vector<192x128xbf16>, vector<128x128xbf16>, vector<192x128xf32> -> vector<192x128xf32>
    %103 = arith.addf %98, %102 : vector<192x128xf32>
    %104 = vector.extract_strided_slice %94 {offsets = [2, 0], sizes = [192, 128], strides = [1, 1]} : vector<242x128xbf16> to vector<192x128xbf16>
    %c2_52 = arith.constant 2 : index
    %c0_53 = arith.constant 0 : index
    %c0_54 = arith.constant 0 : index
    %105 = vector.load %arg6[%c2_52, %c0_53, %c0_54] : memref<9x128x128xbf16, #tpu.memory_space<vmem>>, vector<1x128x128xbf16>
    %106 = vector.shape_cast %105 : vector<1x128x128xbf16> to vector<128x128xbf16>
    %cst_55 = arith.constant dense<0.000000e+00> : vector<192x128xf32>
    %107 = tpu.matmul %104, %106, %cst_55 {dimension_numbers = #tpu.dot_dimension_numbers<[1], [0], [0], [1], [0, 0, 1, 1], [], []>} : vector<192x128xbf16>, vector<128x128xbf16>, vector<192x128xf32> -> vector<192x128xf32>
    %108 = arith.addf %103, %107 : vector<192x128xf32>
    %109 = vector.extract_strided_slice %94 {offsets = [24, 0], sizes = [192, 128], strides = [1, 1]} : vector<242x128xbf16> to vector<192x128xbf16>
    %c3_56 = arith.constant 3 : index
    %c0_57 = arith.constant 0 : index
    %c0_58 = arith.constant 0 : index
    %110 = vector.load %arg6[%c3_56, %c0_57, %c0_58] : memref<9x128x128xbf16, #tpu.memory_space<vmem>>, vector<1x128x128xbf16>
    %111 = vector.shape_cast %110 : vector<1x128x128xbf16> to vector<128x128xbf16>
    %cst_59 = arith.constant dense<0.000000e+00> : vector<192x128xf32>
    %112 = tpu.matmul %109, %111, %cst_59 {dimension_numbers = #tpu.dot_dimension_numbers<[1], [0], [0], [1], [0, 0, 1, 1], [], []>} : vector<192x128xbf16>, vector<128x128xbf16>, vector<192x128xf32> -> vector<192x128xf32>
    %113 = arith.addf %108, %112 : vector<192x128xf32>
    %114 = vector.extract_strided_slice %94 {offsets = [25, 0], sizes = [192, 128], strides = [1, 1]} : vector<242x128xbf16> to vector<192x128xbf16>
    %c4_60 = arith.constant 4 : index
    %c0_61 = arith.constant 0 : index
    %c0_62 = arith.constant 0 : index
    %115 = vector.load %arg6[%c4_60, %c0_61, %c0_62] : memref<9x128x128xbf16, #tpu.memory_space<vmem>>, vector<1x128x128xbf16>
    %116 = vector.shape_cast %115 : vector<1x128x128xbf16> to vector<128x128xbf16>
    %cst_63 = arith.constant dense<0.000000e+00> : vector<192x128xf32>
    %117 = tpu.matmul %114, %116, %cst_63 {dimension_numbers = #tpu.dot_dimension_numbers<[1], [0], [0], [1], [0, 0, 1, 1], [], []>} : vector<192x128xbf16>, vector<128x128xbf16>, vector<192x128xf32> -> vector<192x128xf32>
    %118 = arith.addf %113, %117 : vector<192x128xf32>
    %119 = vector.extract_strided_slice %94 {offsets = [26, 0], sizes = [192, 128], strides = [1, 1]} : vector<242x128xbf16> to vector<192x128xbf16>
    %c5_64 = arith.constant 5 : index
    %c0_65 = arith.constant 0 : index
    %c0_66 = arith.constant 0 : index
    %120 = vector.load %arg6[%c5_64, %c0_65, %c0_66] : memref<9x128x128xbf16, #tpu.memory_space<vmem>>, vector<1x128x128xbf16>
    %121 = vector.shape_cast %120 : vector<1x128x128xbf16> to vector<128x128xbf16>
    %cst_67 = arith.constant dense<0.000000e+00> : vector<192x128xf32>
    %122 = tpu.matmul %119, %121, %cst_67 {dimension_numbers = #tpu.dot_dimension_numbers<[1], [0], [0], [1], [0, 0, 1, 1], [], []>} : vector<192x128xbf16>, vector<128x128xbf16>, vector<192x128xf32> -> vector<192x128xf32>
    %123 = arith.addf %118, %122 : vector<192x128xf32>
    %124 = vector.extract_strided_slice %94 {offsets = [48, 0], sizes = [192, 128], strides = [1, 1]} : vector<242x128xbf16> to vector<192x128xbf16>
    %c6_68 = arith.constant 6 : index
    %c0_69 = arith.constant 0 : index
    %c0_70 = arith.constant 0 : index
    %125 = vector.load %arg6[%c6_68, %c0_69, %c0_70] : memref<9x128x128xbf16, #tpu.memory_space<vmem>>, vector<1x128x128xbf16>
    %126 = vector.shape_cast %125 : vector<1x128x128xbf16> to vector<128x128xbf16>
    %cst_71 = arith.constant dense<0.000000e+00> : vector<192x128xf32>
    %127 = tpu.matmul %124, %126, %cst_71 {dimension_numbers = #tpu.dot_dimension_numbers<[1], [0], [0], [1], [0, 0, 1, 1], [], []>} : vector<192x128xbf16>, vector<128x128xbf16>, vector<192x128xf32> -> vector<192x128xf32>
    %128 = arith.addf %123, %127 : vector<192x128xf32>
    %129 = vector.extract_strided_slice %94 {offsets = [49, 0], sizes = [192, 128], strides = [1, 1]} : vector<242x128xbf16> to vector<192x128xbf16>
    %c7_72 = arith.constant 7 : index
    %c0_73 = arith.constant 0 : index
    %c0_74 = arith.constant 0 : index
    %130 = vector.load %arg6[%c7_72, %c0_73, %c0_74] : memref<9x128x128xbf16, #tpu.memory_space<vmem>>, vector<1x128x128xbf16>
    %131 = vector.shape_cast %130 : vector<1x128x128xbf16> to vector<128x128xbf16>
    %cst_75 = arith.constant dense<0.000000e+00> : vector<192x128xf32>
    %132 = tpu.matmul %129, %131, %cst_75 {dimension_numbers = #tpu.dot_dimension_numbers<[1], [0], [0], [1], [0, 0, 1, 1], [], []>} : vector<192x128xbf16>, vector<128x128xbf16>, vector<192x128xf32> -> vector<192x128xf32>
    %133 = arith.addf %128, %132 : vector<192x128xf32>
    %134 = vector.extract_strided_slice %94 {offsets = [50, 0], sizes = [192, 128], strides = [1, 1]} : vector<242x128xbf16> to vector<192x128xbf16>
    %c8_76 = arith.constant 8 : index
    %c0_77 = arith.constant 0 : index
    %c0_78 = arith.constant 0 : index
    %135 = vector.load %arg6[%c8_76, %c0_77, %c0_78] : memref<9x128x128xbf16, #tpu.memory_space<vmem>>, vector<1x128x128xbf16>
    %136 = vector.shape_cast %135 : vector<1x128x128xbf16> to vector<128x128xbf16>
    %cst_79 = arith.constant dense<0.000000e+00> : vector<192x128xf32>
    %137 = tpu.matmul %134, %136, %cst_79 {dimension_numbers = #tpu.dot_dimension_numbers<[1], [0], [0], [1], [0, 0, 1, 1], [], []>} : vector<192x128xbf16>, vector<128x128xbf16>, vector<192x128xf32> -> vector<192x128xf32>
    %138 = arith.addf %133, %137 : vector<192x128xf32>
    %c0_80 = arith.constant 0 : index
    %c0_81 = arith.constant 0 : index
    %139 = vector.load %arg7[%c0_80, %c0_81] : memref<1x128xf32, #tpu.memory_space<vmem>>, vector<1x128xf32>
    %140 = vector.shape_cast %139 : vector<1x128xf32> to vector<128xf32>
    %141 = vector.shape_cast %140 : vector<128xf32> to vector<1x128xf32>
    %142 = vector.broadcast %141 : vector<1x128xf32> to vector<192x128xf32>
    %143 = arith.mulf %138, %142 : vector<192x128xf32>
    %c0_82 = arith.constant 0 : index
    %c0_83 = arith.constant 0 : index
    %144 = vector.load %arg8[%c0_82, %c0_83] : memref<1x128xf32, #tpu.memory_space<vmem>>, vector<1x128xf32>
    %145 = vector.shape_cast %144 : vector<1x128xf32> to vector<128xf32>
    %146 = vector.shape_cast %145 : vector<128xf32> to vector<1x128xf32>
    %147 = vector.broadcast %146 : vector<1x128xf32> to vector<192x128xf32>
    %148 = arith.addf %143, %147 : vector<192x128xf32>
    %cst_84 = arith.constant 0.000000e+00 : f32
    %149 = vector.broadcast %cst_84 : f32 to vector<192x128xf32>
    %150 = arith.maximumf %148, %149 : vector<192x128xf32>
    %151 = arith.truncf %150 : vector<192x128xf32> to vector<192x128xbf16>
    %c0_85 = arith.constant 0 : index
    %c0_86 = arith.constant 0 : index
    %c0_87 = arith.constant 0 : index
    %c0_88 = arith.constant 0 : index
    %152 = vector.load %arg9[%c0_85, %c0_86, %c0_87, %c0_88] : memref<1x1x192x128xbf16, #tpu.memory_space<vmem>>, vector<1x1x192x128xbf16>
    %153 = vector.shape_cast %152 : vector<1x1x192x128xbf16> to vector<192x128xbf16>
    %154 = vector.shape_cast %151 : vector<192x128xbf16> to vector<1x1x192x128xbf16>
    tpu.vector_store %arg9[%c0_85, %c0_86, %c0_87, %c0_88], %154 {strides = array<i32>} : memref<1x1x192x128xbf16, #tpu.memory_space<vmem>>, vector<1x1x192x128xbf16>,
    return
  }
  func.func @transform_0(%arg0: i32, %arg1: i32) -> (i32, i32, i32, i32) {
    %c0_i32 = arith.constant 0 : i32
    %c0_i32_0 = arith.constant 0 : i32
    %c0_i32_1 = arith.constant 0 : i32
    return %arg0, %arg1, %c0_i32, %c0_i32_0 : i32, i32, i32, i32
  }
  func.func @transform_1(%arg0: i32, %arg1: i32) -> (i32, i32, i32) {
    %c0_i32 = arith.constant 0 : i32
    %c0_i32_0 = arith.constant 0 : i32
    %c0_i32_1 = arith.constant 0 : i32
    %c0_i32_2 = arith.constant 0 : i32
    return %c0_i32, %c0_i32_0, %c0_i32_1 : i32, i32, i32
  }
  func.func @transform_2(%arg0: i32, %arg1: i32) -> (i32, i32) {
    %c0_i32 = arith.constant 0 : i32
    %c0_i32_0 = arith.constant 0 : i32
    %c0_i32_1 = arith.constant 0 : i32
    return %c0_i32, %c0_i32_0 : i32, i32
  }
  func.func @transform_3(%arg0: i32, %arg1: i32) -> (i32, i32) {
    %c0_i32 = arith.constant 0 : i32
    %c0_i32_0 = arith.constant 0 : i32
    %c0_i32_1 = arith.constant 0 : i32
    return %c0_i32, %c0_i32_0 : i32, i32
  }
  func.func @transform_4(%arg0: i32, %arg1: i32) -> (i32, i32, i32) {
    %c0_i32 = arith.constant 0 : i32
    %c0_i32_0 = arith.constant 0 : i32
    %c0_i32_1 = arith.constant 0 : i32
    %c0_i32_2 = arith.constant 0 : i32
    return %c0_i32, %c0_i32_0, %c0_i32_1 : i32, i32, i32
  }
  func.func @transform_5(%arg0: i32, %arg1: i32) -> (i32, i32) {
    %c0_i32 = arith.constant 0 : i32
    %c0_i32_0 = arith.constant 0 : i32
    %c0_i32_1 = arith.constant 0 : i32
    return %c0_i32, %c0_i32_0 : i32, i32
  }
  func.func @transform_6(%arg0: i32, %arg1: i32) -> (i32, i32) {
    %c0_i32 = arith.constant 0 : i32
    %c0_i32_0 = arith.constant 0 : i32
    %c0_i32_1 = arith.constant 0 : i32
    return %c0_i32, %c0_i32_0 : i32, i32
  }
  func.func @transform_7(%arg0: i32, %arg1: i32) -> (i32, i32, i32, i32) {
    %c0_i32 = arith.constant 0 : i32
    %c0_i32_0 = arith.constant 0 : i32
    %c0_i32_1 = arith.constant 0 : i32
    return %arg0, %arg1, %c0_i32, %c0_i32_0 : i32, i32, i32, i32
  }
}

</mosaic_0001>

<llo_original>
// kernel: tpu_custom_call.1
$region0: #{tpu_custom_call.1}
  #allocation0 [shape = 'u32[]', space=smem, size = 0x4, offset = 0x4, fixed_abs, tag = 'smem constant byte address 0x4 - core index']
  #allocation1 [shape = 'u32[144,128]{1,0:T(1,128)}', space=vmem, size = 0x12000, scoped, tag = 'internal scratch']
  %s0 = inlined_call_operand.hbm [shape: bf16[2,2,292,4], index: 0, kind: input, shape index: {}]
  %s1 = inlined_call_operand.hbm [shape: bf16[9,4,128], index: 1, kind: input, shape index: {}]
  %s2 = inlined_call_operand.hbm [shape: f32[1,128], index: 2, kind: input, shape index: {}]
  %s3 = inlined_call_operand.hbm [shape: f32[1,128], index: 3, kind: input, shape index: {}]
  %s4 = inlined_call_operand.hbm [shape: bf16[9,128,128], index: 4, kind: input, shape index: {}]
  %s5 = inlined_call_operand.hbm [shape: f32[1,128], index: 5, kind: input, shape index: {}]
  %s6 = inlined_call_operand.hbm [shape: f32[1,128], index: 6, kind: input, shape index: {}]
  %s7 = inlined_call_operand.hbm [shape: bf16[2,2,192,128], index: 7, kind: output, shape index: {}]
  %s8 = sld [smem:[#allocation0]]
  $region89: #{tpu_custom_call.1} parent=0
    _
  %s10 = ssub.s32 1, %s8
  %s11 = scalar_select 0, %s10, %s8
  $region1: #{tpu_custom_call.1} parent=0
    #allocation2 [shape = 'u8[151552]{0}', space=vmem, size = 0x25000, scoped, tag = 'input window, operand 0']
    #allocation3 [shape = 's32[2]{0}', space=sflag, size = 0x8, scoped, tag = 'scoped memory for tpu_custom_call.1']
    #allocation4 [shape = 's32[2]{0}', space=sflag, size = 0x8, scoped, tag = 'scoped memory for tpu_custom_call.1']
    #allocation5 [shape = 'u8[9216]{0}', space=vmem, size = 0x2400, scoped, tag = 'input window, operand 1, single buffered']
    #allocation6 [shape = 's32[1]{0}', space=sflag, size = 0x4, scoped, tag = 'scoped memory for tpu_custom_call.1']
    #allocation7 [shape = 'u8[512]{0}', space=vmem, size = 0x400, scoped, tag = 'input window, operand 2, single buffered']
    #allocation8 [shape = 'u8[512]{0}', space=vmem, size = 0x400, scoped, tag = 'input window, operand 3, single buffered']
    #allocation9 [shape = 's32[1]{0}', space=sflag, size = 0x4, scoped, tag = 'scoped memory for tpu_custom_call.1']
    #allocation10 [shape = 'u8[294912]{0}', space=vmem, size = 0x48000, scoped, tag = 'input window, operand 4, single buffered']
    #allocation11 [shape = 'u8[512]{0}', space=vmem, size = 0x400, scoped, tag = 'input window, operand 5, single buffered']
    #allocation12 [shape = 's32[1]{0}', space=sflag, size = 0x4, scoped, tag = 'scoped memory for tpu_custom_call.1']
    #allocation13 [shape = 'u8[512]{0}', space=vmem, size = 0x400, scoped, tag = 'input window, operand 6, single buffered']
    #allocation14 [shape = 'u8[98304]{0}', space=vmem, size = 0x18000, scoped, tag = 'output window, operand 0']
    %12 = vsyncpa [#allocation3], 0
    %s13 = scalar_lea.sflag [#allocation3], 1
    %14 = vsyncpa %s13, 0
    %15 = vsyncpa [#allocation6], 0
    %16 = vsyncpa [#allocation9], 0
    %17 = vsyncpa [#allocation12], 0
    %18 = vsyncpa [#allocation4], 0
    %s19 = scalar_lea.sflag [#allocation4], 1
    %20 = vsyncpa %s19, 0
    loop: start=0, step=1, limit=6
    $region2: #{tpu_custom_call.1} parent=1 // loop_pre_header
      _
    $region3: #{tpu_custom_call.1} parent=1 // loop_header
      %s22 = sphi 0, %s26
      %p23 = scmp.ge.s32.totalorder %s22, 6
      %s29 = sphi 0, %s41
      %s30 = sphi 0, %s37
      %s31 = sphi 0, %s29
      %s32 = sphi 0, %s30
      %s33 = sphi 0, %s31
      %s34 = sphi 0, %s32
      %s46 = sphi 0, %s48
      %s49 = sphi 0, %s46
      %s50 = sphi 0, %s49
      %s66 = sphi 0, %s50
      %s70 = sphi 0, %s70
      %s72 = sphi 0, %s70
      %s73 = sphi 0, %s72
      %s87 = sphi 0, %s73
      %s91 = sphi 0, %s91
      %s93 = sphi 0, %s91
      %s94 = sphi 0, %s93
      %s108 = sphi 0, %s94
      %s112 = sphi 0, %s112
      %s114 = sphi 0, %s112
      %s115 = sphi 0, %s114
      %s129 = sphi 0, %s115
      %s133 = sphi 0, %s133
      %s135 = sphi 0, %s133
      %s136 = sphi 0, %s135
      %s150 = sphi 0, %s136
      %s154 = sphi 0, %s154
      %s156 = sphi 0, %s154
      %s157 = sphi 0, %s156
      %s171 = sphi 0, %s157
      %s175 = sphi 0, %s175
      %s177 = sphi 0, %s175
      %s178 = sphi 0, %s177
      %s192 = sphi 0, %s178
      %s200 = sphi 0, %s202
      %s203 = sphi 0, %s200
      %s204 = sphi 0, %s203
      %s220 = sphi 0, %s204
    $region4: #{tpu_custom_call.1} parent=1 // loop_header_branch
      %25 = sbr.rel (%p23) target = $region8
    $region5: #{tpu_custom_call.1} parent=1 // loop_body
      %s27 = ssub.s32 %s22, 1
      %s28 = ssub.s32 %s22, 2
      %s35 = sadd.s32 1, %s30
      %p36 = scmp.ge.s32.totalorder %s35, 2
      %s37 = scalar_select %p36, 0, %s35
      %s38 = sadd.s32 1, %s29
      %s39 = scalar_select %p36, %s38, %s29
      %p40 = scmp.ge.s32.totalorder %s39, 2
      %s41 = scalar_select %p40, 0, %s39
      %s42 = ssub.s32 %s29, %s41
      %s43 = ssub.s32 %s30, %s37
      %s44 = sor.u32 %s42, %s43
      %p45 = scmp.eq.s32.totalorder %s44, 0
      %s47 = sadd.s32 %s46, 1
      %s48 = scalar_select %p45, %s46, %s47
      %p51 = pneg %p45
      %p52 = scmp.eq.s32.totalorder %s22, 3
      %p53 = por %p51, %p52
      %p54 = scmp.ne.s32.totalorder %s46, %s49
      %p55 = scmp.eq.s32.totalorder %s22, 0
      %p56 = por %p54, %p55
      %p57 = scmp.ne.s32.totalorder %s46, %s49
      %p58 = scmp.eq.s32.totalorder %s27, 3
      %p59 = por %p57, %p58
      %p60 = scmp.ne.s32.totalorder %s49, %s50
      %p61 = scmp.eq.s32.totalorder %s27, 0
      %p62 = por %p60, %p61
      %p63 = scmp.ne.s32.totalorder %s49, %s50
      %p64 = scmp.eq.s32.totalorder %s28, 3
      %p65 = por %p63, %p64
      %p67 = scmp.ne.s32.totalorder %s50, %s66
      %p68 = scmp.eq.s32.totalorder %s28, 0
      %p69 = por %p67, %p68
      %s71 = sadd.s32 %s70, 1
      %p74 = scmp.eq.s32.totalorder %s22, 3
      %p75 = scmp.ne.s32.totalorder %s70, %s72
      %p76 = scmp.eq.s32.totalorder %s22, 0
      %p77 = por %p75, %p76
      %p78 = scmp.ne.s32.totalorder %s70, %s72
      %p79 = scmp.eq.s32.totalorder %s27, 3
      %p80 = por %p78, %p79
      %p81 = scmp.ne.s32.totalorder %s72, %s73
      %p82 = scmp.eq.s32.totalorder %s27, 0
      %p83 = por %p81, %p82
      %p84 = scmp.ne.s32.totalorder %s72, %s73
      %p85 = scmp.eq.s32.totalorder %s28, 3
      %p86 = por %p84, %p85
      %p88 = scmp.ne.s32.totalorder %s73, %s87
      %p89 = scmp.eq.s32.totalorder %s28, 0
      %p90 = por %p88, %p89
      %s92 = sadd.s32 %s91, 1
      %p95 = scmp.eq.s32.totalorder %s22, 3
      %p96 = scmp.ne.s32.totalorder %s91, %s93
      %p97 = scmp.eq.s32.totalorder %s22, 0
      %p98 = por %p96, %p97
      %p99 = scmp.ne.s32.totalorder %s91, %s93
      %p100 = scmp.eq.s32.totalorder %s27, 3
      %p101 = por %p99, %p100
      %p102 = scmp.ne.s32.totalorder %s93, %s94
      %p103 = scmp.eq.s32.totalorder %s27, 0
      %p104 = por %p102, %p103
      %p105 = scmp.ne.s32.totalorder %s93, %s94
      %p106 = scmp.eq.s32.totalorder %s28, 3
      %p107 = por %p105, %p106
      %p109 = scmp.ne.s32.totalorder %s94, %s108
      %p110 = scmp.eq.s32.totalorder %s28, 0
      %p111 = por %p109, %p110
      %s113 = sadd.s32 %s112, 1
      %p116 = scmp.eq.s32.totalorder %s22, 3
      %p117 = scmp.ne.s32.totalorder %s112, %s114
      %p118 = scmp.eq.s32.totalorder %s22, 0
      %p119 = por %p117, %p118
      %p120 = scmp.ne.s32.totalorder %s112, %s114
      %p121 = scmp.eq.s32.totalorder %s27, 3
      %p122 = por %p120, %p121
      %p123 = scmp.ne.s32.totalorder %s114, %s115
      %p124 = scmp.eq.s32.totalorder %s27, 0
      %p125 = por %p123, %p124
      %p126 = scmp.ne.s32.totalorder %s114, %s115
      %p127 = scmp.eq.s32.totalorder %s28, 3
      %p128 = por %p126, %p127
      %p130 = scmp.ne.s32.totalorder %s115, %s129
      %p131 = scmp.eq.s32.totalorder %s28, 0
      %p132 = por %p130, %p131
      %s134 = sadd.s32 %s133, 1
      %p137 = scmp.eq.s32.totalorder %s22, 3
      %p138 = scmp.ne.s32.totalorder %s133, %s135
      %p139 = scmp.eq.s32.totalorder %s22, 0
      %p140 = por %p138, %p139
      %p141 = scmp.ne.s32.totalorder %s133, %s135
      %p142 = scmp.eq.s32.totalorder %s27, 3
      %p143 = por %p141, %p142
      %p144 = scmp.ne.s32.totalorder %s135, %s136
      %p145 = scmp.eq.s32.totalorder %s27, 0
      %p146 = por %p144, %p145
      %p147 = scmp.ne.s32.totalorder %s135, %s136
      %p148 = scmp.eq.s32.totalorder %s28, 3
      %p149 = por %p147, %p148
      %p151 = scmp.ne.s32.totalorder %s136, %s150
      %p152 = scmp.eq.s32.totalorder %s28, 0
      %p153 = por %p151, %p152
      %s155 = sadd.s32 %s154, 1
      %p158 = scmp.eq.s32.totalorder %s22, 3
      %p159 = scmp.ne.s32.totalorder %s154, %s156
      %p160 = scmp.eq.s32.totalorder %s22, 0
      %p161 = por %p159, %p160
      %p162 = scmp.ne.s32.totalorder %s154, %s156
      %p163 = scmp.eq.s32.totalorder %s27, 3
      %p164 = por %p162, %p163
      %p165 = scmp.ne.s32.totalorder %s156, %s157
      %p166 = scmp.eq.s32.totalorder %s27, 0
      %p167 = por %p165, %p166
      %p168 = scmp.ne.s32.totalorder %s156, %s157
      %p169 = scmp.eq.s32.totalorder %s28, 3
      %p170 = por %p168, %p169
      %p172 = scmp.ne.s32.totalorder %s157, %s171
      %p173 = scmp.eq.s32.totalorder %s28, 0
      %p174 = por %p172, %p173
      %s176 = sadd.s32 %s175, 1
      %p179 = scmp.eq.s32.totalorder %s22, 3
      %p180 = scmp.ne.s32.totalorder %s175, %s177
      %p181 = scmp.eq.s32.totalorder %s22, 0
      %p182 = por %p180, %p181
      %p183 = scmp.ne.s32.totalorder %s175, %s177
      %p184 = scmp.eq.s32.totalorder %s27, 3
      %p185 = por %p183, %p184
      %p186 = scmp.ne.s32.totalorder %s177, %s178
      %p187 = scmp.eq.s32.totalorder %s27, 0
      %p188 = por %p186, %p187
      %p189 = scmp.ne.s32.totalorder %s177, %s178
      %p190 = scmp.eq.s32.totalorder %s28, 3
      %p191 = por %p189, %p190
      %p193 = scmp.ne.s32.totalorder %s178, %s192
      %p194 = scmp.eq.s32.totalorder %s28, 0
      %p195 = por %p193, %p194
      %s196 = ssub.s32 %s29, %s41
      %s197 = ssub.s32 %s30, %s37
      %s198 = sor.u32 %s196, %s197
      %p199 = scmp.eq.s32.totalorder %s198, 0
      %s201 = sadd.s32 %s200, 1
      %s202 = scalar_select %p199, %s200, %s201
      %p205 = pneg %p199
      %p206 = scmp.eq.s32.totalorder %s22, 3
      %p207 = por %p205, %p206
      %p208 = scmp.ne.s32.totalorder %s200, %s203
      %p209 = scmp.eq.s32.totalorder %s22, 0
      %p210 = por %p208, %p209
      %p211 = scmp.ne.s32.totalorder %s200, %s203
      %p212 = scmp.eq.s32.totalorder %s27, 3
      %p213 = por %p211, %p212
      %p214 = scmp.ne.s32.totalorder %s203, %s204
      %p215 = scmp.eq.s32.totalorder %s27, 0
      %p216 = por %p214, %p215
      %p217 = scmp.ne.s32.totalorder %s203, %s204
      %p218 = scmp.eq.s32.totalorder %s28, 3
      %p219 = por %p217, %p218
      %p221 = scmp.ne.s32.totalorder %s204, %s220
      %p222 = scmp.eq.s32.totalorder %s28, 0
      %p223 = por %p221, %p222
      %p224 = scmp.le.s32.totalorder 1, %s22
      %p225 = scmp.lt.s32.totalorder %s22, 5
      %p226 = pnand %p224, %p225
      %p227 = pneg %p226
      // Predicated region
      $region9: #{tpu_custom_call.1} parent=5 // pred_check
        _
      $region10: #{tpu_custom_call.1} parent=5 // pred_check_branch
        %229 = sbr.rel (%p226) target = $region12
      $region11: #{tpu_custom_call.1} parent=5 // pred_region
        %s230 = ssub.s32 %s22, 1
        // Predicated region
        $region13: #{tpu_custom_call.1} parent=11 // pred_check
          %p231 = pneg %p83
        $region14: #{tpu_custom_call.1} parent=11 // pred_check_branch
          %233 = sbr.rel (%p231) target = $region16
        $region15: #{tpu_custom_call.1} parent=11 // pred_region
          %s235 = ssub.s32 288, 288
          %236 = vsyncadd [#allocation6], %s235
          %s237 = sshll.u32 [#allocation5], 4
          %s238 = int_to_ptr.vmem [resolvable:$true] %s237
          %243 = dma.hbm_to_vmem [thread:$0]  %s1, 288, %s238, [#allocation6], 32, 32, 2
        $region16: #{tpu_custom_call.1} parent=11 // pred_fallthru
          _
        // Predicated region
        $region17: #{tpu_custom_call.1} parent=11 // pred_check
          %p244 = pneg %p104
        $region18: #{tpu_custom_call.1} parent=11 // pred_check_branch
          %246 = sbr.rel (%p244) target = $region20
        $region19: #{tpu_custom_call.1} parent=11 // pred_region
          %s248 = ssub.s32 16, 16
          %249 = vsyncadd [#allocation6], %s248
          %s251 = sshll.u32 [#allocation7], 4
          %s252 = int_to_ptr.vmem [resolvable:$true] %s251
          %254 = dma.hbm_to_vmem [thread:$0]  %s2, 16, %s252, [#allocation6]
        $region20: #{tpu_custom_call.1} parent=11 // pred_fallthru
          _
        // Predicated region
        $region21: #{tpu_custom_call.1} parent=11 // pred_check
          %p255 = pneg %p125
        $region22: #{tpu_custom_call.1} parent=11 // pred_check_branch
          %257 = sbr.rel (%p255) target = $region24
        $region23: #{tpu_custom_call.1} parent=11 // pred_region
          %s259 = ssub.s32 16, 16
          %260 = vsyncadd [#allocation9], %s259
          %s262 = sshll.u32 [#allocation8], 4
          %s263 = int_to_ptr.vmem [resolvable:$true] %s262
          %265 = dma.hbm_to_vmem [thread:$0]  %s3, 16, %s263, [#allocation9]
        $region24: #{tpu_custom_call.1} parent=11 // pred_fallthru
          _
        // Predicated region
        $region25: #{tpu_custom_call.1} parent=11 // pred_check
          %p266 = pneg %p146
        $region26: #{tpu_custom_call.1} parent=11 // pred_check_branch
          %268 = sbr.rel (%p266) target = $region28
        $region27: #{tpu_custom_call.1} parent=11 // pred_region
          %s270 = ssub.s32 9216, 9216
          %271 = vsyncadd [#allocation9], %s270
          %s272 = sshll.u32 [#allocation10], 4
          %s273 = int_to_ptr.vmem [resolvable:$true] %s272
          %278 = dma.hbm_to_vmem [thread:$0]  %s4, 9216, %s273, [#allocation9], 64, 64, 4
        $region28: #{tpu_custom_call.1} parent=11 // pred_fallthru
          _
        // Predicated region
        $region29: #{tpu_custom_call.1} parent=11 // pred_check
          %p279 = pneg %p167
        $region30: #{tpu_custom_call.1} parent=11 // pred_check_branch
          %281 = sbr.rel (%p279) target = $region32
        $region31: #{tpu_custom_call.1} parent=11 // pred_region
          %s283 = ssub.s32 16, 16
          %284 = vsyncadd [#allocation12], %s283
          %s286 = sshll.u32 [#allocation11], 4
          %s287 = int_to_ptr.vmem [resolvable:$true] %s286
          %289 = dma.hbm_to_vmem [thread:$0]  %s5, 16, %s287, [#allocation12]
        $region32: #{tpu_custom_call.1} parent=11 // pred_fallthru
          _
        // Predicated region
        $region33: #{tpu_custom_call.1} parent=11 // pred_check
          %p290 = pneg %p188
        $region34: #{tpu_custom_call.1} parent=11 // pred_check_branch
          %292 = sbr.rel (%p290) target = $region36
        $region35: #{tpu_custom_call.1} parent=11 // pred_region
          %s294 = ssub.s32 16, 16
          %295 = vsyncadd [#allocation12], %s294
          %s297 = sshll.u32 [#allocation13], 4
          %s298 = int_to_ptr.vmem [resolvable:$true] %s297
          %300 = dma.hbm_to_vmem [thread:$0]  %s6, 16, %s298, [#allocation12]
        $region36: #{tpu_custom_call.1} parent=11 // pred_fallthru
          _
      $region12: #{tpu_custom_call.1} parent=5 // pred_fallthru
        _
      %p301 = scmp.lt.s32.totalorder %s22, 4
      // Predicated region
      $region37: #{tpu_custom_call.1} parent=5 // pred_check
        %p302 = pneg %p301
      $region38: #{tpu_custom_call.1} parent=5 // pred_check_branch
        %304 = sbr.rel (%p302) target = $region40
      $region39: #{tpu_custom_call.1} parent=5 // pred_region
        // Predicated region
        $region41: #{tpu_custom_call.1} parent=39 // pred_check
          %p305 = pneg %p56
        $region42: #{tpu_custom_call.1} parent=39 // pred_check_branch
          %307 = sbr.rel (%p305) target = $region44
        $region43: #{tpu_custom_call.1} parent=39 // pred_region
          %s308 = sand.u32 %s46, 1
          %s309 = scalar_lea.sflag [#allocation3], %s308
          %s310 = sand.u32 %s46, 1
          %s311 = smul.addr %s310, 148
          %s312 = scalar_lea.vmem [#allocation2], %s311
          %s314 = ssub.s32 2368, 2368
          %315 = vsyncadd %s309, %s314
          %s316 = smul.addr %s30, 37
          %s317 = smul.addr %s29, 74
          %s318 = sadd.s32 %s316, %s317
          %s319 = smul.addr %s318, 64
          %s320 = scalar_lea.hbm %s0, %s319
          %s321 = sshll.u32 %s312, 4
          %s322 = int_to_ptr.vmem [resolvable:$true] %s321
          %327 = dma.hbm_to_vmem [thread:$0]  %s320, 2368, %s322, %s309, 64, 64, 4
        $region44: #{tpu_custom_call.1} parent=39 // pred_fallthru
          _
      $region40: #{tpu_custom_call.1} parent=5 // pred_fallthru
        _
      %p328 = scmp.le.s32.totalorder 1, %s22
      %p329 = scmp.lt.s32.totalorder %s22, 5
      %p330 = pnand %p328, %p329
      %p331 = pneg %p330
      // Predicated region
      $region45: #{tpu_custom_call.1} parent=5 // pred_check
        _
      $region46: #{tpu_custom_call.1} parent=5 // pred_check_branch
        %333 = sbr.rel (%p330) target = $region48
      $region47: #{tpu_custom_call.1} parent=5 // pred_region
        %s334 = ssub.s32 %s22, 1
        %s335 = sand.u32 %s49, 1
        %s336 = scalar_lea.sflag [#allocation3], %s335
        %s337 = sand.u32 %s49, 1
        %s338 = smul.addr %s337, 148
        %s339 = scalar_lea.vmem [#allocation2], %s338
        // Predicated region
        $region49: #{tpu_custom_call.1} parent=47 // pred_check
          %p340 = pneg %p62
        $region50: #{tpu_custom_call.1} parent=47 // pred_check_branch
          %342 = sbr.rel (%p340) target = $region52
        $region51: #{tpu_custom_call.1} parent=47 // pred_region
          %343 = dma.done %s336, 2368
        $region52: #{tpu_custom_call.1} parent=47 // pred_fallthru
          _
        // Predicated region
        $region53: #{tpu_custom_call.1} parent=47 // pred_check
          %p344 = pneg %p83
        $region54: #{tpu_custom_call.1} parent=47 // pred_check_branch
          %346 = sbr.rel (%p344) target = $region56
        $region55: #{tpu_custom_call.1} parent=47 // pred_region
          %347 = dma.done [#allocation6], 288
        $region56: #{tpu_custom_call.1} parent=47 // pred_fallthru
          _
        // Predicated region
        $region57: #{tpu_custom_call.1} parent=47 // pred_check
          %p348 = pneg %p104
        $region58: #{tpu_custom_call.1} parent=47 // pred_check_branch
          %350 = sbr.rel (%p348) target = $region60
        $region59: #{tpu_custom_call.1} parent=47 // pred_region
          %351 = dma.done [#allocation6], 16
        $region60: #{tpu_custom_call.1} parent=47 // pred_fallthru
          _
        // Predicated region
        $region61: #{tpu_custom_call.1} parent=47 // pred_check
          %p352 = pneg %p125
        $region62: #{tpu_custom_call.1} parent=47 // pred_check_branch
          %354 = sbr.rel (%p352) target = $region64
        $region63: #{tpu_custom_call.1} parent=47 // pred_region
          %355 = dma.done [#allocation9], 16
        $region64: #{tpu_custom_call.1} parent=47 // pred_fallthru
          _
        // Predicated region
        $region65: #{tpu_custom_call.1} parent=47 // pred_check
          %p356 = pneg %p146
        $region66: #{tpu_custom_call.1} parent=47 // pred_check_branch
          %358 = sbr.rel (%p356) target = $region68
        $region67: #{tpu_custom_call.1} parent=47 // pred_region
          %359 = dma.done [#allocation9], 9216
        $region68: #{tpu_custom_call.1} parent=47 // pred_fallthru
          _
        // Predicated region
        $region69: #{tpu_custom_call.1} parent=47 // pred_check
          %p360 = pneg %p167
        $region70: #{tpu_custom_call.1} parent=47 // pred_check_branch
          %362 = sbr.rel (%p360) target = $region72
        $region71: #{tpu_custom_call.1} parent=47 // pred_region
          %363 = dma.done [#allocation12], 16
        $region72: #{tpu_custom_call.1} parent=47 // pred_fallthru
          _
        // Predicated region
        $region73: #{tpu_custom_call.1} parent=47 // pred_check
          %p364 = pneg %p188
        $region74: #{tpu_custom_call.1} parent=47 // pred_check_branch
          %366 = sbr.rel (%p364) target = $region76
        $region75: #{tpu_custom_call.1} parent=47 // pred_region
          %367 = dma.done [#allocation12], 16
        $region76: #{tpu_custom_call.1} parent=47 // pred_fallthru
          _
        %s368 = sand.u32 %s49, 1
        %s369 = scalar_lea.sflag [#allocation3], %s368
        %s370 = sand.u32 %s49, 1
        %s371 = smul.addr %s370, 148
        %s372 = scalar_lea.vmem [#allocation2], %s371
        %p373 = pneg %p62
        %p374 = pneg %p59
        %p375 = pneg %p83
        %p376 = pneg %p80
        %p377 = pneg %p104
        %p378 = pneg %p101
        %p379 = pneg %p125
        %p380 = pneg %p122
        %p381 = pneg %p146
        %p382 = pneg %p143
        %p383 = pneg %p167
        %p384 = pneg %p164
        %p385 = pneg %p188
        %p386 = pneg %p185
        %p387 = pneg %p216
        %p388 = pneg %p213
        %s389 = sand.u32 %s203, 1
        %s390 = scalar_lea.sflag [#allocation4], %s389
        %s391 = sand.u32 %s203, 1
        %s392 = smul.addr %s391, 96
        %s393 = scalar_lea.vmem [#allocation14], %s392
        %v395 = vld [vmem:[%s339] sm:$0xf]
        %v396 = vld [vmem:[%s339 + $0x4] sm:$0xf]
        %v397 = vld [vmem:[%s339 + $0x8] sm:$0xf]
        %v398 = vld [vmem:[%s339 + $0xc] sm:$0xf]
        %v399 = vld [vmem:[%s339 + $0x10] sm:$0xf]
        %v400 = vld [vmem:[%s339 + $0x14] sm:$0xf]
        %v401 = vld [vmem:[%s339 + $0x18] sm:$0xf]
        %v402 = vld [vmem:[%s339 + $0x1c] sm:$0xf]
        %v403 = vld [vmem:[%s339 + $0x20] sm:$0xf]
        %v404 = vld [vmem:[%s339 + $0x24] sm:$0xf]
        %v405 = vld [vmem:[%s339 + $0x28] sm:$0xf]
        %v406 = vld [vmem:[%s339 + $0x2c] sm:$0xf]
        %v407 = vld [vmem:[%s339 + $0x30] sm:$0xf]
        %v408 = vld [vmem:[%s339 + $0x34] sm:$0xf]
        %v409 = vld [vmem:[%s339 + $0x38] sm:$0xf]
        %v410 = vld [vmem:[%s339 + $0x3c] sm:$0xf]
        %v411 = vld [vmem:[%s339 + $0x40] sm:$0xf]
        %v412 = vld [vmem:[%s339 + $0x44] sm:$0xf]
        %v413 = vld [vmem:[%s339 + $0x48] sm:$0xf]
        %v414 = vld [vmem:[%s339 + $0x4c] sm:$0xf]
        %v415 = vld [vmem:[%s339 + $0x50] sm:$0xf]
        %v416 = vld [vmem:[%s339 + $0x54] sm:$0xf]
        %v417 = vld [vmem:[%s339 + $0x58] sm:$0xf]
        %v418 = vld [vmem:[%s339 + $0x5c] sm:$0xf]
        %v419 = vld [vmem:[%s339 + $0x60] sm:$0xf]
        %v420 = vld [vmem:[%s339 + $0x64] sm:$0xf]
        %v421 = vld [vmem:[%s339 + $0x68] sm:$0xf]
        %v422 = vld [vmem:[%s339 + $0x6c] sm:$0xf]
        %v423 = vld [vmem:[%s339 + $0x70] sm:$0xf]
        %v424 = vld [vmem:[%s339 + $0x74] sm:$0xf]
        %v425 = vld [vmem:[%s339 + $0x78] sm:$0xf]
        %v426 = vld [vmem:[%s339 + $0x7c] sm:$0xf]
        %v427 = vld [vmem:[%s339 + $0x80] sm:$0xf]
        %v428 = vld [vmem:[%s339 + $0x84] sm:$0xf]
        %v429 = vld [vmem:[%s339 + $0x88] sm:$0xf]
        %v430 = vld [vmem:[%s339 + $0x8c] sm:$0xf]
        %v431 = vld [vmem:[%s339 + $0x90] sm:$0x3]
        %v432 = vld [vmem:[#allocation5] sm:$0x3]
        %s433 = scalar_lea.vmem [#allocation5], 2
        %v434 = vld [vmem:[%s433] sm:$0x3]
        %v466 = vunpack.c.l.b16 %v395
        %v467 = vunpack.c.l.b16 %v396
        %v468 = vunpack.c.l.b16 %v397
        %v469 = vunpack.c.l.b16 %v398
        %v470 = vunpack.c.l.b16 %v399
        %v471 = vunpack.c.l.b16 %v400
        %v472 = vunpack.c.l.b16 %v401
        %v473 = vunpack.c.l.b16 %v402
        %v474 = vunpack.c.l.b16 %v403
        %v475 = vunpack.c.l.b16 %v404
        %v476 = vunpack.c.l.b16 %v405
        %v477 = vunpack.c.l.b16 %v406
        %v478 = vunpack.c.l.b16 %v407
        %v479 = vunpack.c.l.b16 %v408
        %v480 = vunpack.c.l.b16 %v409
        %v481 = vunpack.c.l.b16 %v410
        %v482 = vunpack.c.l.b16 %v411
        %v483 = vunpack.c.l.b16 %v412
        %v484 = vunpack.c.l.b16 %v413
        %v485 = vunpack.c.l.b16 %v414
        %v486 = vunpack.c.l.b16 %v415
        %v487 = vunpack.c.l.b16 %v416
        %v488 = vunpack.c.l.b16 %v417
        %v489 = vunpack.c.l.b16 %v418
        %v490 = vunpack.c.l.b16 %v419
        %v491 = vunpack.c.l.b16 %v420
        %v492 = vunpack.c.l.b16 %v421
        %v493 = vunpack.c.l.b16 %v422
        %v494 = vunpack.c.l.b16 %v423
        %v495 = vunpack.c.l.b16 %v424
        %v496 = vunpack.c.l.b16 %v425
        %v497 = vpack.c.b16 %v467, %v466
        %v498 = vpack.c.b16 %v469, %v468
        %v499 = vpack.c.b16 %v471, %v470
        %v500 = vpack.c.b16 %v473, %v472
        %v501 = vpack.c.b16 %v475, %v474
        %v502 = vpack.c.b16 %v477, %v476
        %v503 = vpack.c.b16 %v479, %v478
        %v504 = vpack.c.b16 %v481, %v480
        %v505 = vpack.c.b16 %v483, %v482
        %v506 = vpack.c.b16 %v485, %v484
        %v507 = vpack.c.b16 %v487, %v486
        %v508 = vpack.c.b16 %v489, %v488
        %v509 = vpack.c.b16 %v491, %v490
        %v510 = vpack.c.b16 %v493, %v492
        %v511 = vpack.c.b16 %v495, %v494
        %v512 = vpack.c.b16 %v496, %v496
        %vm513 = vsmask.f32 7424
        %v515 = vshrl.u32 %v497, 16
        %v517 = vshll.u32 %v497, 16
        %v519 = vrot.slane %v517, 1
        %v520 = vor.u32 %v515, %v519
        %v522 = vshll.u32 %v498, 16
        %v524 = vrot.slane %v522, 1
        %v525 = vsel %vm513, %v520, %v524
        %v526 = vshrl.u32 %v498, 16
        %v528 = vor.u32 %v526, %v524
        %v530 = vshll.u32 %v499, 16
        %v532 = vrot.slane %v530, 1
        %v533 = vsel %vm513, %v528, %v532
        %v534 = vshrl.u32 %v499, 16
        %v536 = vor.u32 %v534, %v532
        %v538 = vshll.u32 %v500, 16
        %v540 = vrot.slane %v538, 1
        %v541 = vsel %vm513, %v536, %v540
        %v542 = vshrl.u32 %v500, 16
        %v544 = vor.u32 %v542, %v540
        %v546 = vshll.u32 %v501, 16
        %v548 = vrot.slane %v546, 1
        %v549 = vsel %vm513, %v544, %v548
        %v550 = vshrl.u32 %v501, 16
        %v552 = vor.u32 %v550, %v548
        %v554 = vshll.u32 %v502, 16
        %v556 = vrot.slane %v554, 1
        %v557 = vsel %vm513, %v552, %v556
        %v558 = vshrl.u32 %v502, 16
        %v560 = vor.u32 %v558, %v556
        %v562 = vshll.u32 %v503, 16
        %v564 = vrot.slane %v562, 1
        %v565 = vsel %vm513, %v560, %v564
        %v566 = vshrl.u32 %v503, 16
        %v568 = vor.u32 %v566, %v564
        %v570 = vshll.u32 %v504, 16
        %v572 = vrot.slane %v570, 1
        %v573 = vsel %vm513, %v568, %v572
        %v574 = vshrl.u32 %v504, 16
        %v576 = vor.u32 %v574, %v572
        %v578 = vshll.u32 %v505, 16
        %v580 = vrot.slane %v578, 1
        %v581 = vsel %vm513, %v576, %v580
        %v582 = vshrl.u32 %v505, 16
        %v584 = vor.u32 %v582, %v580
        %v586 = vshll.u32 %v506, 16
        %v588 = vrot.slane %v586, 1
        %v589 = vsel %vm513, %v584, %v588
        %v590 = vshrl.u32 %v506, 16
        %v592 = vor.u32 %v590, %v588
        %v594 = vshll.u32 %v507, 16
        %v596 = vrot.slane %v594, 1
        %v597 = vsel %vm513, %v592, %v596
        %v598 = vshrl.u32 %v507, 16
        %v600 = vor.u32 %v598, %v596
        %v602 = vshll.u32 %v508, 16
        %v604 = vrot.slane %v602, 1
        %v605 = vsel %vm513, %v600, %v604
        %v606 = vshrl.u32 %v508, 16
        %v608 = vor.u32 %v606, %v604
        %v610 = vshll.u32 %v509, 16
        %v612 = vrot.slane %v610, 1
        %v613 = vsel %vm513, %v608, %v612
        %v614 = vshrl.u32 %v509, 16
        %v616 = vor.u32 %v614, %v612
        %v618 = vshll.u32 %v510, 16
        %v620 = vrot.slane %v618, 1
        %v621 = vsel %vm513, %v616, %v620
        %v622 = vshrl.u32 %v510, 16
        %v624 = vor.u32 %v622, %v620
        %v626 = vshll.u32 %v511, 16
        %v628 = vrot.slane %v626, 1
        %v629 = vsel %vm513, %v624, %v628
        %v630 = vshrl.u32 %v511, 16
        %v632 = vor.u32 %v630, %v628
        %v634 = vshll.u32 %v512, 16
        %v636 = vrot.slane %v634, 1
        %v637 = vsel %vm513, %v632, %v636
        %v638 = vshrl.u32 %v512, 16
        %v640 = vor.u32 %v638, %v636
        %vm641 = vcmask 31744
        %v643 = vsel %vm641, %v525, 0
        %v646 = vsel %vm641, %v533, 0
        %v649 = vsel %vm641, %v541, 0
        %v652 = vsel %vm641, %v549, 0
        %v655 = vsel %vm641, %v557, 0
        %v658 = vsel %vm641, %v565, 0
        %v661 = vsel %vm641, %v573, 0
        %v664 = vsel %vm641, %v581, 0
        %v667 = vsel %vm641, %v589, 0
        %v670 = vsel %vm641, %v597, 0
        %v673 = vsel %vm641, %v605, 0
        %v676 = vsel %vm641, %v613, 0
        %v679 = vsel %vm641, %v621, 0
        %v682 = vsel %vm641, %v629, 0
        %v685 = vsel %vm641, %v637, 0
        %v688 = vsel %vm641, %v640, 0
        %vm690 = vcmask 1041408
        %v692 = vsel %vm690, %v434, 0
        %694 = vmatprep.subr.bf16.mxu0 0
        %695 = vmatpush1.bf16.msra.mxu0 %v692
        %696 = vmatprep.subr.bf16.mxu0 0
        %697 = vmatpush1.bf16.msra.mxu0 0
        %698 = vmatprep.subr.bf16.mxu0 0
        %699 = vmatpush1.bf16.msra.mxu0 0
        %700 = vmatprep.subr.bf16.mxu0 0
        %701 = vmatpush1.bf16.msra.mxu0 0
        %702 = vmatprep.subr.bf16.mxu0 0
        %703 = vmatpush1.bf16.msra.mxu0 0
        %704 = vmatprep.subr.bf16.mxu0 0
        %705 = vmatpush1.bf16.msra.mxu0 0
        %706 = vmatprep.subr.bf16.mxu0 0
        %707 = vmatpush1.bf16.msra.mxu0 0
        %708 = vmatprep.subr.bf16.mxu0 0
        %709 = vmatpush1.bf16.msra.mxu0 0
        %710 = vmatprep.subr.bf16.mxu0 0
        %711 = vmatpush1.bf16.msra.mxu0 0
        %712 = vmatprep.subr.bf16.mxu0 0
        %713 = vmatpush1.bf16.msra.mxu0 0
        %714 = vmatprep.subr.bf16.mxu0 0
        %715 = vmatpush1.bf16.msra.mxu0 0
        %716 = vmatprep.subr.bf16.mxu0 0
        %717 = vmatpush1.bf16.msra.mxu0 0
        %718 = vmatprep.subr.bf16.mxu0 0
        %719 = vmatpush1.bf16.msra.mxu0 0
        %720 = vmatprep.subr.bf16.mxu0 0
        %721 = vmatpush1.bf16.msra.mxu0 0
        %722 = vmatprep.subr.bf16.mxu0 0
        %723 = vmatpush1.bf16.msra.mxu0 0
        %724 = vmatprep.subr.bf16.mxu0 0
        %725 = vmatpush1.bf16.msra.mxu0 0
        %726 = vmatprep.mubr.bf16.mxu0 0
        %727 = vmatmul.mubr.bf16.gmra.mrb[0].mxu0 %v643
        %v728 = vpop.f32.mrb[0].mxu0
        %v729 = vadd.f32 0.0, %v728
        %v730 = vpop.f32.mrb[0].mxu0
        %v731 = vpop.f32.mrb[0].mxu0
        %v732 = vadd.f32 0.0, %v731
        %v733 = vpop.f32.mrb[0].mxu0
        %734 = vmatprep.mubr.bf16.mxu0 0
        %735 = vmatmul.mubr.bf16.gmra.mrb[0].mxu0 %v646
        %v736 = vpop.f32.mrb[0].mxu0
        %v737 = vadd.f32 0.0, %v736
        %v738 = vpop.f32.mrb[0].mxu0
        %v739 = vpop.f32.mrb[0].mxu0
        %v740 = vadd.f32 0.0, %v739
        %v741 = vpop.f32.mrb[0].mxu0
        %742 = vmatprep.mubr.bf16.mxu0 0
        %743 = vmatmul.mubr.bf16.gmra.mrb[0].mxu0 %v649
        %v744 = vpop.f32.mrb[0].mxu0
        %v745 = vadd.f32 0.0, %v744
        %v746 = vpop.f32.mrb[0].mxu0
        %v747 = vpop.f32.mrb[0].mxu0
        %v748 = vadd.f32 0.0, %v747
        %v749 = vpop.f32.mrb[0].mxu0
        %750 = vmatprep.mubr.bf16.mxu0 0
        %751 = vmatmul.mubr.bf16.gmra.mrb[0].mxu0 %v652
        %v752 = vpop.f32.mrb[0].mxu0
        %v753 = vadd.f32 0.0, %v752
        %v754 = vpop.f32.mrb[0].mxu0
        %v755 = vpop.f32.mrb[0].mxu0
        %v756 = vadd.f32 0.0, %v755
        %v757 = vpop.f32.mrb[0].mxu0
        %758 = vmatprep.mubr.bf16.mxu0 0
        %759 = vmatmul.mubr.bf16.gmra.mrb[0].mxu0 %v655
        %v760 = vpop.f32.mrb[0].mxu0
        %v761 = vadd.f32 0.0, %v760
        %v762 = vpop.f32.mrb[0].mxu0
        %v763 = vpop.f32.mrb[0].mxu0
        %v764 = vadd.f32 0.0, %v763
        %v765 = vpop.f32.mrb[0].mxu0
        %766 = vmatprep.mubr.bf16.mxu0 0
        %767 = vmatmul.mubr.bf16.gmra.mrb[0].mxu0 %v658
        %v768 = vpop.f32.mrb[0].mxu0
        %v769 = vadd.f32 0.0, %v768
        %v770 = vpop.f32.mrb[0].mxu0
        %v771 = vpop.f32.mrb[0].mxu0
        %v772 = vadd.f32 0.0, %v771
        %v773 = vpop.f32.mrb[0].mxu0
        %774 = vmatprep.mubr.bf16.mxu0 0
        %775 = vmatmul.mubr.bf16.gmra.mrb[0].mxu0 %v661
        %v776 = vpop.f32.mrb[0].mxu0
        %v777 = vadd.f32 0.0, %v776
        %v778 = vpop.f32.mrb[0].mxu0
        %v779 = vpop.f32.mrb[0].mxu0
        %v780 = vadd.f32 0.0, %v779
        %v781 = vpop.f32.mrb[0].mxu0
        %782 = vmatprep.mubr.bf16.mxu0 0
        %783 = vmatmul.mubr.bf16.gmra.mrb[0].mxu0 %v664
        %v784 = vpop.f32.mrb[0].mxu0
        %v785 = vadd.f32 0.0, %v784
        %v786 = vpop.f32.mrb[0].mxu0
        %v787 = vpop.f32.mrb[0].mxu0
        %v788 = vadd.f32 0.0, %v787
        %v789 = vpop.f32.mrb[0].mxu0
        %790 = vmatprep.mubr.bf16.mxu0 0
        %791 = vmatmul.mubr.bf16.gmra.mrb[0].mxu0 %v667
        %v792 = vpop.f32.mrb[0].mxu0
        %v793 = vadd.f32 0.0, %v792
        %v794 = vpop.f32.mrb[0].mxu0
        %v795 = vpop.f32.mrb[0].mxu0
        %v796 = vadd.f32 0.0, %v795
        %v797 = vpop.f32.mrb[0].mxu0
        %798 = vmatprep.mubr.bf16.mxu0 0
        %799 = vmatmul.mubr.bf16.gmra.mrb[0].mxu0 %v670
        %v800 = vpop.f32.mrb[0].mxu0
        %v801 = vadd.f32 0.0, %v800
        %v802 = vpop.f32.mrb[0].mxu0
        %v803 = vpop.f32.mrb[0].mxu0
        %v804 = vadd.f32 0.0, %v803
        %v805 = vpop.f32.mrb[0].mxu0
        %806 = vmatprep.mubr.bf16.mxu0 0
        %807 = vmatmul.mubr.bf16.gmra.mrb[0].mxu0 %v673
        %v808 = vpop.f32.mrb[0].mxu0
        %v809 = vadd.f32 0.0, %v808
        %v810 = vpop.f32.mrb[0].mxu0
        %v811 = vpop.f32.mrb[0].mxu0
        %v812 = vadd.f32 0.0, %v811
        %v813 = vpop.f32.mrb[0].mxu0
        %814 = vmatprep.mubr.bf16.mxu0 0
        %815 = vmatmul.mubr.bf16.gmra.mrb[0].mxu0 %v676
        %v816 = vpop.f32.mrb[0].mxu0
        %v817 = vadd.f32 0.0, %v816
        %v818 = vpop.f32.mrb[0].mxu0
        %v819 = vpop.f32.mrb[0].mxu0
        %v820 = vadd.f32 0.0, %v819
        %v821 = vpop.f32.mrb[0].mxu0
        %822 = vmatprep.mubr.bf16.mxu0 0
        %823 = vmatmul.mubr.bf16.gmra.mrb[0].mxu0 %v679
        %v824 = vpop.f32.mrb[0].mxu0
        %v825 = vadd.f32 0.0, %v824
        %v826 = vpop.f32.mrb[0].mxu0
        %v827 = vpop.f32.mrb[0].mxu0
        %v828 = vadd.f32 0.0, %v827
        %v829 = vpop.f32.mrb[0].mxu0
        %830 = vmatprep.mubr.bf16.mxu0 0
        %831 = vmatmul.mubr.bf16.gmra.mrb[0].mxu0 %v682
        %v832 = vpop.f32.mrb[0].mxu0
        %v833 = vadd.f32 0.0, %v832
        %v834 = vpop.f32.mrb[0].mxu0
        %v835 = vpop.f32.mrb[0].mxu0
        %v836 = vadd.f32 0.0, %v835
        %v837 = vpop.f32.mrb[0].mxu0
        %838 = vmatprep.mubr.bf16.mxu0 0
        %839 = vmatmul.mubr.bf16.gmra.mrb[0].mxu0 %v685
        %v840 = vpop.f32.mrb[0].mxu0
        %v841 = vadd.f32 0.0, %v840
        %v842 = vpop.f32.mrb[0].mxu0
        %v843 = vpop.f32.mrb[0].mxu0
        %v844 = vadd.f32 0.0, %v843
        %v845 = vpop.f32.mrb[0].mxu0
        %846 = vmatprep.mubr.bf16.mxu0 0
        %847 = vmatmul.mubr.bf16.gmra.mrb[0].mxu0 %v688
        %v848 = vpop.f32.mrb[0].mxu0
        %v849 = vadd.f32 0.0, %v848
        %v850 = vpop.f32.mrb[0].mxu0
        %v851 = vpop.f32.mrb[0].mxu0
        %v852 = vpop.f32.mrb[0].mxu0
        %853 = vdwg.mxu0
        %v854 = vsel %vm641, %v497, 0
        %v856 = vsel %vm641, %v498, 0
        %v858 = vsel %vm641, %v499, 0
        %v860 = vsel %vm641, %v500, 0
        %v862 = vsel %vm641, %v501, 0
        %v864 = vsel %vm641, %v502, 0
        %v866 = vsel %vm641, %v503, 0
        %v868 = vsel %vm641, %v504, 0
        %v870 = vsel %vm641, %v505, 0
        %v872 = vsel %vm641, %v506, 0
        %v874 = vsel %vm641, %v507, 0
        %v876 = vsel %vm641, %v508, 0
        %v878 = vsel %vm641, %v509, 0
        %v880 = vsel %vm641, %v510, 0
        %v882 = vsel %vm641, %v511, 0
        %v884 = vsel %vm641, %v512, 0
        %v887 = vsel %vm690, %v432, 0
        %889 = vmatprep.subr.bf16.mxu0 0
        %890 = vmatpush1.bf16.msra.mxu0 %v887
        %891 = vmatprep.subr.bf16.mxu0 0
        %892 = vmatpush1.bf16.msra.mxu0 0
        %893 = vmatprep.subr.bf16.mxu0 0
        %894 = vmatpush1.bf16.msra.mxu0 0
        %895 = vmatprep.subr.bf16.mxu0 0
        %896 = vmatpush1.bf16.msra.mxu0 0
        %897 = vmatprep.subr.bf16.mxu0 0
        %898 = vmatpush1.bf16.msra.mxu0 0
        %899 = vmatprep.subr.bf16.mxu0 0
        %900 = vmatpush1.bf16.msra.mxu0 0
        %901 = vmatprep.subr.bf16.mxu0 0
        %902 = vmatpush1.bf16.msra.mxu0 0
        %903 = vmatprep.subr.bf16.mxu0 0
        %904 = vmatpush1.bf16.msra.mxu0 0
        %905 = vmatprep.subr.bf16.mxu0 0
        %906 = vmatpush1.bf16.msra.mxu0 0
        %907 = vmatprep.subr.bf16.mxu0 0
        %908 = vmatpush1.bf16.msra.mxu0 0
        %909 = vmatprep.subr.bf16.mxu0 0
        %910 = vmatpush1.bf16.msra.mxu0 0
        %911 = vmatprep.subr.bf16.mxu0 0
        %912 = vmatpush1.bf16.msra.mxu0 0
        %913 = vmatprep.subr.bf16.mxu0 0
        %914 = vmatpush1.bf16.msra.mxu0 0
        %915 = vmatprep.subr.bf16.mxu0 0
        %916 = vmatpush1.bf16.msra.mxu0 0
        %917 = vmatprep.subr.bf16.mxu0 0
        %918 = vmatpush1.bf16.msra.mxu0 0
        %919 = vmatprep.subr.bf16.mxu0 0
        %920 = vmatpush1.bf16.msra.mxu0 0
        %921 = vmatprep.mubr.bf16.mxu0 0
        %922 = vmatmul.mubr.bf16.gmra.mrb[0].mxu0 %v854
        %v923 = vpop.f32.mrb[0].mxu0
        %v924 = vadd.f32 %v729, %v923
        %v925 = vpop.f32.mrb[0].mxu0
        %v926 = vpop.f32.mrb[0].mxu0
        %v927 = vadd.f32 %v732, %v926
        %v928 = vpop.f32.mrb[0].mxu0
        %929 = vmatprep.mubr.bf16.mxu0 0
        %930 = vmatmul.mubr.bf16.gmra.mrb[0].mxu0 %v856
        %v931 = vpop.f32.mrb[0].mxu0
        %v932 = vadd.f32 %v737, %v931
        %v933 = vpop.f32.mrb[0].mxu0
        %v934 = vpop.f32.mrb[0].mxu0
        %v935 = vadd.f32 %v740, %v934
        %v936 = vpop.f32.mrb[0].mxu0
        %937 = vmatprep.mubr.bf16.mxu0 0
        %938 = vmatmul.mubr.bf16.gmra.mrb[0].mxu0 %v858
        %v939 = vpop.f32.mrb[0].mxu0
        %v940 = vadd.f32 %v745, %v939
        %v941 = vpop.f32.mrb[0].mxu0
        %v942 = vpop.f32.mrb[0].mxu0
        %v943 = vadd.f32 %v748, %v942
        %v944 = vpop.f32.mrb[0].mxu0
        %945 = vmatprep.mubr.bf16.mxu0 0
        %946 = vmatmul.mubr.bf16.gmra.mrb[0].mxu0 %v860
        %v947 = vpop.f32.mrb[0].mxu0
        %v948 = vadd.f32 %v753, %v947
        %v949 = vpop.f32.mrb[0].mxu0
        %v950 = vpop.f32.mrb[0].mxu0
        %v951 = vadd.f32 %v756, %v950
        %v952 = vpop.f32.mrb[0].mxu0
        %953 = vmatprep.mubr.bf16.mxu0 0
        %954 = vmatmul.mubr.bf16.gmra.mrb[0].mxu0 %v862
        %v955 = vpop.f32.mrb[0].mxu0
        %v956 = vadd.f32 %v761, %v955
        %v957 = vpop.f32.mrb[0].mxu0
        %v958 = vpop.f32.mrb[0].mxu0
        %v959 = vadd.f32 %v764, %v958
        %v960 = vpop.f32.mrb[0].mxu0
        %961 = vmatprep.mubr.bf16.mxu0 0
        %962 = vmatmul.mubr.bf16.gmra.mrb[0].mxu0 %v864
        %v963 = vpop.f32.mrb[0].mxu0
        %v964 = vadd.f32 %v769, %v963
        %v965 = vpop.f32.mrb[0].mxu0
        %v966 = vpop.f32.mrb[0].mxu0
        %v967 = vadd.f32 %v772, %v966
        %v968 = vpop.f32.mrb[0].mxu0
        %969 = vmatprep.mubr.bf16.mxu0 0
        %970 = vmatmul.mubr.bf16.gmra.mrb[0].mxu0 %v866
        %v971 = vpop.f32.mrb[0].mxu0
        %v972 = vadd.f32 %v777, %v971
        %v973 = vpop.f32.mrb[0].mxu0
        %v974 = vpop.f32.mrb[0].mxu0
        %v975 = vadd.f32 %v780, %v974
        %v976 = vpop.f32.mrb[0].mxu0
        %977 = vmatprep.mubr.bf16.mxu0 0
        %978 = vmatmul.mubr.bf16.gmra.mrb[0].mxu0 %v868
        %v979 = vpop.f32.mrb[0].mxu0
        %v980 = vadd.f32 %v785, %v979
        %v981 = vpop.f32.mrb[0].mxu0
        %v982 = vpop.f32.mrb[0].mxu0
        %v983 = vadd.f32 %v788, %v982
        %v984 = vpop.f32.mrb[0].mxu0
        %985 = vmatprep.mubr.bf16.mxu0 0
        %986 = vmatmul.mubr.bf16.gmra.mrb[0].mxu0 %v870
        %v987 = vpop.f32.mrb[0].mxu0
        %v988 = vadd.f32 %v793, %v987
        %v989 = vpop.f32.mrb[0].mxu0
        %v990 = vpop.f32.mrb[0].mxu0
        %v991 = vadd.f32 %v796, %v990
        %v992 = vpop.f32.mrb[0].mxu0
        %993 = vmatprep.mubr.bf16.mxu0 0
        %994 = vmatmul.mubr.bf16.gmra.mrb[0].mxu0 %v872
        %v995 = vpop.f32.mrb[0].mxu0
        %v996 = vadd.f32 %v801, %v995
        %v997 = vpop.f32.mrb[0].mxu0
        %v998 = vpop.f32.mrb[0].mxu0
        %v999 = vadd.f32 %v804, %v998
        %v1000 = vpop.f32.mrb[0].mxu0
        %1001 = vmatprep.mubr.bf16.mxu0 0
        %1002 = vmatmul.mubr.bf16.gmra.mrb[0].mxu0 %v874
        %v1003 = vpop.f32.mrb[0].mxu0
        %v1004 = vadd.f32 %v809, %v1003
        %v1005 = vpop.f32.mrb[0].mxu0
        %v1006 = vpop.f32.mrb[0].mxu0
        %v1007 = vadd.f32 %v812, %v1006
        %v1008 = vpop.f32.mrb[0].mxu0
        %1009 = vmatprep.mubr.bf16.mxu0 0
        %1010 = vmatmul.mubr.bf16.gmra.mrb[0].mxu0 %v876
        %v1011 = vpop.f32.mrb[0].mxu0
        %v1012 = vadd.f32 %v817, %v1011
        %v1013 = vpop.f32.mrb[0].mxu0
        %v1014 = vpop.f32.mrb[0].mxu0
        %v1015 = vadd.f32 %v820, %v1014
        %v1016 = vpop.f32.mrb[0].mxu0
        %1017 = vmatprep.mubr.bf16.mxu0 0
        %1018 = vmatmul.mubr.bf16.gmra.mrb[0].mxu0 %v878
        %v1019 = vpop.f32.mrb[0].mxu0
        %v1020 = vadd.f32 %v825, %v1019
        %v1021 = vpop.f32.mrb[0].mxu0
        %v1022 = vpop.f32.mrb[0].mxu0
        %v1023 = vadd.f32 %v828, %v1022
        %v1024 = vpop.f32.mrb[0].mxu0
        %1025 = vmatprep.mubr.bf16.mxu0 0
        %1026 = vmatmul.mubr.bf16.gmra.mrb[0].mxu0 %v880
        %v1027 = vpop.f32.mrb[0].mxu0
        %v1028 = vadd.f32 %v833, %v1027
        %v1029 = vpop.f32.mrb[0].mxu0
        %v1030 = vpop.f32.mrb[0].mxu0
        %v1031 = vadd.f32 %v836, %v1030
        %v1032 = vpop.f32.mrb[0].mxu0
        %1033 = vmatprep.mubr.bf16.mxu0 0
        %1034 = vmatmul.mubr.bf16.gmra.mrb[0].mxu0 %v882
        %v1035 = vpop.f32.mrb[0].mxu0
        %v1036 = vadd.f32 %v841, %v1035
        %v1037 = vpop.f32.mrb[0].mxu0
        %v1038 = vpop.f32.mrb[0].mxu0
        %v1039 = vadd.f32 %v844, %v1038
        %v1040 = vpop.f32.mrb[0].mxu0
        %1041 = vmatprep.mubr.bf16.mxu0 0
        %1042 = vmatmul.mubr.bf16.gmra.mrb[0].mxu0 %v884
        %v1043 = vpop.f32.mrb[0].mxu0
        %v1044 = vadd.f32 %v849, %v1043
        %v1045 = vpop.f32.mrb[0].mxu0
        %v1046 = vpop.f32.mrb[0].mxu0
        %v1047 = vpop.f32.mrb[0].mxu0
        %1048 = vdwg.mxu0
        %s1049 = scalar_lea.vmem [#allocation5], 4
        %v1050 = vld [vmem:[%s1049] sm:$0x3]
        %vm1051 = vcmask 1046528
        %v1052 = vrot.slane %v497, 1
        %v1053 = vrot.slane %v498, 1
        %v1054 = vsel %vm1051, %v1052, %v1053
        %v1055 = vrot.slane %v499, 1
        %v1056 = vsel %vm1051, %v1053, %v1055
        %v1057 = vrot.slane %v500, 1
        %v1058 = vsel %vm1051, %v1055, %v1057
        %v1059 = vrot.slane %v501, 1
        %v1060 = vsel %vm1051, %v1057, %v1059
        %v1061 = vrot.slane %v502, 1
        %v1062 = vsel %vm1051, %v1059, %v1061
        %v1063 = vrot.slane %v503, 1
        %v1064 = vsel %vm1051, %v1061, %v1063
        %v1065 = vrot.slane %v504, 1
        %v1066 = vsel %vm1051, %v1063, %v1065
        %v1067 = vrot.slane %v505, 1
        %v1068 = vsel %vm1051, %v1065, %v1067
        %v1069 = vrot.slane %v506, 1
        %v1070 = vsel %vm1051, %v1067, %v1069
        %v1071 = vrot.slane %v507, 1
        %v1072 = vsel %vm1051, %v1069, %v1071
        %v1073 = vrot.slane %v508, 1
        %v1074 = vsel %vm1051, %v1071, %v1073
        %v1075 = vrot.slane %v509, 1
        %v1076 = vsel %vm1051, %v1073, %v1075
        %v1077 = vrot.slane %v510, 1
        %v1078 = vsel %vm1051, %v1075, %v1077
        %v1079 = vrot.slane %v511, 1
        %v1080 = vsel %vm1051, %v1077, %v1079
        %v1081 = vrot.slane %v512, 1
        %v1082 = vsel %vm1051, %v1079, %v1081
        %v1084 = vsel %vm641, %v1054, 0
        %v1087 = vsel %vm641, %v1056, 0
        %v1090 = vsel %vm641, %v1058, 0
        %v1093 = vsel %vm641, %v1060, 0
        %v1096 = vsel %vm641, %v1062, 0
        %v1099 = vsel %vm641, %v1064, 0
        %v1102 = vsel %vm641, %v1066, 0
        %v1105 = vsel %vm641, %v1068, 0
        %v1108 = vsel %vm641, %v1070, 0
        %v1111 = vsel %vm641, %v1072, 0
        %v1114 = vsel %vm641, %v1074, 0
        %v1117 = vsel %vm641, %v1076, 0
        %v1120 = vsel %vm641, %v1078, 0
        %v1123 = vsel %vm641, %v1080, 0
        %v1126 = vsel %vm641, %v1082, 0
        %v1129 = vsel %vm641, %v1081, 0
        %v1132 = vsel %vm690, %v1050, 0
        %1134 = vmatprep.subr.bf16.mxu0 0
        %1135 = vmatpush1.bf16.msra.mxu0 %v1132
        %1136 = vmatprep.subr.bf16.mxu0 0
        %1137 = vmatpush1.bf16.msra.mxu0 0
        %1138 = vmatprep.subr.bf16.mxu0 0
        %1139 = vmatpush1.bf16.msra.mxu0 0
        %1140 = vmatprep.subr.bf16.mxu0 0
        %1141 = vmatpush1.bf16.msra.mxu0 0
        %1142 = vmatprep.subr.bf16.mxu0 0
        %1143 = vmatpush1.bf16.msra.mxu0 0
        %1144 = vmatprep.subr.bf16.mxu0 0
        %1145 = vmatpush1.bf16.msra.mxu0 0
        %1146 = vmatprep.subr.bf16.mxu0 0
        %1147 = vmatpush1.bf16.msra.mxu0 0
        %1148 = vmatprep.subr.bf16.mxu0 0
        %1149 = vmatpush1.bf16.msra.mxu0 0
        %1150 = vmatprep.subr.bf16.mxu0 0
        %1151 = vmatpush1.bf16.msra.mxu0 0
        %1152 = vmatprep.subr.bf16.mxu0 0
        %1153 = vmatpush1.bf16.msra.mxu0 0
        %1154 = vmatprep.subr.bf16.mxu0 0
        %1155 = vmatpush1.bf16.msra.mxu0 0
        %1156 = vmatprep.subr.bf16.mxu0 0
        %1157 = vmatpush1.bf16.msra.mxu0 0
        %1158 = vmatprep.subr.bf16.mxu0 0
        %1159 = vmatpush1.bf16.msra.mxu0 0
        %1160 = vmatprep.subr.bf16.mxu0 0
        %1161 = vmatpush1.bf16.msra.mxu0 0
        %1162 = vmatprep.subr.bf16.mxu0 0
        %1163 = vmatpush1.bf16.msra.mxu0 0
        %1164 = vmatprep.subr.bf16.mxu0 0
        %1165 = vmatpush1.bf16.msra.mxu0 0
        %1166 = vmatprep.mubr.bf16.mxu0 0
        %1167 = vmatmul.mubr.bf16.gmra.mrb[0].mxu0 %v1084
        %v1168 = vpop.f32.mrb[0].mxu0
        %v1169 = vadd.f32 0.0, %v1168
        %v1170 = vpop.f32.mrb[0].mxu0
        %v1171 = vpop.f32.mrb[0].mxu0
        %v1172 = vadd.f32 0.0, %v1171
        %v1173 = vpop.f32.mrb[0].mxu0
        %1174 = vmatprep.mubr.bf16.mxu0 0
        %1175 = vmatmul.mubr.bf16.gmra.mrb[0].mxu0 %v1087
        %v1176 = vpop.f32.mrb[0].mxu0
        %v1177 = vadd.f32 0.0, %v1176
        %v1178 = vpop.f32.mrb[0].mxu0
        %v1179 = vpop.f32.mrb[0].mxu0
        %v1180 = vadd.f32 0.0, %v1179
        %v1181 = vpop.f32.mrb[0].mxu0
        %1182 = vmatprep.mubr.bf16.mxu0 0
        %1183 = vmatmul.mubr.bf16.gmra.mrb[0].mxu0 %v1090
        %v1184 = vpop.f32.mrb[0].mxu0
        %v1185 = vadd.f32 0.0, %v1184
        %v1186 = vpop.f32.mrb[0].mxu0
        %v1187 = vpop.f32.mrb[0].mxu0
        %v1188 = vadd.f32 0.0, %v1187
        %v1189 = vpop.f32.mrb[0].mxu0
        %1190 = vmatprep.mubr.bf16.mxu0 0
        %1191 = vmatmul.mubr.bf16.gmra.mrb[0].mxu0 %v1093
        %v1192 = vpop.f32.mrb[0].mxu0
        %v1193 = vadd.f32 0.0, %v1192
        %v1194 = vpop.f32.mrb[0].mxu0
        %v1195 = vpop.f32.mrb[0].mxu0
        %v1196 = vadd.f32 0.0, %v1195
        %v1197 = vpop.f32.mrb[0].mxu0
        %1198 = vmatprep.mubr.bf16.mxu0 0
        %1199 = vmatmul.mubr.bf16.gmra.mrb[0].mxu0 %v1096
        %v1200 = vpop.f32.mrb[0].mxu0
        %v1201 = vadd.f32 0.0, %v1200
        %v1202 = vpop.f32.mrb[0].mxu0
        %v1203 = vpop.f32.mrb[0].mxu0
        %v1204 = vadd.f32 0.0, %v1203
        %v1205 = vpop.f32.mrb[0].mxu0
        %1206 = vmatprep.mubr.bf16.mxu0 0
        %1207 = vmatmul.mubr.bf16.gmra.mrb[0].mxu0 %v1099
        %v1208 = vpop.f32.mrb[0].mxu0
        %v1209 = vadd.f32 0.0, %v1208
        %v1210 = vpop.f32.mrb[0].mxu0
        %v1211 = vpop.f32.mrb[0].mxu0
        %v1212 = vadd.f32 0.0, %v1211
        %v1213 = vpop.f32.mrb[0].mxu0
        %1214 = vmatprep.mubr.bf16.mxu0 0
        %1215 = vmatmul.mubr.bf16.gmra.mrb[0].mxu0 %v1102
        %v1216 = vpop.f32.mrb[0].mxu0
        %v1217 = vadd.f32 0.0, %v1216
        %v1218 = vpop.f32.mrb[0].mxu0
        %v1219 = vpop.f32.mrb[0].mxu0
        %v1220 = vadd.f32 0.0, %v1219
        %v1221 = vpop.f32.mrb[0].mxu0
        %1222 = vmatprep.mubr.bf16.mxu0 0
        %1223 = vmatmul.mubr.bf16.gmra.mrb[0].mxu0 %v1105
        %v1224 = vpop.f32.mrb[0].mxu0
        %v1225 = vadd.f32 0.0, %v1224
        %v1226 = vpop.f32.mrb[0].mxu0
        %v1227 = vpop.f32.mrb[0].mxu0
        %v1228 = vadd.f32 0.0, %v1227
        %v1229 = vpop.f32.mrb[0].mxu0
        %1230 = vmatprep.mubr.bf16.mxu0 0
        %1231 = vmatmul.mubr.bf16.gmra.mrb[0].mxu0 %v1108
        %v1232 = vpop.f32.mrb[0].mxu0
        %v1233 = vadd.f32 0.0, %v1232
        %v1234 = vpop.f32.mrb[0].mxu0
        %v1235 = vpop.f32.mrb[0].mxu0
        %v1236 = vadd.f32 0.0, %v1235
        %v1237 = vpop.f32.mrb[0].mxu0
        %1238 = vmatprep.mubr.bf16.mxu0 0
        %1239 = vmatmul.mubr.bf16.gmra.mrb[0].mxu0 %v1111
        %v1240 = vpop.f32.mrb[0].mxu0
        %v1241 = vadd.f32 0.0, %v1240
        %v1242 = vpop.f32.mrb[0].mxu0
        %v1243 = vpop.f32.mrb[0].mxu0
        %v1244 = vadd.f32 0.0, %v1243
        %v1245 = vpop.f32.mrb[0].mxu0
        %1246 = vmatprep.mubr.bf16.mxu0 0
        %1247 = vmatmul.mubr.bf16.gmra.mrb[0].mxu0 %v1114
        %v1248 = vpop.f32.mrb[0].mxu0
        %v1249 = vadd.f32 0.0, %v1248
        %v1250 = vpop.f32.mrb[0].mxu0
        %v1251 = vpop.f32.mrb[0].mxu0
        %v1252 = vadd.f32 0.0, %v1251
        %v1253 = vpop.f32.mrb[0].mxu0
        %1254 = vmatprep.mubr.bf16.mxu0 0
        %1255 = vmatmul.mubr.bf16.gmra.mrb[0].mxu0 %v1117
        %v1256 = vpop.f32.mrb[0].mxu0
        %v1257 = vadd.f32 0.0, %v1256
        %v1258 = vpop.f32.mrb[0].mxu0
        %v1259 = vpop.f32.mrb[0].mxu0
        %v1260 = vadd.f32 0.0, %v1259
        %v1261 = vpop.f32.mrb[0].mxu0
        %1262 = vmatprep.mubr.bf16.mxu0 0
        %1263 = vmatmul.mubr.bf16.gmra.mrb[0].mxu0 %v1120
        %v1264 = vpop.f32.mrb[0].mxu0
        %v1265 = vadd.f32 0.0, %v1264
        %v1266 = vpop.f32.mrb[0].mxu0
        %v1267 = vpop.f32.mrb[0].mxu0
        %v1268 = vadd.f32 0.0, %v1267
        %v1269 = vpop.f32.mrb[0].mxu0
        %1270 = vmatprep.mubr.bf16.mxu0 0
        %1271 = vmatmul.mubr.bf16.gmra.mrb[0].mxu0 %v1123
        %v1272 = vpop.f32.mrb[0].mxu0
        %v1273 = vadd.f32 0.0, %v1272
        %v1274 = vpop.f32.mrb[0].mxu0
        %v1275 = vpop.f32.mrb[0].mxu0
        %v1276 = vadd.f32 0.0, %v1275
        %v1277 = vpop.f32.mrb[0].mxu0
        %1278 = vmatprep.mubr.bf16.mxu0 0
        %1279 = vmatmul.mubr.bf16.gmra.mrb[0].mxu0 %v1126
        %v1280 = vpop.f32.mrb[0].mxu0
        %v1281 = vadd.f32 0.0, %v1280
        %v1282 = vpop.f32.mrb[0].mxu0
        %v1283 = vpop.f32.mrb[0].mxu0
        %v1284 = vadd.f32 0.0, %v1283
        %v1285 = vpop.f32.mrb[0].mxu0
        %1286 = vmatprep.mubr.bf16.mxu0 0
        %1287 = vmatmul.mubr.bf16.gmra.mrb[0].mxu0 %v1129
        %v1288 = vpop.f32.mrb[0].mxu0
        %v1289 = vadd.f32 0.0, %v1288
        %v1290 = vpop.f32.mrb[0].mxu0
        %v1291 = vpop.f32.mrb[0].mxu0
        %v1292 = vpop.f32.mrb[0].mxu0
        %1293 = vdwg.mxu0
        %v1294 = vadd.f32 %v924, %v1169
        %v1295 = vadd.f32 %v927, %v1172
        %v1296 = vadd.f32 %v932, %v1177
        %v1297 = vadd.f32 %v935, %v1180
        %v1298 = vadd.f32 %v940, %v1185
        %v1299 = vadd.f32 %v943, %v1188
        %v1300 = vadd.f32 %v948, %v1193
        %v1301 = vadd.f32 %v951, %v1196
        %v1302 = vadd.f32 %v956, %v1201
        %v1303 = vadd.f32 %v959, %v1204
        %v1304 = vadd.f32 %v964, %v1209
        %v1305 = vadd.f32 %v967, %v1212
        %v1306 = vadd.f32 %v972, %v1217
        %v1307 = vadd.f32 %v975, %v1220
        %v1308 = vadd.f32 %v980, %v1225
        %v1309 = vadd.f32 %v983, %v1228
        %v1310 = vadd.f32 %v988, %v1233
        %v1311 = vadd.f32 %v991, %v1236
        %v1312 = vadd.f32 %v996, %v1241
        %v1313 = vadd.f32 %v999, %v1244
        %v1314 = vadd.f32 %v1004, %v1249
        %v1315 = vadd.f32 %v1007, %v1252
        %v1316 = vadd.f32 %v1012, %v1257
        %v1317 = vadd.f32 %v1015, %v1260
        %v1318 = vadd.f32 %v1020, %v1265
        %v1319 = vadd.f32 %v1023, %v1268
        %v1320 = vadd.f32 %v1028, %v1273
        %v1321 = vadd.f32 %v1031, %v1276
        %v1322 = vadd.f32 %v1036, %v1281
        %v1323 = vadd.f32 %v1039, %v1284
        %v1324 = vadd.f32 %v1044, %v1289
        %s1325 = scalar_lea.vmem [#allocation5], 6
        %v1326 = vld [vmem:[%s1325] sm:$0x3]
        %v1330 = vunpack.c.l.b16 %v426
        %v1331 = vunpack.c.l.b16 %v427
        %v1332 = vunpack.c.l.b16 %v428
        %v1333 = vpack.c.b16 %v470, %v469
        %v1334 = vpack.c.b16 %v472, %v471
        %v1335 = vpack.c.b16 %v474, %v473
        %v1336 = vpack.c.b16 %v476, %v475
        %v1337 = vpack.c.b16 %v478, %v477
        %v1338 = vpack.c.b16 %v480, %v479
        %v1339 = vpack.c.b16 %v482, %v481
        %v1340 = vpack.c.b16 %v484, %v483
        %v1341 = vpack.c.b16 %v486, %v485
        %v1342 = vpack.c.b16 %v488, %v487
        %v1343 = vpack.c.b16 %v490, %v489
        %v1344 = vpack.c.b16 %v492, %v491
        %v1345 = vpack.c.b16 %v494, %v493
        %v1346 = vpack.c.b16 %v496, %v495
        %v1347 = vpack.c.b16 %v1331, %v1330
        %v1348 = vpack.c.b16 %v1332, %v1332
        %v1350 = vsel %vm641, %v1333, 0
        %v1353 = vsel %vm641, %v1334, 0
        %v1356 = vsel %vm641, %v1335, 0
        %v1359 = vsel %vm641, %v1336, 0
        %v1362 = vsel %vm641, %v1337, 0
        %v1365 = vsel %vm641, %v1338, 0
        %v1368 = vsel %vm641, %v1339, 0
        %v1371 = vsel %vm641, %v1340, 0
        %v1374 = vsel %vm641, %v1341, 0
        %v1377 = vsel %vm641, %v1342, 0
        %v1380 = vsel %vm641, %v1343, 0
        %v1383 = vsel %vm641, %v1344, 0
        %v1386 = vsel %vm641, %v1345, 0
        %v1389 = vsel %vm641, %v1346, 0
        %v1392 = vsel %vm641, %v1347, 0
        %v1395 = vsel %vm641, %v1348, 0
        %v1398 = vsel %vm690, %v1326, 0
        %1400 = vmatprep.subr.bf16.mxu0 0
        %1401 = vmatpush1.bf16.msra.mxu0 %v1398
        %1402 = vmatprep.subr.bf16.mxu0 0
        %1403 = vmatpush1.bf16.msra.mxu0 0
        %1404 = vmatprep.subr.bf16.mxu0 0
        %1405 = vmatpush1.bf16.msra.mxu0 0
        %1406 = vmatprep.subr.bf16.mxu0 0
        %1407 = vmatpush1.bf16.msra.mxu0 0
        %1408 = vmatprep.subr.bf16.mxu0 0
        %1409 = vmatpush1.bf16.msra.mxu0 0
        %1410 = vmatprep.subr.bf16.mxu0 0
        %1411 = vmatpush1.bf16.msra.mxu0 0
        %1412 = vmatprep.subr.bf16.mxu0 0
        %1413 = vmatpush1.bf16.msra.mxu0 0
        %1414 = vmatprep.subr.bf16.mxu0 0
        %1415 = vmatpush1.bf16.msra.mxu0 0
        %1416 = vmatprep.subr.bf16.mxu0 0
        %1417 = vmatpush1.bf16.msra.mxu0 0
        %1418 = vmatprep.subr.bf16.mxu0 0
        %1419 = vmatpush1.bf16.msra.mxu0 0
        %1420 = vmatprep.subr.bf16.mxu0 0
        %1421 = vmatpush1.bf16.msra.mxu0 0
        %1422 = vmatprep.subr.bf16.mxu0 0
        %1423 = vmatpush1.bf16.msra.mxu0 0
        %1424 = vmatprep.subr.bf16.mxu0 0
        %1425 = vmatpush1.bf16.msra.mxu0 0
        %1426 = vmatprep.subr.bf16.mxu0 0
        %1427 = vmatpush1.bf16.msra.mxu0 0
        %1428 = vmatprep.subr.bf16.mxu0 0
        %1429 = vmatpush1.bf16.msra.mxu0 0
        %1430 = vmatprep.subr.bf16.mxu0 0
        %1431 = vmatpush1.bf16.msra.mxu0 0
        %1432 = vmatprep.mubr.bf16.mxu0 0
        %1433 = vmatmul.mubr.bf16.gmra.mrb[0].mxu0 %v1350
        %v1434 = vpop.f32.mrb[0].mxu0
        %v1435 = vadd.f32 0.0, %v1434
        %v1436 = vpop.f32.mrb[0].mxu0
        %v1437 = vpop.f32.mrb[0].mxu0
        %v1438 = vadd.f32 0.0, %v1437
        %v1439 = vpop.f32.mrb[0].mxu0
        %1440 = vmatprep.mubr.bf16.mxu0 0
        %1441 = vmatmul.mubr.bf16.gmra.mrb[0].mxu0 %v1353
        %v1442 = vpop.f32.mrb[0].mxu0
        %v1443 = vadd.f32 0.0, %v1442
        %v1444 = vpop.f32.mrb[0].mxu0
        %v1445 = vpop.f32.mrb[0].mxu0
        %v1446 = vadd.f32 0.0, %v1445
        %v1447 = vpop.f32.mrb[0].mxu0
        %1448 = vmatprep.mubr.bf16.mxu0 0
        %1449 = vmatmul.mubr.bf16.gmra.mrb[0].mxu0 %v1356
        %v1450 = vpop.f32.mrb[0].mxu0
        %v1451 = vadd.f32 0.0, %v1450
        %v1452 = vpop.f32.mrb[0].mxu0
        %v1453 = vpop.f32.mrb[0].mxu0
        %v1454 = vadd.f32 0.0, %v1453
        %v1455 = vpop.f32.mrb[0].mxu0
        %1456 = vmatprep.mubr.bf16.mxu0 0
        %1457 = vmatmul.mubr.bf16.gmra.mrb[0].mxu0 %v1359
        %v1458 = vpop.f32.mrb[0].mxu0
        %v1459 = vadd.f32 0.0, %v1458
        %v1460 = vpop.f32.mrb[0].mxu0
        %v1461 = vpop.f32.mrb[0].mxu0
        %v1462 = vadd.f32 0.0, %v1461
        %v1463 = vpop.f32.mrb[0].mxu0
        %1464 = vmatprep.mubr.bf16.mxu0 0
        %1465 = vmatmul.mubr.bf16.gmra.mrb[0].mxu0 %v1362
        %v1466 = vpop.f32.mrb[0].mxu0
        %v1467 = vadd.f32 0.0, %v1466
        %v1468 = vpop.f32.mrb[0].mxu0
        %v1469 = vpop.f32.mrb[0].mxu0
        %v1470 = vadd.f32 0.0, %v1469
        %v1471 = vpop.f32.mrb[0].mxu0
        %1472 = vmatprep.mubr.bf16.mxu0 0
        %1473 = vmatmul.mubr.bf16.gmra.mrb[0].mxu0 %v1365
        %v1474 = vpop.f32.mrb[0].mxu0
        %v1475 = vadd.f32 0.0, %v1474
        %v1476 = vpop.f32.mrb[0].mxu0
        %v1477 = vpop.f32.mrb[0].mxu0
        %v1478 = vadd.f32 0.0, %v1477
        %v1479 = vpop.f32.mrb[0].mxu0
        %1480 = vmatprep.mubr.bf16.mxu0 0
        %1481 = vmatmul.mubr.bf16.gmra.mrb[0].mxu0 %v1368
        %v1482 = vpop.f32.mrb[0].mxu0
        %v1483 = vadd.f32 0.0, %v1482
        %v1484 = vpop.f32.mrb[0].mxu0
        %v1485 = vpop.f32.mrb[0].mxu0
        %v1486 = vadd.f32 0.0, %v1485
        %v1487 = vpop.f32.mrb[0].mxu0
        %1488 = vmatprep.mubr.bf16.mxu0 0
        %1489 = vmatmul.mubr.bf16.gmra.mrb[0].mxu0 %v1371
        %v1490 = vpop.f32.mrb[0].mxu0
        %v1491 = vadd.f32 0.0, %v1490
        %v1492 = vpop.f32.mrb[0].mxu0
        %v1493 = vpop.f32.mrb[0].mxu0
        %v1494 = vadd.f32 0.0, %v1493
        %v1495 = vpop.f32.mrb[0].mxu0
        %1496 = vmatprep.mubr.bf16.mxu0 0
        %1497 = vmatmul.mubr.bf16.gmra.mrb[0].mxu0 %v1374
        %v1498 = vpop.f32.mrb[0].mxu0
        %v1499 = vadd.f32 0.0, %v1498
        %v1500 = vpop.f32.mrb[0].mxu0
        %v1501 = vpop.f32.mrb[0].mxu0
        %v1502 = vadd.f32 0.0, %v1501
        %v1503 = vpop.f32.mrb[0].mxu0
        %1504 = vmatprep.mubr.bf16.mxu0 0
        %1505 = vmatmul.mubr.bf16.gmra.mrb[0].mxu0 %v1377
        %v1506 = vpop.f32.mrb[0].mxu0
        %v1507 = vadd.f32 0.0, %v1506
        %v1508 = vpop.f32.mrb[0].mxu0
        %v1509 = vpop.f32.mrb[0].mxu0
        %v1510 = vadd.f32 0.0, %v1509
        %v1511 = vpop.f32.mrb[0].mxu0
        %1512 = vmatprep.mubr.bf16.mxu0 0
        %1513 = vmatmul.mubr.bf16.gmra.mrb[0].mxu0 %v1380
        %v1514 = vpop.f32.mrb[0].mxu0
        %v1515 = vadd.f32 0.0, %v1514
        %v1516 = vpop.f32.mrb[0].mxu0
        %v1517 = vpop.f32.mrb[0].mxu0
        %v1518 = vadd.f32 0.0, %v1517
        %v1519 = vpop.f32.mrb[0].mxu0
        %1520 = vmatprep.mubr.bf16.mxu0 0
        %1521 = vmatmul.mubr.bf16.gmra.mrb[0].mxu0 %v1383
        %v1522 = vpop.f32.mrb[0].mxu0
        %v1523 = vadd.f32 0.0, %v1522
        %v1524 = vpop.f32.mrb[0].mxu0
        %v1525 = vpop.f32.mrb[0].mxu0
        %v1526 = vadd.f32 0.0, %v1525
        %v1527 = vpop.f32.mrb[0].mxu0
        %1528 = vmatprep.mubr.bf16.mxu0 0
        %1529 = vmatmul.mubr.bf16.gmra.mrb[0].mxu0 %v1386
        %v1530 = vpop.f32.mrb[0].mxu0
        %v1531 = vadd.f32 0.0, %v1530
        %v1532 = vpop.f32.mrb[0].mxu0
        %v1533 = vpop.f32.mrb[0].mxu0
        %v1534 = vadd.f32 0.0, %v1533
        %v1535 = vpop.f32.mrb[0].mxu0
        %1536 = vmatprep.mubr.bf16.mxu0 0
        %1537 = vmatmul.mubr.bf16.gmra.mrb[0].mxu0 %v1389
        %v1538 = vpop.f32.mrb[0].mxu0
        %v1539 = vadd.f32 0.0, %v1538
        %v1540 = vpop.f32.mrb[0].mxu0
        %v1541 = vpop.f32.mrb[0].mxu0
        %v1542 = vadd.f32 0.0, %v1541
        %v1543 = vpop.f32.mrb[0].mxu0
        %1544 = vmatprep.mubr.bf16.mxu0 0
        %1545 = vmatmul.mubr.bf16.gmra.mrb[0].mxu0 %v1392
        %v1546 = vpop.f32.mrb[0].mxu0
        %v1547 = vadd.f32 0.0, %v1546
        %v1548 = vpop.f32.mrb[0].mxu0
        %v1549 = vpop.f32.mrb[0].mxu0
        %v1550 = vadd.f32 0.0, %v1549
        %v1551 = vpop.f32.mrb[0].mxu0
        %1552 = vmatprep.mubr.bf16.mxu0 0
        %1553 = vmatmul.mubr.bf16.gmra.mrb[0].mxu0 %v1395
        %v1554 = vpop.f32.mrb[0].mxu0
        %v1555 = vadd.f32 0.0, %v1554
        %v1556 = vpop.f32.mrb[0].mxu0
        %v1557 = vpop.f32.mrb[0].mxu0
        %v1558 = vpop.f32.mrb[0].mxu0
        %1559 = vdwg.mxu0
        %v1560 = vadd.f32 %v1294, %v1435
        %v1561 = vadd.f32 %v1295, %v1438
        %v1562 = vadd.f32 %v1296, %v1443
        %v1563 = vadd.f32 %v1297, %v1446
        %v1564 = vadd.f32 %v1298, %v1451
        %v1565 = vadd.f32 %v1299, %v1454
        %v1566 = vadd.f32 %v1300, %v1459
        %v1567 = vadd.f32 %v1301, %v1462
        %v1568 = vadd.f32 %v1302, %v1467
        %v1569 = vadd.f32 %v1303, %v1470
        %v1570 = vadd.f32 %v1304, %v1475
        %v1571 = vadd.f32 %v1305, %v1478
        %v1572 = vadd.f32 %v1306, %v1483
        %v1573 = vadd.f32 %v1307, %v1486
        %v1574 = vadd.f32 %v1308, %v1491
        %v1575 = vadd.f32 %v1309, %v1494
        %v1576 = vadd.f32 %v1310, %v1499
        %v1577 = vadd.f32 %v1311, %v1502
        %v1578 = vadd.f32 %v1312, %v1507
        %v1579 = vadd.f32 %v1313, %v1510
        %v1580 = vadd.f32 %v1314, %v1515
        %v1581 = vadd.f32 %v1315, %v1518
        %v1582 = vadd.f32 %v1316, %v1523
        %v1583 = vadd.f32 %v1317, %v1526
        %v1584 = vadd.f32 %v1318, %v1531
        %v1585 = vadd.f32 %v1319, %v1534
        %v1586 = vadd.f32 %v1320, %v1539
        %v1587 = vadd.f32 %v1321, %v1542
        %v1588 = vadd.f32 %v1322, %v1547
        %v1589 = vadd.f32 %v1323, %v1550
        %v1590 = vadd.f32 %v1324, %v1555
        %s1591 = scalar_lea.vmem [#allocation5], 8
        %v1592 = vld [vmem:[%s1591] sm:$0x3]
        %v1593 = vshrl.u32 %v1333, 16
        %v1595 = vshll.u32 %v1333, 16
        %v1597 = vrot.slane %v1595, 1
        %v1598 = vor.u32 %v1593, %v1597
        %v1599 = vshll.u32 %v1334, 16
        %v1601 = vrot.slane %v1599, 1
        %v1602 = vsel %vm513, %v1598, %v1601
        %v1603 = vshrl.u32 %v1334, 16
        %v1605 = vor.u32 %v1603, %v1601
        %v1606 = vshll.u32 %v1335, 16
        %v1608 = vrot.slane %v1606, 1
        %v1609 = vsel %vm513, %v1605, %v1608
        %v1610 = vshrl.u32 %v1335, 16
        %v1612 = vor.u32 %v1610, %v1608
        %v1613 = vshll.u32 %v1336, 16
        %v1615 = vrot.slane %v1613, 1
        %v1616 = vsel %vm513, %v1612, %v1615
        %v1617 = vshrl.u32 %v1336, 16
        %v1619 = vor.u32 %v1617, %v1615
        %v1620 = vshll.u32 %v1337, 16
        %v1622 = vrot.slane %v1620, 1
        %v1623 = vsel %vm513, %v1619, %v1622
        %v1624 = vshrl.u32 %v1337, 16
        %v1626 = vor.u32 %v1624, %v1622
        %v1627 = vshll.u32 %v1338, 16
        %v1629 = vrot.slane %v1627, 1
        %v1630 = vsel %vm513, %v1626, %v1629
        %v1631 = vshrl.u32 %v1338, 16
        %v1633 = vor.u32 %v1631, %v1629
        %v1634 = vshll.u32 %v1339, 16
        %v1636 = vrot.slane %v1634, 1
        %v1637 = vsel %vm513, %v1633, %v1636
        %v1638 = vshrl.u32 %v1339, 16
        %v1640 = vor.u32 %v1638, %v1636
        %v1641 = vshll.u32 %v1340, 16
        %v1643 = vrot.slane %v1641, 1
        %v1644 = vsel %vm513, %v1640, %v1643
        %v1645 = vshrl.u32 %v1340, 16
        %v1647 = vor.u32 %v1645, %v1643
        %v1648 = vshll.u32 %v1341, 16
        %v1650 = vrot.slane %v1648, 1
        %v1651 = vsel %vm513, %v1647, %v1650
        %v1652 = vshrl.u32 %v1341, 16
        %v1654 = vor.u32 %v1652, %v1650
        %v1655 = vshll.u32 %v1342, 16
        %v1657 = vrot.slane %v1655, 1
        %v1658 = vsel %vm513, %v1654, %v1657
        %v1659 = vshrl.u32 %v1342, 16
        %v1661 = vor.u32 %v1659, %v1657
        %v1662 = vshll.u32 %v1343, 16
        %v1664 = vrot.slane %v1662, 1
        %v1665 = vsel %vm513, %v1661, %v1664
        %v1666 = vshrl.u32 %v1343, 16
        %v1668 = vor.u32 %v1666, %v1664
        %v1669 = vshll.u32 %v1344, 16
        %v1671 = vrot.slane %v1669, 1
        %v1672 = vsel %vm513, %v1668, %v1671
        %v1673 = vshrl.u32 %v1344, 16
        %v1675 = vor.u32 %v1673, %v1671
        %v1676 = vshll.u32 %v1345, 16
        %v1678 = vrot.slane %v1676, 1
        %v1679 = vsel %vm513, %v1675, %v1678
        %v1680 = vshrl.u32 %v1345, 16
        %v1682 = vor.u32 %v1680, %v1678
        %v1683 = vshll.u32 %v1346, 16
        %v1685 = vrot.slane %v1683, 1
        %v1686 = vsel %vm513, %v1682, %v1685
        %v1687 = vshrl.u32 %v1346, 16
        %v1689 = vor.u32 %v1687, %v1685
        %v1690 = vshll.u32 %v1347, 16
        %v1692 = vrot.slane %v1690, 1
        %v1693 = vsel %vm513, %v1689, %v1692
        %v1694 = vshrl.u32 %v1347, 16
        %v1696 = vor.u32 %v1694, %v1692
        %v1697 = vshll.u32 %v1348, 16
        %v1699 = vrot.slane %v1697, 1
        %v1700 = vsel %vm513, %v1696, %v1699
        %v1701 = vshrl.u32 %v1348, 16
        %v1703 = vor.u32 %v1701, %v1699
        %v1705 = vsel %vm641, %v1602, 0
        %v1708 = vsel %vm641, %v1609, 0
        %v1711 = vsel %vm641, %v1616, 0
        %v1714 = vsel %vm641, %v1623, 0
        %v1717 = vsel %vm641, %v1630, 0
        %v1720 = vsel %vm641, %v1637, 0
        %v1723 = vsel %vm641, %v1644, 0
        %v1726 = vsel %vm641, %v1651, 0
        %v1729 = vsel %vm641, %v1658, 0
        %v1732 = vsel %vm641, %v1665, 0
        %v1735 = vsel %vm641, %v1672, 0
        %v1738 = vsel %vm641, %v1679, 0
        %v1741 = vsel %vm641, %v1686, 0
        %v1744 = vsel %vm641, %v1693, 0
        %v1747 = vsel %vm641, %v1700, 0
        %v1750 = vsel %vm641, %v1703, 0
        %v1753 = vsel %vm690, %v1592, 0
        %1755 = vmatprep.subr.bf16.mxu0 0
        %1756 = vmatpush1.bf16.msra.mxu0 %v1753
        %1757 = vmatprep.subr.bf16.mxu0 0
        %1758 = vmatpush1.bf16.msra.mxu0 0
        %1759 = vmatprep.subr.bf16.mxu0 0
        %1760 = vmatpush1.bf16.msra.mxu0 0
        %1761 = vmatprep.subr.bf16.mxu0 0
        %1762 = vmatpush1.bf16.msra.mxu0 0
        %1763 = vmatprep.subr.bf16.mxu0 0
        %1764 = vmatpush1.bf16.msra.mxu0 0
        %1765 = vmatprep.subr.bf16.mxu0 0
        %1766 = vmatpush1.bf16.msra.mxu0 0
        %1767 = vmatprep.subr.bf16.mxu0 0
        %1768 = vmatpush1.bf16.msra.mxu0 0
        %1769 = vmatprep.subr.bf16.mxu0 0
        %1770 = vmatpush1.bf16.msra.mxu0 0
        %1771 = vmatprep.subr.bf16.mxu0 0
        %1772 = vmatpush1.bf16.msra.mxu0 0
        %1773 = vmatprep.subr.bf16.mxu0 0
        %1774 = vmatpush1.bf16.msra.mxu0 0
        %1775 = vmatprep.subr.bf16.mxu0 0
        %1776 = vmatpush1.bf16.msra.mxu0 0
        %1777 = vmatprep.subr.bf16.mxu0 0
        %1778 = vmatpush1.bf16.msra.mxu0 0
        %1779 = vmatprep.subr.bf16.mxu0 0
        %1780 = vmatpush1.bf16.msra.mxu0 0
        %1781 = vmatprep.subr.bf16.mxu0 0
        %1782 = vmatpush1.bf16.msra.mxu0 0
        %1783 = vmatprep.subr.bf16.mxu0 0
        %1784 = vmatpush1.bf16.msra.mxu0 0
        %1785 = vmatprep.subr.bf16.mxu0 0
        %1786 = vmatpush1.bf16.msra.mxu0 0
        %1787 = vmatprep.mubr.bf16.mxu0 0
        %1788 = vmatmul.mubr.bf16.gmra.mrb[0].mxu0 %v1705
        %v1789 = vpop.f32.mrb[0].mxu0
        %v1790 = vadd.f32 0.0, %v1789
        %v1791 = vpop.f32.mrb[0].mxu0
        %v1792 = vpop.f32.mrb[0].mxu0
        %v1793 = vadd.f32 0.0, %v1792
        %v1794 = vpop.f32.mrb[0].mxu0
        %1795 = vmatprep.mubr.bf16.mxu0 0
        %1796 = vmatmul.mubr.bf16.gmra.mrb[0].mxu0 %v1708
        %v1797 = vpop.f32.mrb[0].mxu0
        %v1798 = vadd.f32 0.0, %v1797
        %v1799 = vpop.f32.mrb[0].mxu0
        %v1800 = vpop.f32.mrb[0].mxu0
        %v1801 = vadd.f32 0.0, %v1800
        %v1802 = vpop.f32.mrb[0].mxu0
        %1803 = vmatprep.mubr.bf16.mxu0 0
        %1804 = vmatmul.mubr.bf16.gmra.mrb[0].mxu0 %v1711
        %v1805 = vpop.f32.mrb[0].mxu0
        %v1806 = vadd.f32 0.0, %v1805
        %v1807 = vpop.f32.mrb[0].mxu0
        %v1808 = vpop.f32.mrb[0].mxu0
        %v1809 = vadd.f32 0.0, %v1808
        %v1810 = vpop.f32.mrb[0].mxu0
        %1811 = vmatprep.mubr.bf16.mxu0 0
        %1812 = vmatmul.mubr.bf16.gmra.mrb[0].mxu0 %v1714
        %v1813 = vpop.f32.mrb[0].mxu0
        %v1814 = vadd.f32 0.0, %v1813
        %v1815 = vpop.f32.mrb[0].mxu0
        %v1816 = vpop.f32.mrb[0].mxu0
        %v1817 = vadd.f32 0.0, %v1816
        %v1818 = vpop.f32.mrb[0].mxu0
        %1819 = vmatprep.mubr.bf16.mxu0 0
        %1820 = vmatmul.mubr.bf16.gmra.mrb[0].mxu0 %v1717
        %v1821 = vpop.f32.mrb[0].mxu0
        %v1822 = vadd.f32 0.0, %v1821
        %v1823 = vpop.f32.mrb[0].mxu0
        %v1824 = vpop.f32.mrb[0].mxu0
        %v1825 = vadd.f32 0.0, %v1824
        %v1826 = vpop.f32.mrb[0].mxu0
        %1827 = vmatprep.mubr.bf16.mxu0 0
        %1828 = vmatmul.mubr.bf16.gmra.mrb[0].mxu0 %v1720
        %v1829 = vpop.f32.mrb[0].mxu0
        %v1830 = vadd.f32 0.0, %v1829
        %v1831 = vpop.f32.mrb[0].mxu0
        %v1832 = vpop.f32.mrb[0].mxu0
        %v1833 = vadd.f32 0.0, %v1832
        %v1834 = vpop.f32.mrb[0].mxu0
        %1835 = vmatprep.mubr.bf16.mxu0 0
        %1836 = vmatmul.mubr.bf16.gmra.mrb[0].mxu0 %v1723
        %v1837 = vpop.f32.mrb[0].mxu0
        %v1838 = vadd.f32 0.0, %v1837
        %v1839 = vpop.f32.mrb[0].mxu0
        %v1840 = vpop.f32.mrb[0].mxu0
        %v1841 = vadd.f32 0.0, %v1840
        %v1842 = vpop.f32.mrb[0].mxu0
        %1843 = vmatprep.mubr.bf16.mxu0 0
        %1844 = vmatmul.mubr.bf16.gmra.mrb[0].mxu0 %v1726
        %v1845 = vpop.f32.mrb[0].mxu0
        %v1846 = vadd.f32 0.0, %v1845
        %v1847 = vpop.f32.mrb[0].mxu0
        %v1848 = vpop.f32.mrb[0].mxu0
        %v1849 = vadd.f32 0.0, %v1848
        %v1850 = vpop.f32.mrb[0].mxu0
        %1851 = vmatprep.mubr.bf16.mxu0 0
        %1852 = vmatmul.mubr.bf16.gmra.mrb[0].mxu0 %v1729
        %v1853 = vpop.f32.mrb[0].mxu0
        %v1854 = vadd.f32 0.0, %v1853
        %v1855 = vpop.f32.mrb[0].mxu0
        %v1856 = vpop.f32.mrb[0].mxu0
        %v1857 = vadd.f32 0.0, %v1856
        %v1858 = vpop.f32.mrb[0].mxu0
        %1859 = vmatprep.mubr.bf16.mxu0 0
        %1860 = vmatmul.mubr.bf16.gmra.mrb[0].mxu0 %v1732
        %v1861 = vpop.f32.mrb[0].mxu0
        %v1862 = vadd.f32 0.0, %v1861
        %v1863 = vpop.f32.mrb[0].mxu0
        %v1864 = vpop.f32.mrb[0].mxu0
        %v1865 = vadd.f32 0.0, %v1864
        %v1866 = vpop.f32.mrb[0].mxu0
        %1867 = vmatprep.mubr.bf16.mxu0 0
        %1868 = vmatmul.mubr.bf16.gmra.mrb[0].mxu0 %v1735
        %v1869 = vpop.f32.mrb[0].mxu0
        %v1870 = vadd.f32 0.0, %v1869
        %v1871 = vpop.f32.mrb[0].mxu0
        %v1872 = vpop.f32.mrb[0].mxu0
        %v1873 = vadd.f32 0.0, %v1872
        %v1874 = vpop.f32.mrb[0].mxu0
        %1875 = vmatprep.mubr.bf16.mxu0 0
        %1876 = vmatmul.mubr.bf16.gmra.mrb[0].mxu0 %v1738
        %v1877 = vpop.f32.mrb[0].mxu0
        %v1878 = vadd.f32 0.0, %v1877
        %v1879 = vpop.f32.mrb[0].mxu0
        %v1880 = vpop.f32.mrb[0].mxu0
        %v1881 = vadd.f32 0.0, %v1880
        %v1882 = vpop.f32.mrb[0].mxu0
        %1883 = vmatprep.mubr.bf16.mxu0 0
        %1884 = vmatmul.mubr.bf16.gmra.mrb[0].mxu0 %v1741
        %v1885 = vpop.f32.mrb[0].mxu0
        %v1886 = vadd.f32 0.0, %v1885
        %v1887 = vpop.f32.mrb[0].mxu0
        %v1888 = vpop.f32.mrb[0].mxu0
        %v1889 = vadd.f32 0.0, %v1888
        %v1890 = vpop.f32.mrb[0].mxu0
        %1891 = vmatprep.mubr.bf16.mxu0 0
        %1892 = vmatmul.mubr.bf16.gmra.mrb[0].mxu0 %v1744
        %v1893 = vpop.f32.mrb[0].mxu0
        %v1894 = vadd.f32 0.0, %v1893
        %v1895 = vpop.f32.mrb[0].mxu0
        %v1896 = vpop.f32.mrb[0].mxu0
        %v1897 = vadd.f32 0.0, %v1896
        %v1898 = vpop.f32.mrb[0].mxu0
        %1899 = vmatprep.mubr.bf16.mxu0 0
        %1900 = vmatmul.mubr.bf16.gmra.mrb[0].mxu0 %v1747
        %v1901 = vpop.f32.mrb[0].mxu0
        %v1902 = vadd.f32 0.0, %v1901
        %v1903 = vpop.f32.mrb[0].mxu0
        %v1904 = vpop.f32.mrb[0].mxu0
        %v1905 = vadd.f32 0.0, %v1904
        %v1906 = vpop.f32.mrb[0].mxu0
        %1907 = vmatprep.mubr.bf16.mxu0 0
        %1908 = vmatmul.mubr.bf16.gmra.mrb[0].mxu0 %v1750
        %v1909 = vpop.f32.mrb[0].mxu0
        %v1910 = vadd.f32 0.0, %v1909
        %v1911 = vpop.f32.mrb[0].mxu0
        %v1912 = vpop.f32.mrb[0].mxu0
        %v1913 = vpop.f32.mrb[0].mxu0
        %1914 = vdwg.mxu0
        %v1915 = vadd.f32 %v1560, %v1790
        %v1916 = vadd.f32 %v1561, %v1793
        %v1917 = vadd.f32 %v1562, %v1798
        %v1918 = vadd.f32 %v1563, %v1801
        %v1919 = vadd.f32 %v1564, %v1806
        %v1920 = vadd.f32 %v1565, %v1809
        %v1921 = vadd.f32 %v1566, %v1814
        %v1922 = vadd.f32 %v1567, %v1817
        %v1923 = vadd.f32 %v1568, %v1822
        %v1924 = vadd.f32 %v1569, %v1825
        %v1925 = vadd.f32 %v1570, %v1830
        %v1926 = vadd.f32 %v1571, %v1833
        %v1927 = vadd.f32 %v1572, %v1838
        %v1928 = vadd.f32 %v1573, %v1841
        %v1929 = vadd.f32 %v1574, %v1846
        %v1930 = vadd.f32 %v1575, %v1849
        %v1931 = vadd.f32 %v1576, %v1854
        %v1932 = vadd.f32 %v1577, %v1857
        %v1933 = vadd.f32 %v1578, %v1862
        %v1934 = vadd.f32 %v1579, %v1865
        %v1935 = vadd.f32 %v1580, %v1870
        %v1936 = vadd.f32 %v1581, %v1873
        %v1937 = vadd.f32 %v1582, %v1878
        %v1938 = vadd.f32 %v1583, %v1881
        %v1939 = vadd.f32 %v1584, %v1886
        %v1940 = vadd.f32 %v1585, %v1889
        %v1941 = vadd.f32 %v1586, %v1894
        %v1942 = vadd.f32 %v1587, %v1897
        %v1943 = vadd.f32 %v1588, %v1902
        %v1944 = vadd.f32 %v1589, %v1905
        %v1945 = vadd.f32 %v1590, %v1910
        %s1946 = scalar_lea.vmem [#allocation5], 10
        %v1947 = vld [vmem:[%s1946] sm:$0x3]
        %v1948 = vrot.slane %v1333, 1
        %v1949 = vrot.slane %v1334, 1
        %v1950 = vsel %vm1051, %v1948, %v1949
        %v1951 = vrot.slane %v1335, 1
        %v1952 = vsel %vm1051, %v1949, %v1951
        %v1953 = vrot.slane %v1336, 1
        %v1954 = vsel %vm1051, %v1951, %v1953
        %v1955 = vrot.slane %v1337, 1
        %v1956 = vsel %vm1051, %v1953, %v1955
        %v1957 = vrot.slane %v1338, 1
        %v1958 = vsel %vm1051, %v1955, %v1957
        %v1959 = vrot.slane %v1339, 1
        %v1960 = vsel %vm1051, %v1957, %v1959
        %v1961 = vrot.slane %v1340, 1
        %v1962 = vsel %vm1051, %v1959, %v1961
        %v1963 = vrot.slane %v1341, 1
        %v1964 = vsel %vm1051, %v1961, %v1963
        %v1965 = vrot.slane %v1342, 1
        %v1966 = vsel %vm1051, %v1963, %v1965
        %v1967 = vrot.slane %v1343, 1
        %v1968 = vsel %vm1051, %v1965, %v1967
        %v1969 = vrot.slane %v1344, 1
        %v1970 = vsel %vm1051, %v1967, %v1969
        %v1971 = vrot.slane %v1345, 1
        %v1972 = vsel %vm1051, %v1969, %v1971
        %v1973 = vrot.slane %v1346, 1
        %v1974 = vsel %vm1051, %v1971, %v1973
        %v1975 = vrot.slane %v1347, 1
        %v1976 = vsel %vm1051, %v1973, %v1975
        %v1977 = vrot.slane %v1348, 1
        %v1978 = vsel %vm1051, %v1975, %v1977
        %v1980 = vsel %vm641, %v1950, 0
        %v1983 = vsel %vm641, %v1952, 0
        %v1986 = vsel %vm641, %v1954, 0
        %v1989 = vsel %vm641, %v1956, 0
        %v1992 = vsel %vm641, %v1958, 0
        %v1995 = vsel %vm641, %v1960, 0
        %v1998 = vsel %vm641, %v1962, 0
        %v2001 = vsel %vm641, %v1964, 0
        %v2004 = vsel %vm641, %v1966, 0
        %v2007 = vsel %vm641, %v1968, 0
        %v2010 = vsel %vm641, %v1970, 0
        %v2013 = vsel %vm641, %v1972, 0
        %v2016 = vsel %vm641, %v1974, 0
        %v2019 = vsel %vm641, %v1976, 0
        %v2022 = vsel %vm641, %v1978, 0
        %v2025 = vsel %vm641, %v1977, 0
        %v2028 = vsel %vm690, %v1947, 0
        %2030 = vmatprep.subr.bf16.mxu0 0
        %2031 = vmatpush1.bf16.msra.mxu0 %v2028
        %2032 = vmatprep.subr.bf16.mxu0 0
        %2033 = vmatpush1.bf16.msra.mxu0 0
        %2034 = vmatprep.subr.bf16.mxu0 0
        %2035 = vmatpush1.bf16.msra.mxu0 0
        %2036 = vmatprep.subr.bf16.mxu0 0
        %2037 = vmatpush1.bf16.msra.mxu0 0
        %2038 = vmatprep.subr.bf16.mxu0 0
        %2039 = vmatpush1.bf16.msra.mxu0 0
        %2040 = vmatprep.subr.bf16.mxu0 0
        %2041 = vmatpush1.bf16.msra.mxu0 0
        %2042 = vmatprep.subr.bf16.mxu0 0
        %2043 = vmatpush1.bf16.msra.mxu0 0
        %2044 = vmatprep.subr.bf16.mxu0 0
        %2045 = vmatpush1.bf16.msra.mxu0 0
        %2046 = vmatprep.subr.bf16.mxu0 0
        %2047 = vmatpush1.bf16.msra.mxu0 0
        %2048 = vmatprep.subr.bf16.mxu0 0
        %2049 = vmatpush1.bf16.msra.mxu0 0
        %2050 = vmatprep.subr.bf16.mxu0 0
        %2051 = vmatpush1.bf16.msra.mxu0 0
        %2052 = vmatprep.subr.bf16.mxu0 0
        %2053 = vmatpush1.bf16.msra.mxu0 0
        %2054 = vmatprep.subr.bf16.mxu0 0
        %2055 = vmatpush1.bf16.msra.mxu0 0
        %2056 = vmatprep.subr.bf16.mxu0 0
        %2057 = vmatpush1.bf16.msra.mxu0 0
        %2058 = vmatprep.subr.bf16.mxu0 0
        %2059 = vmatpush1.bf16.msra.mxu0 0
        %2060 = vmatprep.subr.bf16.mxu0 0
        %2061 = vmatpush1.bf16.msra.mxu0 0
        %2062 = vmatprep.mubr.bf16.mxu0 0
        %2063 = vmatmul.mubr.bf16.gmra.mrb[0].mxu0 %v1980
        %v2064 = vpop.f32.mrb[0].mxu0
        %v2065 = vadd.f32 0.0, %v2064
        %v2066 = vpop.f32.mrb[0].mxu0
        %v2067 = vpop.f32.mrb[0].mxu0
        %v2068 = vadd.f32 0.0, %v2067
        %v2069 = vpop.f32.mrb[0].mxu0
        %2070 = vmatprep.mubr.bf16.mxu0 0
        %2071 = vmatmul.mubr.bf16.gmra.mrb[0].mxu0 %v1983
        %v2072 = vpop.f32.mrb[0].mxu0
        %v2073 = vadd.f32 0.0, %v2072
        %v2074 = vpop.f32.mrb[0].mxu0
        %v2075 = vpop.f32.mrb[0].mxu0
        %v2076 = vadd.f32 0.0, %v2075
        %v2077 = vpop.f32.mrb[0].mxu0
        %2078 = vmatprep.mubr.bf16.mxu0 0
        %2079 = vmatmul.mubr.bf16.gmra.mrb[0].mxu0 %v1986
        %v2080 = vpop.f32.mrb[0].mxu0
        %v2081 = vadd.f32 0.0, %v2080
        %v2082 = vpop.f32.mrb[0].mxu0
        %v2083 = vpop.f32.mrb[0].mxu0
        %v2084 = vadd.f32 0.0, %v2083
        %v2085 = vpop.f32.mrb[0].mxu0
        %2086 = vmatprep.mubr.bf16.mxu0 0
        %2087 = vmatmul.mubr.bf16.gmra.mrb[0].mxu0 %v1989
        %v2088 = vpop.f32.mrb[0].mxu0
        %v2089 = vadd.f32 0.0, %v2088
        %v2090 = vpop.f32.mrb[0].mxu0
        %v2091 = vpop.f32.mrb[0].mxu0
        %v2092 = vadd.f32 0.0, %v2091
        %v2093 = vpop.f32.mrb[0].mxu0
        %2094 = vmatprep.mubr.bf16.mxu0 0
        %2095 = vmatmul.mubr.bf16.gmra.mrb[0].mxu0 %v1992
        %v2096 = vpop.f32.mrb[0].mxu0
        %v2097 = vadd.f32 0.0, %v2096
        %v2098 = vpop.f32.mrb[0].mxu0
        %v2099 = vpop.f32.mrb[0].mxu0
        %v2100 = vadd.f32 0.0, %v2099
        %v2101 = vpop.f32.mrb[0].mxu0
        %2102 = vmatprep.mubr.bf16.mxu0 0
        %2103 = vmatmul.mubr.bf16.gmra.mrb[0].mxu0 %v1995
        %v2104 = vpop.f32.mrb[0].mxu0
        %v2105 = vadd.f32 0.0, %v2104
        %v2106 = vpop.f32.mrb[0].mxu0
        %v2107 = vpop.f32.mrb[0].mxu0
        %v2108 = vadd.f32 0.0, %v2107
        %v2109 = vpop.f32.mrb[0].mxu0
        %2110 = vmatprep.mubr.bf16.mxu0 0
        %2111 = vmatmul.mubr.bf16.gmra.mrb[0].mxu0 %v1998
        %v2112 = vpop.f32.mrb[0].mxu0
        %v2113 = vadd.f32 0.0, %v2112
        %v2114 = vpop.f32.mrb[0].mxu0
        %v2115 = vpop.f32.mrb[0].mxu0
        %v2116 = vadd.f32 0.0, %v2115
        %v2117 = vpop.f32.mrb[0].mxu0
        %2118 = vmatprep.mubr.bf16.mxu0 0
        %2119 = vmatmul.mubr.bf16.gmra.mrb[0].mxu0 %v2001
        %v2120 = vpop.f32.mrb[0].mxu0
        %v2121 = vadd.f32 0.0, %v2120
        %v2122 = vpop.f32.mrb[0].mxu0
        %v2123 = vpop.f32.mrb[0].mxu0
        %v2124 = vadd.f32 0.0, %v2123
        %v2125 = vpop.f32.mrb[0].mxu0
        %2126 = vmatprep.mubr.bf16.mxu0 0
        %2127 = vmatmul.mubr.bf16.gmra.mrb[0].mxu0 %v2004
        %v2128 = vpop.f32.mrb[0].mxu0
        %v2129 = vadd.f32 0.0, %v2128
        %v2130 = vpop.f32.mrb[0].mxu0
        %v2131 = vpop.f32.mrb[0].mxu0
        %v2132 = vadd.f32 0.0, %v2131
        %v2133 = vpop.f32.mrb[0].mxu0
        %2134 = vmatprep.mubr.bf16.mxu0 0
        %2135 = vmatmul.mubr.bf16.gmra.mrb[0].mxu0 %v2007
        %v2136 = vpop.f32.mrb[0].mxu0
        %v2137 = vadd.f32 0.0, %v2136
        %v2138 = vpop.f32.mrb[0].mxu0
        %v2139 = vpop.f32.mrb[0].mxu0
        %v2140 = vadd.f32 0.0, %v2139
        %v2141 = vpop.f32.mrb[0].mxu0
        %2142 = vmatprep.mubr.bf16.mxu0 0
        %2143 = vmatmul.mubr.bf16.gmra.mrb[0].mxu0 %v2010
        %v2144 = vpop.f32.mrb[0].mxu0
        %v2145 = vadd.f32 0.0, %v2144
        %v2146 = vpop.f32.mrb[0].mxu0
        %v2147 = vpop.f32.mrb[0].mxu0
        %v2148 = vadd.f32 0.0, %v2147
        %v2149 = vpop.f32.mrb[0].mxu0
        %2150 = vmatprep.mubr.bf16.mxu0 0
        %2151 = vmatmul.mubr.bf16.gmra.mrb[0].mxu0 %v2013
        %v2152 = vpop.f32.mrb[0].mxu0
        %v2153 = vadd.f32 0.0, %v2152
        %v2154 = vpop.f32.mrb[0].mxu0
        %v2155 = vpop.f32.mrb[0].mxu0
        %v2156 = vadd.f32 0.0, %v2155
        %v2157 = vpop.f32.mrb[0].mxu0
        %2158 = vmatprep.mubr.bf16.mxu0 0
        %2159 = vmatmul.mubr.bf16.gmra.mrb[0].mxu0 %v2016
        %v2160 = vpop.f32.mrb[0].mxu0
        %v2161 = vadd.f32 0.0, %v2160
        %v2162 = vpop.f32.mrb[0].mxu0
        %v2163 = vpop.f32.mrb[0].mxu0
        %v2164 = vadd.f32 0.0, %v2163
        %v2165 = vpop.f32.mrb[0].mxu0
        %2166 = vmatprep.mubr.bf16.mxu0 0
        %2167 = vmatmul.mubr.bf16.gmra.mrb[0].mxu0 %v2019
        %v2168 = vpop.f32.mrb[0].mxu0
        %v2169 = vadd.f32 0.0, %v2168
        %v2170 = vpop.f32.mrb[0].mxu0
        %v2171 = vpop.f32.mrb[0].mxu0
        %v2172 = vadd.f32 0.0, %v2171
        %v2173 = vpop.f32.mrb[0].mxu0
        %2174 = vmatprep.mubr.bf16.mxu0 0
        %2175 = vmatmul.mubr.bf16.gmra.mrb[0].mxu0 %v2022
        %v2176 = vpop.f32.mrb[0].mxu0
        %v2177 = vadd.f32 0.0, %v2176
        %v2178 = vpop.f32.mrb[0].mxu0
        %v2179 = vpop.f32.mrb[0].mxu0
        %v2180 = vadd.f32 0.0, %v2179
        %v2181 = vpop.f32.mrb[0].mxu0
        %2182 = vmatprep.mubr.bf16.mxu0 0
        %2183 = vmatmul.mubr.bf16.gmra.mrb[0].mxu0 %v2025
        %v2184 = vpop.f32.mrb[0].mxu0
        %v2185 = vadd.f32 0.0, %v2184
        %v2186 = vpop.f32.mrb[0].mxu0
        %v2187 = vpop.f32.mrb[0].mxu0
        %v2188 = vpop.f32.mrb[0].mxu0
        %2189 = vdwg.mxu0
        %v2190 = vadd.f32 %v1915, %v2065
        %v2191 = vadd.f32 %v1916, %v2068
        %v2192 = vadd.f32 %v1917, %v2073
        %v2193 = vadd.f32 %v1918, %v2076
        %v2194 = vadd.f32 %v1919, %v2081
        %v2195 = vadd.f32 %v1920, %v2084
        %v2196 = vadd.f32 %v1921, %v2089
        %v2197 = vadd.f32 %v1922, %v2092
        %v2198 = vadd.f32 %v1923, %v2097
        %v2199 = vadd.f32 %v1924, %v2100
        %v2200 = vadd.f32 %v1925, %v2105
        %v2201 = vadd.f32 %v1926, %v2108
        %v2202 = vadd.f32 %v1927, %v2113
        %v2203 = vadd.f32 %v1928, %v2116
        %v2204 = vadd.f32 %v1929, %v2121
        %v2205 = vadd.f32 %v1930, %v2124
        %v2206 = vadd.f32 %v1931, %v2129
        %v2207 = vadd.f32 %v1932, %v2132
        %v2208 = vadd.f32 %v1933, %v2137
        %v2209 = vadd.f32 %v1934, %v2140
        %v2210 = vadd.f32 %v1935, %v2145
        %v2211 = vadd.f32 %v1936, %v2148
        %v2212 = vadd.f32 %v1937, %v2153
        %v2213 = vadd.f32 %v1938, %v2156
        %v2214 = vadd.f32 %v1939, %v2161
        %v2215 = vadd.f32 %v1940, %v2164
        %v2216 = vadd.f32 %v1941, %v2169
        %v2217 = vadd.f32 %v1942, %v2172
        %v2218 = vadd.f32 %v1943, %v2177
        %v2219 = vadd.f32 %v1944, %v2180
        %v2220 = vadd.f32 %v1945, %v2185
        %s2221 = scalar_lea.vmem [#allocation5], 12
        %v2222 = vld [vmem:[%s2221] sm:$0x3]
        %v2226 = vunpack.c.l.b16 %v429
        %v2227 = vunpack.c.l.b16 %v430
        %v2228 = vunpack.c.l.b16 %v431
        %v2229 = vpack.c.b16 %v1330, %v496
        %v2230 = vpack.c.b16 %v1332, %v1331
        %v2231 = vpack.c.b16 %v2227, %v2226
        %v2232 = vpack.c.b16 %v2228, %v2228
        %v2234 = vsel %vm641, %v2229, 0
        %v2237 = vsel %vm641, %v2230, 0
        %v2240 = vsel %vm641, %v2231, 0
        %v2243 = vsel %vm641, %v2232, 0
        %v2246 = vsel %vm690, %v2222, 0
        %2248 = vmatprep.subr.bf16.mxu0 0
        %2249 = vmatpush1.bf16.msra.mxu0 %v2246
        %2250 = vmatprep.subr.bf16.mxu0 0
        %2251 = vmatpush1.bf16.msra.mxu0 0
        %2252 = vmatprep.subr.bf16.mxu0 0
        %2253 = vmatpush1.bf16.msra.mxu0 0
        %2254 = vmatprep.subr.bf16.mxu0 0
        %2255 = vmatpush1.bf16.msra.mxu0 0
        %2256 = vmatprep.subr.bf16.mxu0 0
        %2257 = vmatpush1.bf16.msra.mxu0 0
        %2258 = vmatprep.subr.bf16.mxu0 0
        %2259 = vmatpush1.bf16.msra.mxu0 0
        %2260 = vmatprep.subr.bf16.mxu0 0
        %2261 = vmatpush1.bf16.msra.mxu0 0
        %2262 = vmatprep.subr.bf16.mxu0 0
        %2263 = vmatpush1.bf16.msra.mxu0 0
        %2264 = vmatprep.subr.bf16.mxu0 0
        %2265 = vmatpush1.bf16.msra.mxu0 0
        %2266 = vmatprep.subr.bf16.mxu0 0
        %2267 = vmatpush1.bf16.msra.mxu0 0
        %2268 = vmatprep.subr.bf16.mxu0 0
        %2269 = vmatpush1.bf16.msra.mxu0 0
        %2270 = vmatprep.subr.bf16.mxu0 0
        %2271 = vmatpush1.bf16.msra.mxu0 0
        %2272 = vmatprep.subr.bf16.mxu0 0
        %2273 = vmatpush1.bf16.msra.mxu0 0
        %2274 = vmatprep.subr.bf16.mxu0 0
        %2275 = vmatpush1.bf16.msra.mxu0 0
        %2276 = vmatprep.subr.bf16.mxu0 0
        %2277 = vmatpush1.bf16.msra.mxu0 0
        %2278 = vmatprep.subr.bf16.mxu0 0
        %2279 = vmatpush1.bf16.msra.mxu0 0
        %2280 = vmatprep.mubr.bf16.mxu0 0
        %2281 = vmatmul.mubr.bf16.gmra.mrb[0].mxu0 %v860
        %v2282 = vpop.f32.mrb[0].mxu0
        %v2283 = vadd.f32 0.0, %v2282
        %v2284 = vpop.f32.mrb[0].mxu0
        %v2285 = vpop.f32.mrb[0].mxu0
        %v2286 = vadd.f32 0.0, %v2285
        %v2287 = vpop.f32.mrb[0].mxu0
        %2288 = vmatprep.mubr.bf16.mxu0 0
        %2289 = vmatmul.mubr.bf16.gmra.mrb[0].mxu0 %v862
        %v2290 = vpop.f32.mrb[0].mxu0
        %v2291 = vadd.f32 0.0, %v2290
        %v2292 = vpop.f32.mrb[0].mxu0
        %v2293 = vpop.f32.mrb[0].mxu0
        %v2294 = vadd.f32 0.0, %v2293
        %v2295 = vpop.f32.mrb[0].mxu0
        %2296 = vmatprep.mubr.bf16.mxu0 0
        %2297 = vmatmul.mubr.bf16.gmra.mrb[0].mxu0 %v864
        %v2298 = vpop.f32.mrb[0].mxu0
        %v2299 = vadd.f32 0.0, %v2298
        %v2300 = vpop.f32.mrb[0].mxu0
        %v2301 = vpop.f32.mrb[0].mxu0
        %v2302 = vadd.f32 0.0, %v2301
        %v2303 = vpop.f32.mrb[0].mxu0
        %2304 = vmatprep.mubr.bf16.mxu0 0
        %2305 = vmatmul.mubr.bf16.gmra.mrb[0].mxu0 %v866
        %v2306 = vpop.f32.mrb[0].mxu0
        %v2307 = vadd.f32 0.0, %v2306
        %v2308 = vpop.f32.mrb[0].mxu0
        %v2309 = vpop.f32.mrb[0].mxu0
        %v2310 = vadd.f32 0.0, %v2309
        %v2311 = vpop.f32.mrb[0].mxu0
        %2312 = vmatprep.mubr.bf16.mxu0 0
        %2313 = vmatmul.mubr.bf16.gmra.mrb[0].mxu0 %v868
        %v2314 = vpop.f32.mrb[0].mxu0
        %v2315 = vadd.f32 0.0, %v2314
        %v2316 = vpop.f32.mrb[0].mxu0
        %v2317 = vpop.f32.mrb[0].mxu0
        %v2318 = vadd.f32 0.0, %v2317
        %v2319 = vpop.f32.mrb[0].mxu0
        %2320 = vmatprep.mubr.bf16.mxu0 0
        %2321 = vmatmul.mubr.bf16.gmra.mrb[0].mxu0 %v870
        %v2322 = vpop.f32.mrb[0].mxu0
        %v2323 = vadd.f32 0.0, %v2322
        %v2324 = vpop.f32.mrb[0].mxu0
        %v2325 = vpop.f32.mrb[0].mxu0
        %v2326 = vadd.f32 0.0, %v2325
        %v2327 = vpop.f32.mrb[0].mxu0
        %2328 = vmatprep.mubr.bf16.mxu0 0
        %2329 = vmatmul.mubr.bf16.gmra.mrb[0].mxu0 %v872
        %v2330 = vpop.f32.mrb[0].mxu0
        %v2331 = vadd.f32 0.0, %v2330
        %v2332 = vpop.f32.mrb[0].mxu0
        %v2333 = vpop.f32.mrb[0].mxu0
        %v2334 = vadd.f32 0.0, %v2333
        %v2335 = vpop.f32.mrb[0].mxu0
        %2336 = vmatprep.mubr.bf16.mxu0 0
        %2337 = vmatmul.mubr.bf16.gmra.mrb[0].mxu0 %v874
        %v2338 = vpop.f32.mrb[0].mxu0
        %v2339 = vadd.f32 0.0, %v2338
        %v2340 = vpop.f32.mrb[0].mxu0
        %v2341 = vpop.f32.mrb[0].mxu0
        %v2342 = vadd.f32 0.0, %v2341
        %v2343 = vpop.f32.mrb[0].mxu0
        %2344 = vmatprep.mubr.bf16.mxu0 0
        %2345 = vmatmul.mubr.bf16.gmra.mrb[0].mxu0 %v876
        %v2346 = vpop.f32.mrb[0].mxu0
        %v2347 = vadd.f32 0.0, %v2346
        %v2348 = vpop.f32.mrb[0].mxu0
        %v2349 = vpop.f32.mrb[0].mxu0
        %v2350 = vadd.f32 0.0, %v2349
        %v2351 = vpop.f32.mrb[0].mxu0
        %2352 = vmatprep.mubr.bf16.mxu0 0
        %2353 = vmatmul.mubr.bf16.gmra.mrb[0].mxu0 %v878
        %v2354 = vpop.f32.mrb[0].mxu0
        %v2355 = vadd.f32 0.0, %v2354
        %v2356 = vpop.f32.mrb[0].mxu0
        %v2357 = vpop.f32.mrb[0].mxu0
        %v2358 = vadd.f32 0.0, %v2357
        %v2359 = vpop.f32.mrb[0].mxu0
        %2360 = vmatprep.mubr.bf16.mxu0 0
        %2361 = vmatmul.mubr.bf16.gmra.mrb[0].mxu0 %v880
        %v2362 = vpop.f32.mrb[0].mxu0
        %v2363 = vadd.f32 0.0, %v2362
        %v2364 = vpop.f32.mrb[0].mxu0
        %v2365 = vpop.f32.mrb[0].mxu0
        %v2366 = vadd.f32 0.0, %v2365
        %v2367 = vpop.f32.mrb[0].mxu0
        %2368 = vmatprep.mubr.bf16.mxu0 0
        %2369 = vmatmul.mubr.bf16.gmra.mrb[0].mxu0 %v882
        %v2370 = vpop.f32.mrb[0].mxu0
        %v2371 = vadd.f32 0.0, %v2370
        %v2372 = vpop.f32.mrb[0].mxu0
        %v2373 = vpop.f32.mrb[0].mxu0
        %v2374 = vadd.f32 0.0, %v2373
        %v2375 = vpop.f32.mrb[0].mxu0
        %2376 = vmatprep.mubr.bf16.mxu0 0
        %2377 = vmatmul.mubr.bf16.gmra.mrb[0].mxu0 %v2234
        %v2378 = vpop.f32.mrb[0].mxu0
        %v2379 = vadd.f32 0.0, %v2378
        %v2380 = vpop.f32.mrb[0].mxu0
        %v2381 = vpop.f32.mrb[0].mxu0
        %v2382 = vadd.f32 0.0, %v2381
        %v2383 = vpop.f32.mrb[0].mxu0
        %2384 = vmatprep.mubr.bf16.mxu0 0
        %2385 = vmatmul.mubr.bf16.gmra.mrb[0].mxu0 %v2237
        %v2386 = vpop.f32.mrb[0].mxu0
        %v2387 = vadd.f32 0.0, %v2386
        %v2388 = vpop.f32.mrb[0].mxu0
        %v2389 = vpop.f32.mrb[0].mxu0
        %v2390 = vadd.f32 0.0, %v2389
        %v2391 = vpop.f32.mrb[0].mxu0
        %2392 = vmatprep.mubr.bf16.mxu0 0
        %2393 = vmatmul.mubr.bf16.gmra.mrb[0].mxu0 %v2240
        %v2394 = vpop.f32.mrb[0].mxu0
        %v2395 = vadd.f32 0.0, %v2394
        %v2396 = vpop.f32.mrb[0].mxu0
        %v2397 = vpop.f32.mrb[0].mxu0
        %v2398 = vadd.f32 0.0, %v2397
        %v2399 = vpop.f32.mrb[0].mxu0
        %2400 = vmatprep.mubr.bf16.mxu0 0
        %2401 = vmatmul.mubr.bf16.gmra.mrb[0].mxu0 %v2243
        %v2402 = vpop.f32.mrb[0].mxu0
        %v2403 = vadd.f32 0.0, %v2402
        %v2404 = vpop.f32.mrb[0].mxu0
        %v2405 = vpop.f32.mrb[0].mxu0
        %v2406 = vpop.f32.mrb[0].mxu0
        %2407 = vdwg.mxu0
        %v2408 = vadd.f32 %v2190, %v2283
        %v2409 = vadd.f32 %v2191, %v2286
        %v2410 = vadd.f32 %v2192, %v2291
        %v2411 = vadd.f32 %v2193, %v2294
        %v2412 = vadd.f32 %v2194, %v2299
        %v2413 = vadd.f32 %v2195, %v2302
        %v2414 = vadd.f32 %v2196, %v2307
        %v2415 = vadd.f32 %v2197, %v2310
        %v2416 = vadd.f32 %v2198, %v2315
        %v2417 = vadd.f32 %v2199, %v2318
        %v2418 = vadd.f32 %v2200, %v2323
        %v2419 = vadd.f32 %v2201, %v2326
        %v2420 = vadd.f32 %v2202, %v2331
        %v2421 = vadd.f32 %v2203, %v2334
        %v2422 = vadd.f32 %v2204, %v2339
        %v2423 = vadd.f32 %v2205, %v2342
        %v2424 = vadd.f32 %v2206, %v2347
        %v2425 = vadd.f32 %v2207, %v2350
        %v2426 = vadd.f32 %v2208, %v2355
        %v2427 = vadd.f32 %v2209, %v2358
        %v2428 = vadd.f32 %v2210, %v2363
        %v2429 = vadd.f32 %v2211, %v2366
        %v2430 = vadd.f32 %v2212, %v2371
        %v2431 = vadd.f32 %v2213, %v2374
        %v2432 = vadd.f32 %v2214, %v2379
        %v2433 = vadd.f32 %v2215, %v2382
        %v2434 = vadd.f32 %v2216, %v2387
        %v2435 = vadd.f32 %v2217, %v2390
        %v2436 = vadd.f32 %v2218, %v2395
        %v2437 = vadd.f32 %v2219, %v2398
        %v2438 = vadd.f32 %v2220, %v2403
        %s2439 = scalar_lea.vmem [#allocation5], 14
        %v2440 = vld [vmem:[%s2439] sm:$0x3]
        %v2441 = vshll.u32 %v2229, 16
        %v2443 = vrot.slane %v2441, 1
        %v2444 = vsel %vm513, %v632, %v2443
        %v2445 = vshrl.u32 %v2229, 16
        %v2447 = vor.u32 %v2445, %v2443
        %v2448 = vshll.u32 %v2230, 16
        %v2450 = vrot.slane %v2448, 1
        %v2451 = vsel %vm513, %v2447, %v2450
        %v2452 = vshrl.u32 %v2230, 16
        %v2454 = vor.u32 %v2452, %v2450
        %v2455 = vshll.u32 %v2231, 16
        %v2457 = vrot.slane %v2455, 1
        %v2458 = vsel %vm513, %v2454, %v2457
        %v2459 = vshrl.u32 %v2231, 16
        %v2461 = vor.u32 %v2459, %v2457
        %v2462 = vshll.u32 %v2232, 16
        %v2464 = vrot.slane %v2462, 1
        %v2465 = vsel %vm513, %v2461, %v2464
        %v2466 = vshrl.u32 %v2232, 16
        %v2468 = vor.u32 %v2466, %v2464
        %v2470 = vsel %vm641, %v2444, 0
        %v2473 = vsel %vm641, %v2451, 0
        %v2476 = vsel %vm641, %v2458, 0
        %v2479 = vsel %vm641, %v2465, 0
        %v2482 = vsel %vm641, %v2468, 0
        %v2485 = vsel %vm690, %v2440, 0
        %2487 = vmatprep.subr.bf16.mxu0 0
        %2488 = vmatpush1.bf16.msra.mxu0 %v2485
        %2489 = vmatprep.subr.bf16.mxu0 0
        %2490 = vmatpush1.bf16.msra.mxu0 0
        %2491 = vmatprep.subr.bf16.mxu0 0
        %2492 = vmatpush1.bf16.msra.mxu0 0
        %2493 = vmatprep.subr.bf16.mxu0 0
        %2494 = vmatpush1.bf16.msra.mxu0 0
        %2495 = vmatprep.subr.bf16.mxu0 0
        %2496 = vmatpush1.bf16.msra.mxu0 0
        %2497 = vmatprep.subr.bf16.mxu0 0
        %2498 = vmatpush1.bf16.msra.mxu0 0
        %2499 = vmatprep.subr.bf16.mxu0 0
        %2500 = vmatpush1.bf16.msra.mxu0 0
        %2501 = vmatprep.subr.bf16.mxu0 0
        %2502 = vmatpush1.bf16.msra.mxu0 0
        %2503 = vmatprep.subr.bf16.mxu0 0
        %2504 = vmatpush1.bf16.msra.mxu0 0
        %2505 = vmatprep.subr.bf16.mxu0 0
        %2506 = vmatpush1.bf16.msra.mxu0 0
        %2507 = vmatprep.subr.bf16.mxu0 0
        %2508 = vmatpush1.bf16.msra.mxu0 0
        %2509 = vmatprep.subr.bf16.mxu0 0
        %2510 = vmatpush1.bf16.msra.mxu0 0
        %2511 = vmatprep.subr.bf16.mxu0 0
        %2512 = vmatpush1.bf16.msra.mxu0 0
        %2513 = vmatprep.subr.bf16.mxu0 0
        %2514 = vmatpush1.bf16.msra.mxu0 0
        %2515 = vmatprep.subr.bf16.mxu0 0
        %2516 = vmatpush1.bf16.msra.mxu0 0
        %2517 = vmatprep.subr.bf16.mxu0 0
        %2518 = vmatpush1.bf16.msra.mxu0 0
        %2519 = vmatprep.mubr.bf16.mxu0 0
        %2520 = vmatmul.mubr.bf16.gmra.mrb[0].mxu0 %v652
        %v2521 = vpop.f32.mrb[0].mxu0
        %v2522 = vadd.f32 0.0, %v2521
        %v2523 = vpop.f32.mrb[0].mxu0
        %v2524 = vpop.f32.mrb[0].mxu0
        %v2525 = vadd.f32 0.0, %v2524
        %v2526 = vpop.f32.mrb[0].mxu0
        %2527 = vmatprep.mubr.bf16.mxu0 0
        %2528 = vmatmul.mubr.bf16.gmra.mrb[0].mxu0 %v655
        %v2529 = vpop.f32.mrb[0].mxu0
        %v2530 = vadd.f32 0.0, %v2529
        %v2531 = vpop.f32.mrb[0].mxu0
        %v2532 = vpop.f32.mrb[0].mxu0
        %v2533 = vadd.f32 0.0, %v2532
        %v2534 = vpop.f32.mrb[0].mxu0
        %2535 = vmatprep.mubr.bf16.mxu0 0
        %2536 = vmatmul.mubr.bf16.gmra.mrb[0].mxu0 %v658
        %v2537 = vpop.f32.mrb[0].mxu0
        %v2538 = vadd.f32 0.0, %v2537
        %v2539 = vpop.f32.mrb[0].mxu0
        %v2540 = vpop.f32.mrb[0].mxu0
        %v2541 = vadd.f32 0.0, %v2540
        %v2542 = vpop.f32.mrb[0].mxu0
        %2543 = vmatprep.mubr.bf16.mxu0 0
        %2544 = vmatmul.mubr.bf16.gmra.mrb[0].mxu0 %v661
        %v2545 = vpop.f32.mrb[0].mxu0
        %v2546 = vadd.f32 0.0, %v2545
        %v2547 = vpop.f32.mrb[0].mxu0
        %v2548 = vpop.f32.mrb[0].mxu0
        %v2549 = vadd.f32 0.0, %v2548
        %v2550 = vpop.f32.mrb[0].mxu0
        %2551 = vmatprep.mubr.bf16.mxu0 0
        %2552 = vmatmul.mubr.bf16.gmra.mrb[0].mxu0 %v664
        %v2553 = vpop.f32.mrb[0].mxu0
        %v2554 = vadd.f32 0.0, %v2553
        %v2555 = vpop.f32.mrb[0].mxu0
        %v2556 = vpop.f32.mrb[0].mxu0
        %v2557 = vadd.f32 0.0, %v2556
        %v2558 = vpop.f32.mrb[0].mxu0
        %2559 = vmatprep.mubr.bf16.mxu0 0
        %2560 = vmatmul.mubr.bf16.gmra.mrb[0].mxu0 %v667
        %v2561 = vpop.f32.mrb[0].mxu0
        %v2562 = vadd.f32 0.0, %v2561
        %v2563 = vpop.f32.mrb[0].mxu0
        %v2564 = vpop.f32.mrb[0].mxu0
        %v2565 = vadd.f32 0.0, %v2564
        %v2566 = vpop.f32.mrb[0].mxu0
        %2567 = vmatprep.mubr.bf16.mxu0 0
        %2568 = vmatmul.mubr.bf16.gmra.mrb[0].mxu0 %v670
        %v2569 = vpop.f32.mrb[0].mxu0
        %v2570 = vadd.f32 0.0, %v2569
        %v2571 = vpop.f32.mrb[0].mxu0
        %v2572 = vpop.f32.mrb[0].mxu0
        %v2573 = vadd.f32 0.0, %v2572
        %v2574 = vpop.f32.mrb[0].mxu0
        %2575 = vmatprep.mubr.bf16.mxu0 0
        %2576 = vmatmul.mubr.bf16.gmra.mrb[0].mxu0 %v673
        %v2577 = vpop.f32.mrb[0].mxu0
        %v2578 = vadd.f32 0.0, %v2577
        %v2579 = vpop.f32.mrb[0].mxu0
        %v2580 = vpop.f32.mrb[0].mxu0
        %v2581 = vadd.f32 0.0, %v2580
        %v2582 = vpop.f32.mrb[0].mxu0
        %2583 = vmatprep.mubr.bf16.mxu0 0
        %2584 = vmatmul.mubr.bf16.gmra.mrb[0].mxu0 %v676
        %v2585 = vpop.f32.mrb[0].mxu0
        %v2586 = vadd.f32 0.0, %v2585
        %v2587 = vpop.f32.mrb[0].mxu0
        %v2588 = vpop.f32.mrb[0].mxu0
        %v2589 = vadd.f32 0.0, %v2588
        %v2590 = vpop.f32.mrb[0].mxu0
        %2591 = vmatprep.mubr.bf16.mxu0 0
        %2592 = vmatmul.mubr.bf16.gmra.mrb[0].mxu0 %v679
        %v2593 = vpop.f32.mrb[0].mxu0
        %v2594 = vadd.f32 0.0, %v2593
        %v2595 = vpop.f32.mrb[0].mxu0
        %v2596 = vpop.f32.mrb[0].mxu0
        %v2597 = vadd.f32 0.0, %v2596
        %v2598 = vpop.f32.mrb[0].mxu0
        %2599 = vmatprep.mubr.bf16.mxu0 0
        %2600 = vmatmul.mubr.bf16.gmra.mrb[0].mxu0 %v682
        %v2601 = vpop.f32.mrb[0].mxu0
        %v2602 = vadd.f32 0.0, %v2601
        %v2603 = vpop.f32.mrb[0].mxu0
        %v2604 = vpop.f32.mrb[0].mxu0
        %v2605 = vadd.f32 0.0, %v2604
        %v2606 = vpop.f32.mrb[0].mxu0
        %2607 = vmatprep.mubr.bf16.mxu0 0
        %2608 = vmatmul.mubr.bf16.gmra.mrb[0].mxu0 %v2470
        %v2609 = vpop.f32.mrb[0].mxu0
        %v2610 = vadd.f32 0.0, %v2609
        %v2611 = vpop.f32.mrb[0].mxu0
        %v2612 = vpop.f32.mrb[0].mxu0
        %v2613 = vadd.f32 0.0, %v2612
        %v2614 = vpop.f32.mrb[0].mxu0
        %2615 = vmatprep.mubr.bf16.mxu0 0
        %2616 = vmatmul.mubr.bf16.gmra.mrb[0].mxu0 %v2473
        %v2617 = vpop.f32.mrb[0].mxu0
        %v2618 = vadd.f32 0.0, %v2617
        %v2619 = vpop.f32.mrb[0].mxu0
        %v2620 = vpop.f32.mrb[0].mxu0
        %v2621 = vadd.f32 0.0, %v2620
        %v2622 = vpop.f32.mrb[0].mxu0
        %2623 = vmatprep.mubr.bf16.mxu0 0
        %2624 = vmatmul.mubr.bf16.gmra.mrb[0].mxu0 %v2476
        %v2625 = vpop.f32.mrb[0].mxu0
        %v2626 = vadd.f32 0.0, %v2625
        %v2627 = vpop.f32.mrb[0].mxu0
        %v2628 = vpop.f32.mrb[0].mxu0
        %v2629 = vadd.f32 0.0, %v2628
        %v2630 = vpop.f32.mrb[0].mxu0
        %2631 = vmatprep.mubr.bf16.mxu0 0
        %2632 = vmatmul.mubr.bf16.gmra.mrb[0].mxu0 %v2479
        %v2633 = vpop.f32.mrb[0].mxu0
        %v2634 = vadd.f32 0.0, %v2633
        %v2635 = vpop.f32.mrb[0].mxu0
        %v2636 = vpop.f32.mrb[0].mxu0
        %v2637 = vadd.f32 0.0, %v2636
        %v2638 = vpop.f32.mrb[0].mxu0
        %2639 = vmatprep.mubr.bf16.mxu0 0
        %2640 = vmatmul.mubr.bf16.gmra.mrb[0].mxu0 %v2482
        %v2641 = vpop.f32.mrb[0].mxu0
        %v2642 = vadd.f32 0.0, %v2641
        %v2643 = vpop.f32.mrb[0].mxu0
        %v2644 = vpop.f32.mrb[0].mxu0
        %v2645 = vpop.f32.mrb[0].mxu0
        %2646 = vdwg.mxu0
        %v2647 = vadd.f32 %v2408, %v2522
        %v2648 = vadd.f32 %v2409, %v2525
        %v2649 = vadd.f32 %v2410, %v2530
        %v2650 = vadd.f32 %v2411, %v2533
        %v2651 = vadd.f32 %v2412, %v2538
        %v2652 = vadd.f32 %v2413, %v2541
        %v2653 = vadd.f32 %v2414, %v2546
        %v2654 = vadd.f32 %v2415, %v2549
        %v2655 = vadd.f32 %v2416, %v2554
        %v2656 = vadd.f32 %v2417, %v2557
        %v2657 = vadd.f32 %v2418, %v2562
        %v2658 = vadd.f32 %v2419, %v2565
        %v2659 = vadd.f32 %v2420, %v2570
        %v2660 = vadd.f32 %v2421, %v2573
        %v2661 = vadd.f32 %v2422, %v2578
        %v2662 = vadd.f32 %v2423, %v2581
        %v2663 = vadd.f32 %v2424, %v2586
        %v2664 = vadd.f32 %v2425, %v2589
        %v2665 = vadd.f32 %v2426, %v2594
        %v2666 = vadd.f32 %v2427, %v2597
        %v2667 = vadd.f32 %v2428, %v2602
        %v2668 = vadd.f32 %v2429, %v2605
        %v2669 = vadd.f32 %v2430, %v2610
        %v2670 = vadd.f32 %v2431, %v2613
        %v2671 = vadd.f32 %v2432, %v2618
        %v2672 = vadd.f32 %v2433, %v2621
        %v2673 = vadd.f32 %v2434, %v2626
        %v2674 = vadd.f32 %v2435, %v2629
        %v2675 = vadd.f32 %v2436, %v2634
        %v2676 = vadd.f32 %v2437, %v2637
        %v2677 = vadd.f32 %v2438, %v2642
        %s2678 = scalar_lea.vmem [#allocation5], 16
        %v2679 = vld [vmem:[%s2678] sm:$0x3]
        %v2680 = vrot.slane %v2229, 1
        %v2681 = vsel %vm1051, %v1079, %v2680
        %v2682 = vrot.slane %v2230, 1
        %v2683 = vsel %vm1051, %v2680, %v2682
        %v2684 = vrot.slane %v2231, 1
        %v2685 = vsel %vm1051, %v2682, %v2684
        %v2686 = vrot.slane %v2232, 1
        %v2687 = vsel %vm1051, %v2684, %v2686
        %v2689 = vsel %vm641, %v2681, 0
        %v2692 = vsel %vm641, %v2683, 0
        %v2695 = vsel %vm641, %v2685, 0
        %v2698 = vsel %vm641, %v2687, 0
        %v2701 = vsel %vm641, %v2686, 0
        %v2704 = vsel %vm690, %v2679, 0
        %2706 = vmatprep.subr.bf16.mxu0 0
        %2707 = vmatpush1.bf16.msra.mxu0 %v2704
        %2708 = vmatprep.subr.bf16.mxu0 0
        %2709 = vmatpush1.bf16.msra.mxu0 0
        %2710 = vmatprep.subr.bf16.mxu0 0
        %2711 = vmatpush1.bf16.msra.mxu0 0
        %2712 = vmatprep.subr.bf16.mxu0 0
        %2713 = vmatpush1.bf16.msra.mxu0 0
        %2714 = vmatprep.subr.bf16.mxu0 0
        %2715 = vmatpush1.bf16.msra.mxu0 0
        %2716 = vmatprep.subr.bf16.mxu0 0
        %2717 = vmatpush1.bf16.msra.mxu0 0
        %2718 = vmatprep.subr.bf16.mxu0 0
        %2719 = vmatpush1.bf16.msra.mxu0 0
        %2720 = vmatprep.subr.bf16.mxu0 0
        %2721 = vmatpush1.bf16.msra.mxu0 0
        %2722 = vmatprep.subr.bf16.mxu0 0
        %2723 = vmatpush1.bf16.msra.mxu0 0
        %2724 = vmatprep.subr.bf16.mxu0 0
        %2725 = vmatpush1.bf16.msra.mxu0 0
        %2726 = vmatprep.subr.bf16.mxu0 0
        %2727 = vmatpush1.bf16.msra.mxu0 0
        %2728 = vmatprep.subr.bf16.mxu0 0
        %2729 = vmatpush1.bf16.msra.mxu0 0
        %2730 = vmatprep.subr.bf16.mxu0 0
        %2731 = vmatpush1.bf16.msra.mxu0 0
        %2732 = vmatprep.subr.bf16.mxu0 0
        %2733 = vmatpush1.bf16.msra.mxu0 0
        %2734 = vmatprep.subr.bf16.mxu0 0
        %2735 = vmatpush1.bf16.msra.mxu0 0
        %2736 = vmatprep.subr.bf16.mxu0 0
        %2737 = vmatpush1.bf16.msra.mxu0 0
        %2738 = vmatprep.mubr.bf16.mxu0 0
        %2739 = vmatmul.mubr.bf16.gmra.mrb[0].mxu0 %v1093
        %v2740 = vpop.f32.mrb[0].mxu0
        %v2741 = vadd.f32 0.0, %v2740
        %v2742 = vpop.f32.mrb[0].mxu0
        %v2743 = vpop.f32.mrb[0].mxu0
        %v2744 = vadd.f32 0.0, %v2743
        %v2745 = vpop.f32.mrb[0].mxu0
        %2746 = vmatprep.mubr.bf16.mxu0 0
        %2747 = vmatmul.mubr.bf16.gmra.mrb[0].mxu0 %v1096
        %v2748 = vpop.f32.mrb[0].mxu0
        %v2749 = vadd.f32 0.0, %v2748
        %v2750 = vpop.f32.mrb[0].mxu0
        %v2751 = vpop.f32.mrb[0].mxu0
        %v2752 = vadd.f32 0.0, %v2751
        %v2753 = vpop.f32.mrb[0].mxu0
        %2754 = vmatprep.mubr.bf16.mxu0 0
        %2755 = vmatmul.mubr.bf16.gmra.mrb[0].mxu0 %v1099
        %v2756 = vpop.f32.mrb[0].mxu0
        %v2757 = vadd.f32 0.0, %v2756
        %v2758 = vpop.f32.mrb[0].mxu0
        %v2759 = vpop.f32.mrb[0].mxu0
        %v2760 = vadd.f32 0.0, %v2759
        %v2761 = vpop.f32.mrb[0].mxu0
        %2762 = vmatprep.mubr.bf16.mxu0 0
        %2763 = vmatmul.mubr.bf16.gmra.mrb[0].mxu0 %v1102
        %v2764 = vpop.f32.mrb[0].mxu0
        %v2765 = vadd.f32 0.0, %v2764
        %v2766 = vpop.f32.mrb[0].mxu0
        %v2767 = vpop.f32.mrb[0].mxu0
        %v2768 = vadd.f32 0.0, %v2767
        %v2769 = vpop.f32.mrb[0].mxu0
        %2770 = vmatprep.mubr.bf16.mxu0 0
        %2771 = vmatmul.mubr.bf16.gmra.mrb[0].mxu0 %v1105
        %v2772 = vpop.f32.mrb[0].mxu0
        %v2773 = vadd.f32 0.0, %v2772
        %v2774 = vpop.f32.mrb[0].mxu0
        %v2775 = vpop.f32.mrb[0].mxu0
        %v2776 = vadd.f32 0.0, %v2775
        %v2777 = vpop.f32.mrb[0].mxu0
        %2778 = vmatprep.mubr.bf16.mxu0 0
        %2779 = vmatmul.mubr.bf16.gmra.mrb[0].mxu0 %v1108
        %v2780 = vpop.f32.mrb[0].mxu0
        %v2781 = vadd.f32 0.0, %v2780
        %v2782 = vpop.f32.mrb[0].mxu0
        %v2783 = vpop.f32.mrb[0].mxu0
        %v2784 = vadd.f32 0.0, %v2783
        %v2785 = vpop.f32.mrb[0].mxu0
        %2786 = vmatprep.mubr.bf16.mxu0 0
        %2787 = vmatmul.mubr.bf16.gmra.mrb[0].mxu0 %v1111
        %v2788 = vpop.f32.mrb[0].mxu0
        %v2789 = vadd.f32 0.0, %v2788
        %v2790 = vpop.f32.mrb[0].mxu0
        %v2791 = vpop.f32.mrb[0].mxu0
        %v2792 = vadd.f32 0.0, %v2791
        %v2793 = vpop.f32.mrb[0].mxu0
        %2794 = vmatprep.mubr.bf16.mxu0 0
        %2795 = vmatmul.mubr.bf16.gmra.mrb[0].mxu0 %v1114
        %v2796 = vpop.f32.mrb[0].mxu0
        %v2797 = vadd.f32 0.0, %v2796
        %v2798 = vpop.f32.mrb[0].mxu0
        %v2799 = vpop.f32.mrb[0].mxu0
        %v2800 = vadd.f32 0.0, %v2799
        %v2801 = vpop.f32.mrb[0].mxu0
        %2802 = vmatprep.mubr.bf16.mxu0 0
        %2803 = vmatmul.mubr.bf16.gmra.mrb[0].mxu0 %v1117
        %v2804 = vpop.f32.mrb[0].mxu0
        %v2805 = vadd.f32 0.0, %v2804
        %v2806 = vpop.f32.mrb[0].mxu0
        %v2807 = vpop.f32.mrb[0].mxu0
        %v2808 = vadd.f32 0.0, %v2807
        %v2809 = vpop.f32.mrb[0].mxu0
        %2810 = vmatprep.mubr.bf16.mxu0 0
        %2811 = vmatmul.mubr.bf16.gmra.mrb[0].mxu0 %v1120
        %v2812 = vpop.f32.mrb[0].mxu0
        %v2813 = vadd.f32 0.0, %v2812
        %v2814 = vpop.f32.mrb[0].mxu0
        %v2815 = vpop.f32.mrb[0].mxu0
        %v2816 = vadd.f32 0.0, %v2815
        %v2817 = vpop.f32.mrb[0].mxu0
        %2818 = vmatprep.mubr.bf16.mxu0 0
        %2819 = vmatmul.mubr.bf16.gmra.mrb[0].mxu0 %v1123
        %v2820 = vpop.f32.mrb[0].mxu0
        %v2821 = vadd.f32 0.0, %v2820
        %v2822 = vpop.f32.mrb[0].mxu0
        %v2823 = vpop.f32.mrb[0].mxu0
        %v2824 = vadd.f32 0.0, %v2823
        %v2825 = vpop.f32.mrb[0].mxu0
        %2826 = vmatprep.mubr.bf16.mxu0 0
        %2827 = vmatmul.mubr.bf16.gmra.mrb[0].mxu0 %v2689
        %v2828 = vpop.f32.mrb[0].mxu0
        %v2829 = vadd.f32 0.0, %v2828
        %v2830 = vpop.f32.mrb[0].mxu0
        %v2831 = vpop.f32.mrb[0].mxu0
        %v2832 = vadd.f32 0.0, %v2831
        %v2833 = vpop.f32.mrb[0].mxu0
        %2834 = vmatprep.mubr.bf16.mxu0 0
        %2835 = vmatmul.mubr.bf16.gmra.mrb[0].mxu0 %v2692
        %v2836 = vpop.f32.mrb[0].mxu0
        %v2837 = vadd.f32 0.0, %v2836
        %v2838 = vpop.f32.mrb[0].mxu0
        %v2839 = vpop.f32.mrb[0].mxu0
        %v2840 = vadd.f32 0.0, %v2839
        %v2841 = vpop.f32.mrb[0].mxu0
        %2842 = vmatprep.mubr.bf16.mxu0 0
        %2843 = vmatmul.mubr.bf16.gmra.mrb[0].mxu0 %v2695
        %v2844 = vpop.f32.mrb[0].mxu0
        %v2845 = vadd.f32 0.0, %v2844
        %v2846 = vpop.f32.mrb[0].mxu0
        %v2847 = vpop.f32.mrb[0].mxu0
        %v2848 = vadd.f32 0.0, %v2847
        %v2849 = vpop.f32.mrb[0].mxu0
        %2850 = vmatprep.mubr.bf16.mxu0 0
        %2851 = vmatmul.mubr.bf16.gmra.mrb[0].mxu0 %v2698
        %v2852 = vpop.f32.mrb[0].mxu0
        %v2853 = vadd.f32 0.0, %v2852
        %v2854 = vpop.f32.mrb[0].mxu0
        %v2855 = vpop.f32.mrb[0].mxu0
        %v2856 = vadd.f32 0.0, %v2855
        %v2857 = vpop.f32.mrb[0].mxu0
        %2858 = vmatprep.mubr.bf16.mxu0 0
        %2859 = vmatmul.mubr.bf16.gmra.mrb[0].mxu0 %v2701
        %v2860 = vpop.f32.mrb[0].mxu0
        %v2861 = vadd.f32 0.0, %v2860
        %v2862 = vpop.f32.mrb[0].mxu0
        %v2863 = vpop.f32.mrb[0].mxu0
        %v2864 = vpop.f32.mrb[0].mxu0
        %2865 = vdwg.mxu0
        %v2866 = vadd.f32 %v2647, %v2741
        %v2867 = vadd.f32 %v2648, %v2744
        %v2868 = vadd.f32 %v2649, %v2749
        %v2869 = vadd.f32 %v2650, %v2752
        %v2870 = vadd.f32 %v2651, %v2757
        %v2871 = vadd.f32 %v2652, %v2760
        %v2872 = vadd.f32 %v2653, %v2765
        %v2873 = vadd.f32 %v2654, %v2768
        %v2874 = vadd.f32 %v2655, %v2773
        %v2875 = vadd.f32 %v2656, %v2776
        %v2876 = vadd.f32 %v2657, %v2781
        %v2877 = vadd.f32 %v2658, %v2784
        %v2878 = vadd.f32 %v2659, %v2789
        %v2879 = vadd.f32 %v2660, %v2792
        %v2880 = vadd.f32 %v2661, %v2797
        %v2881 = vadd.f32 %v2662, %v2800
        %v2882 = vadd.f32 %v2663, %v2805
        %v2883 = vadd.f32 %v2664, %v2808
        %v2884 = vadd.f32 %v2665, %v2813
        %v2885 = vadd.f32 %v2666, %v2816
        %v2886 = vadd.f32 %v2667, %v2821
        %v2887 = vadd.f32 %v2668, %v2824
        %v2888 = vadd.f32 %v2669, %v2829
        %v2889 = vadd.f32 %v2670, %v2832
        %v2890 = vadd.f32 %v2671, %v2837
        %v2891 = vadd.f32 %v2672, %v2840
        %v2892 = vadd.f32 %v2673, %v2845
        %v2893 = vadd.f32 %v2674, %v2848
        %v2894 = vadd.f32 %v2675, %v2853
        %v2895 = vadd.f32 %v2676, %v2856
        %v2896 = vadd.f32 %v2677, %v2861
        %v2897 = vld [vmem:[#allocation7] sm:$0x1]
        %v2899 = vlaneseq
        %v2900 = vshrl.u32 %v2899, 7
        %v2901 = vsub.s32 0, %v2900
        %v2902 = vrot.slane %v2897, %v2901
        %v2904 = vmul.f32 %v2866, %v2902
        %v2905 = vmul.f32 %v2867, %v2902
        %v2906 = vmul.f32 %v2868, %v2902
        %v2907 = vmul.f32 %v2869, %v2902
        %v2908 = vmul.f32 %v2870, %v2902
        %v2909 = vmul.f32 %v2871, %v2902
        %v2910 = vmul.f32 %v2872, %v2902
        %v2911 = vmul.f32 %v2873, %v2902
        %v2912 = vmul.f32 %v2874, %v2902
        %v2913 = vmul.f32 %v2875, %v2902
        %v2914 = vmul.f32 %v2876, %v2902
        %v2915 = vmul.f32 %v2877, %v2902
        %v2916 = vmul.f32 %v2878, %v2902
        %v2917 = vmul.f32 %v2879, %v2902
        %v2918 = vmul.f32 %v2880, %v2902
        %v2919 = vmul.f32 %v2881, %v2902
        %v2920 = vmul.f32 %v2882, %v2902
        %v2921 = vmul.f32 %v2883, %v2902
        %v2922 = vmul.f32 %v2884, %v2902
        %v2923 = vmul.f32 %v2885, %v2902
        %v2924 = vmul.f32 %v2886, %v2902
        %v2925 = vmul.f32 %v2887, %v2902
        %v2926 = vmul.f32 %v2888, %v2902
        %v2927 = vmul.f32 %v2889, %v2902
        %v2928 = vmul.f32 %v2890, %v2902
        %v2929 = vmul.f32 %v2891, %v2902
        %v2930 = vmul.f32 %v2892, %v2902
        %v2931 = vmul.f32 %v2893, %v2902
        %v2932 = vmul.f32 %v2894, %v2902
        %v2933 = vmul.f32 %v2895, %v2902
        %v2934 = vmul.f32 %v2896, %v2902
        %v2935 = vld [vmem:[#allocation8] sm:$0x1]
        %v2937 = vlaneseq
        %v2938 = vshrl.u32 %v2937, 7
        %v2939 = vsub.s32 0, %v2938
        %v2940 = vrot.slane %v2935, %v2939
        %v2942 = vadd.f32 %v2904, %v2940
        %v2943 = vadd.f32 %v2905, %v2940
        %v2944 = vadd.f32 %v2906, %v2940
        %v2945 = vadd.f32 %v2907, %v2940
        %v2946 = vadd.f32 %v2908, %v2940
        %v2947 = vadd.f32 %v2909, %v2940
        %v2948 = vadd.f32 %v2910, %v2940
        %v2949 = vadd.f32 %v2911, %v2940
        %v2950 = vadd.f32 %v2912, %v2940
        %v2951 = vadd.f32 %v2913, %v2940
        %v2952 = vadd.f32 %v2914, %v2940
        %v2953 = vadd.f32 %v2915, %v2940
        %v2954 = vadd.f32 %v2916, %v2940
        %v2955 = vadd.f32 %v2917, %v2940
        %v2956 = vadd.f32 %v2918, %v2940
        %v2957 = vadd.f32 %v2919, %v2940
        %v2958 = vadd.f32 %v2920, %v2940
        %v2959 = vadd.f32 %v2921, %v2940
        %v2960 = vadd.f32 %v2922, %v2940
        %v2961 = vadd.f32 %v2923, %v2940
        %v2962 = vadd.f32 %v2924, %v2940
        %v2963 = vadd.f32 %v2925, %v2940
        %v2964 = vadd.f32 %v2926, %v2940
        %v2965 = vadd.f32 %v2927, %v2940
        %v2966 = vadd.f32 %v2928, %v2940
        %v2967 = vadd.f32 %v2929, %v2940
        %v2968 = vadd.f32 %v2930, %v2940
        %v2969 = vadd.f32 %v2931, %v2940
        %v2970 = vadd.f32 %v2932, %v2940
        %v2971 = vadd.f32 %v2933, %v2940
        %v2972 = vadd.f32 %v2934, %v2940
        %v2973 = vmax.f32 %v2942, 0.0
        %v2974 = vmax.f32 %v2943, 0.0
        %v2975 = vmax.f32 %v2944, 0.0
        %v2976 = vmax.f32 %v2945, 0.0
        %v2977 = vmax.f32 %v2946, 0.0
        %v2978 = vmax.f32 %v2947, 0.0
        %v2979 = vmax.f32 %v2948, 0.0
        %v2980 = vmax.f32 %v2949, 0.0
        %v2981 = vmax.f32 %v2950, 0.0
        %v2982 = vmax.f32 %v2951, 0.0
        %v2983 = vmax.f32 %v2952, 0.0
        %v2984 = vmax.f32 %v2953, 0.0
        %v2985 = vmax.f32 %v2954, 0.0
        %v2986 = vmax.f32 %v2955, 0.0
        %v2987 = vmax.f32 %v2956, 0.0
        %v2988 = vmax.f32 %v2957, 0.0
        %v2989 = vmax.f32 %v2958, 0.0
        %v2990 = vmax.f32 %v2959, 0.0
        %v2991 = vmax.f32 %v2960, 0.0
        %v2992 = vmax.f32 %v2961, 0.0
        %v2993 = vmax.f32 %v2962, 0.0
        %v2994 = vmax.f32 %v2963, 0.0
        %v2995 = vmax.f32 %v2964, 0.0
        %v2996 = vmax.f32 %v2965, 0.0
        %v2997 = vmax.f32 %v2966, 0.0
        %v2998 = vmax.f32 %v2967, 0.0
        %v2999 = vmax.f32 %v2968, 0.0
        %v3000 = vmax.f32 %v2969, 0.0
        %v3001 = vmax.f32 %v2970, 0.0
        %v3002 = vmax.f32 %v2971, 0.0
        %v3003 = vmax.f32 %v2972, 0.0
        %v3004 = vlaneseq
        %v3005 = vshrl.u32 %v3004, 7
        %v3006 = vadd.s32 %v3005, 8
        %v3007 = vadd.s32 %v3005, 16
        %v3008 = vadd.s32 %v3005, 24
        %v3009 = vadd.s32 %v3005, 32
        %v3010 = vadd.s32 %v3005, 40
        %v3011 = vadd.s32 %v3005, 48
        %v3012 = vadd.s32 %v3005, 56
        %v3013 = vadd.s32 %v3005, 64
        %v3014 = vadd.s32 %v3005, 72
        %v3015 = vadd.s32 %v3005, 80
        %v3016 = vadd.s32 %v3005, 88
        %v3017 = vadd.s32 %v3005, 96
        %v3018 = vadd.s32 %v3005, 104
        %v3019 = vadd.s32 %v3005, 112
        %v3020 = vadd.s32 %v3005, 120
        %v3021 = vadd.s32 %v3005, 128
        %v3022 = vadd.s32 %v3005, 136
        %v3023 = vadd.s32 %v3005, 144
        %v3024 = vadd.s32 %v3005, 152
        %v3025 = vadd.s32 %v3005, 160
        %v3026 = vadd.s32 %v3005, 168
        %v3027 = vadd.s32 %v3005, 176
        %v3028 = vadd.s32 %v3005, 184
        %v3029 = vadd.s32 %v3005, 192
        %v3030 = vadd.s32 %v3005, 200
        %v3031 = vadd.s32 %v3005, 208
        %v3032 = vadd.s32 %v3005, 216
        %v3033 = vadd.s32 %v3005, 224
        %v3034 = vadd.s32 %v3005, 232
        %v3035 = vadd.s32 %v3005, 240
        %vm3036 = vcmp.lt.s32.totalorder %v3005, 0
        %v3037 = vsub.s32 0, %v3005
        %v3038 = vsel %vm3036, %v3037, %v3005
        %v3039 = vmul.u32.u64.compose %v3038, 2863311531
        %v3040 = vextract.low.u32 %v3039
        %v3041 = vextract.high.u32 %v3039
        %v3042 = vshrl.u32 %v3041, 4
        %v3043 = vmul.u32 %v3042, 24
        %v3044 = vsub.s32 %v3038, %v3043
        %v3045 = vsub.s32 0, %v3044
        %v3046 = vsel %vm3036, %v3045, %v3044
        %vm3047 = vcmp.lt.s32.totalorder %v3006, 0
        %v3048 = vsub.s32 0, %v3006
        %v3049 = vsel %vm3047, %v3048, %v3006
        %v3050 = vmul.u32.u64.compose %v3049, 2863311531
        %v3051 = vextract.low.u32 %v3050
        %v3052 = vextract.high.u32 %v3050
        %v3053 = vshrl.u32 %v3052, 4
        %v3054 = vmul.u32 %v3053, 24
        %v3055 = vsub.s32 %v3049, %v3054
        %v3056 = vsub.s32 0, %v3055
        %v3057 = vsel %vm3047, %v3056, %v3055
        %vm3058 = vcmp.lt.s32.totalorder %v3007, 0
        %v3059 = vsub.s32 0, %v3007
        %v3060 = vsel %vm3058, %v3059, %v3007
        %v3061 = vmul.u32.u64.compose %v3060, 2863311531
        %v3062 = vextract.low.u32 %v3061
        %v3063 = vextract.high.u32 %v3061
        %v3064 = vshrl.u32 %v3063, 4
        %v3065 = vmul.u32 %v3064, 24
        %v3066 = vsub.s32 %v3060, %v3065
        %v3067 = vsub.s32 0, %v3066
        %v3068 = vsel %vm3058, %v3067, %v3066
        %vm3069 = vcmp.lt.s32.totalorder %v3008, 0
        %v3070 = vsub.s32 0, %v3008
        %v3071 = vsel %vm3069, %v3070, %v3008
        %v3072 = vmul.u32.u64.compose %v3071, 2863311531
        %v3073 = vextract.low.u32 %v3072
        %v3074 = vextract.high.u32 %v3072
        %v3075 = vshrl.u32 %v3074, 4
        %v3076 = vmul.u32 %v3075, 24
        %v3077 = vsub.s32 %v3071, %v3076
        %v3078 = vsub.s32 0, %v3077
        %v3079 = vsel %vm3069, %v3078, %v3077
        %vm3080 = vcmp.lt.s32.totalorder %v3009, 0
        %v3081 = vsub.s32 0, %v3009
        %v3082 = vsel %vm3080, %v3081, %v3009
        %v3083 = vmul.u32.u64.compose %v3082, 2863311531
        %v3084 = vextract.low.u32 %v3083
        %v3085 = vextract.high.u32 %v3083
        %v3086 = vshrl.u32 %v3085, 4
        %v3087 = vmul.u32 %v3086, 24
        %v3088 = vsub.s32 %v3082, %v3087
        %v3089 = vsub.s32 0, %v3088
        %v3090 = vsel %vm3080, %v3089, %v3088
        %vm3091 = vcmp.lt.s32.totalorder %v3010, 0
        %v3092 = vsub.s32 0, %v3010
        %v3093 = vsel %vm3091, %v3092, %v3010
        %v3094 = vmul.u32.u64.compose %v3093, 2863311531
        %v3095 = vextract.low.u32 %v3094
        %v3096 = vextract.high.u32 %v3094
        %v3097 = vshrl.u32 %v3096, 4
        %v3098 = vmul.u32 %v3097, 24
        %v3099 = vsub.s32 %v3093, %v3098
        %v3100 = vsub.s32 0, %v3099
        %v3101 = vsel %vm3091, %v3100, %v3099
        %vm3102 = vcmp.lt.s32.totalorder %v3011, 0
        %v3103 = vsub.s32 0, %v3011
        %v3104 = vsel %vm3102, %v3103, %v3011
        %v3105 = vmul.u32.u64.compose %v3104, 2863311531
        %v3106 = vextract.low.u32 %v3105
        %v3107 = vextract.high.u32 %v3105
        %v3108 = vshrl.u32 %v3107, 4
        %v3109 = vmul.u32 %v3108, 24
        %v3110 = vsub.s32 %v3104, %v3109
        %v3111 = vsub.s32 0, %v3110
        %v3112 = vsel %vm3102, %v3111, %v3110
        %vm3113 = vcmp.lt.s32.totalorder %v3012, 0
        %v3114 = vsub.s32 0, %v3012
        %v3115 = vsel %vm3113, %v3114, %v3012
        %v3116 = vmul.u32.u64.compose %v3115, 2863311531
        %v3117 = vextract.low.u32 %v3116
        %v3118 = vextract.high.u32 %v3116
        %v3119 = vshrl.u32 %v3118, 4
        %v3120 = vmul.u32 %v3119, 24
        %v3121 = vsub.s32 %v3115, %v3120
        %v3122 = vsub.s32 0, %v3121
        %v3123 = vsel %vm3113, %v3122, %v3121
        %vm3124 = vcmp.lt.s32.totalorder %v3013, 0
        %v3125 = vsub.s32 0, %v3013
        %v3126 = vsel %vm3124, %v3125, %v3013
        %v3127 = vmul.u32.u64.compose %v3126, 2863311531
        %v3128 = vextract.low.u32 %v3127
        %v3129 = vextract.high.u32 %v3127
        %v3130 = vshrl.u32 %v3129, 4
        %v3131 = vmul.u32 %v3130, 24
        %v3132 = vsub.s32 %v3126, %v3131
        %v3133 = vsub.s32 0, %v3132
        %v3134 = vsel %vm3124, %v3133, %v3132
        %vm3135 = vcmp.lt.s32.totalorder %v3014, 0
        %v3136 = vsub.s32 0, %v3014
        %v3137 = vsel %vm3135, %v3136, %v3014
        %v3138 = vmul.u32.u64.compose %v3137, 2863311531
        %v3139 = vextract.low.u32 %v3138
        %v3140 = vextract.high.u32 %v3138
        %v3141 = vshrl.u32 %v3140, 4
        %v3142 = vmul.u32 %v3141, 24
        %v3143 = vsub.s32 %v3137, %v3142
        %v3144 = vsub.s32 0, %v3143
        %v3145 = vsel %vm3135, %v3144, %v3143
        %vm3146 = vcmp.lt.s32.totalorder %v3015, 0
        %v3147 = vsub.s32 0, %v3015
        %v3148 = vsel %vm3146, %v3147, %v3015
        %v3149 = vmul.u32.u64.compose %v3148, 2863311531
        %v3150 = vextract.low.u32 %v3149
        %v3151 = vextract.high.u32 %v3149
        %v3152 = vshrl.u32 %v3151, 4
        %v3153 = vmul.u32 %v3152, 24
        %v3154 = vsub.s32 %v3148, %v3153
        %v3155 = vsub.s32 0, %v3154
        %v3156 = vsel %vm3146, %v3155, %v3154
        %vm3157 = vcmp.lt.s32.totalorder %v3016, 0
        %v3158 = vsub.s32 0, %v3016
        %v3159 = vsel %vm3157, %v3158, %v3016
        %v3160 = vmul.u32.u64.compose %v3159, 2863311531
        %v3161 = vextract.low.u32 %v3160
        %v3162 = vextract.high.u32 %v3160
        %v3163 = vshrl.u32 %v3162, 4
        %v3164 = vmul.u32 %v3163, 24
        %v3165 = vsub.s32 %v3159, %v3164
        %v3166 = vsub.s32 0, %v3165
        %v3167 = vsel %vm3157, %v3166, %v3165
        %vm3168 = vcmp.lt.s32.totalorder %v3017, 0
        %v3169 = vsub.s32 0, %v3017
        %v3170 = vsel %vm3168, %v3169, %v3017
        %v3171 = vmul.u32.u64.compose %v3170, 2863311531
        %v3172 = vextract.low.u32 %v3171
        %v3173 = vextract.high.u32 %v3171
        %v3174 = vshrl.u32 %v3173, 4
        %v3175 = vmul.u32 %v3174, 24
        %v3176 = vsub.s32 %v3170, %v3175
        %v3177 = vsub.s32 0, %v3176
        %v3178 = vsel %vm3168, %v3177, %v3176
        %vm3179 = vcmp.lt.s32.totalorder %v3018, 0
        %v3180 = vsub.s32 0, %v3018
        %v3181 = vsel %vm3179, %v3180, %v3018
        %v3182 = vmul.u32.u64.compose %v3181, 2863311531
        %v3183 = vextract.low.u32 %v3182
        %v3184 = vextract.high.u32 %v3182
        %v3185 = vshrl.u32 %v3184, 4
        %v3186 = vmul.u32 %v3185, 24
        %v3187 = vsub.s32 %v3181, %v3186
        %v3188 = vsub.s32 0, %v3187
        %v3189 = vsel %vm3179, %v3188, %v3187
        %vm3190 = vcmp.lt.s32.totalorder %v3019, 0
        %v3191 = vsub.s32 0, %v3019
        %v3192 = vsel %vm3190, %v3191, %v3019
        %v3193 = vmul.u32.u64.compose %v3192, 2863311531
        %v3194 = vextract.low.u32 %v3193
        %v3195 = vextract.high.u32 %v3193
        %v3196 = vshrl.u32 %v3195, 4
        %v3197 = vmul.u32 %v3196, 24
        %v3198 = vsub.s32 %v3192, %v3197
        %v3199 = vsub.s32 0, %v3198
        %v3200 = vsel %vm3190, %v3199, %v3198
        %vm3201 = vcmp.lt.s32.totalorder %v3020, 0
        %v3202 = vsub.s32 0, %v3020
        %v3203 = vsel %vm3201, %v3202, %v3020
        %v3204 = vmul.u32.u64.compose %v3203, 2863311531
        %v3205 = vextract.low.u32 %v3204
        %v3206 = vextract.high.u32 %v3204
        %v3207 = vshrl.u32 %v3206, 4
        %v3208 = vmul.u32 %v3207, 24
        %v3209 = vsub.s32 %v3203, %v3208
        %v3210 = vsub.s32 0, %v3209
        %v3211 = vsel %vm3201, %v3210, %v3209
        %vm3212 = vcmp.lt.s32.totalorder %v3021, 0
        %v3213 = vsub.s32 0, %v3021
        %v3214 = vsel %vm3212, %v3213, %v3021
        %v3215 = vmul.u32.u64.compose %v3214, 2863311531
        %v3216 = vextract.low.u32 %v3215
        %v3217 = vextract.high.u32 %v3215
        %v3218 = vshrl.u32 %v3217, 4
        %v3219 = vmul.u32 %v3218, 24
        %v3220 = vsub.s32 %v3214, %v3219
        %v3221 = vsub.s32 0, %v3220
        %v3222 = vsel %vm3212, %v3221, %v3220
        %vm3223 = vcmp.lt.s32.totalorder %v3022, 0
        %v3224 = vsub.s32 0, %v3022
        %v3225 = vsel %vm3223, %v3224, %v3022
        %v3226 = vmul.u32.u64.compose %v3225, 2863311531
        %v3227 = vextract.low.u32 %v3226
        %v3228 = vextract.high.u32 %v3226
        %v3229 = vshrl.u32 %v3228, 4
        %v3230 = vmul.u32 %v3229, 24
        %v3231 = vsub.s32 %v3225, %v3230
        %v3232 = vsub.s32 0, %v3231
        %v3233 = vsel %vm3223, %v3232, %v3231
        %vm3234 = vcmp.lt.s32.totalorder %v3023, 0
        %v3235 = vsub.s32 0, %v3023
        %v3236 = vsel %vm3234, %v3235, %v3023
        %v3237 = vmul.u32.u64.compose %v3236, 2863311531
        %v3238 = vextract.low.u32 %v3237
        %v3239 = vextract.high.u32 %v3237
        %v3240 = vshrl.u32 %v3239, 4
        %v3241 = vmul.u32 %v3240, 24
        %v3242 = vsub.s32 %v3236, %v3241
        %v3243 = vsub.s32 0, %v3242
        %v3244 = vsel %vm3234, %v3243, %v3242
        %vm3245 = vcmp.lt.s32.totalorder %v3024, 0
        %v3246 = vsub.s32 0, %v3024
        %v3247 = vsel %vm3245, %v3246, %v3024
        %v3248 = vmul.u32.u64.compose %v3247, 2863311531
        %v3249 = vextract.low.u32 %v3248
        %v3250 = vextract.high.u32 %v3248
        %v3251 = vshrl.u32 %v3250, 4
        %v3252 = vmul.u32 %v3251, 24
        %v3253 = vsub.s32 %v3247, %v3252
        %v3254 = vsub.s32 0, %v3253
        %v3255 = vsel %vm3245, %v3254, %v3253
        %vm3256 = vcmp.lt.s32.totalorder %v3025, 0
        %v3257 = vsub.s32 0, %v3025
        %v3258 = vsel %vm3256, %v3257, %v3025
        %v3259 = vmul.u32.u64.compose %v3258, 2863311531
        %v3260 = vextract.low.u32 %v3259
        %v3261 = vextract.high.u32 %v3259
        %v3262 = vshrl.u32 %v3261, 4
        %v3263 = vmul.u32 %v3262, 24
        %v3264 = vsub.s32 %v3258, %v3263
        %v3265 = vsub.s32 0, %v3264
        %v3266 = vsel %vm3256, %v3265, %v3264
        %vm3267 = vcmp.lt.s32.totalorder %v3026, 0
        %v3268 = vsub.s32 0, %v3026
        %v3269 = vsel %vm3267, %v3268, %v3026
        %v3270 = vmul.u32.u64.compose %v3269, 2863311531
        %v3271 = vextract.low.u32 %v3270
        %v3272 = vextract.high.u32 %v3270
        %v3273 = vshrl.u32 %v3272, 4
        %v3274 = vmul.u32 %v3273, 24
        %v3275 = vsub.s32 %v3269, %v3274
        %v3276 = vsub.s32 0, %v3275
        %v3277 = vsel %vm3267, %v3276, %v3275
        %vm3278 = vcmp.lt.s32.totalorder %v3027, 0
        %v3279 = vsub.s32 0, %v3027
        %v3280 = vsel %vm3278, %v3279, %v3027
        %v3281 = vmul.u32.u64.compose %v3280, 2863311531
        %v3282 = vextract.low.u32 %v3281
        %v3283 = vextract.high.u32 %v3281
        %v3284 = vshrl.u32 %v3283, 4
        %v3285 = vmul.u32 %v3284, 24
        %v3286 = vsub.s32 %v3280, %v3285
        %v3287 = vsub.s32 0, %v3286
        %v3288 = vsel %vm3278, %v3287, %v3286
        %vm3289 = vcmp.lt.s32.totalorder %v3028, 0
        %v3290 = vsub.s32 0, %v3028
        %v3291 = vsel %vm3289, %v3290, %v3028
        %v3292 = vmul.u32.u64.compose %v3291, 2863311531
        %v3293 = vextract.low.u32 %v3292
        %v3294 = vextract.high.u32 %v3292
        %v3295 = vshrl.u32 %v3294, 4
        %v3296 = vmul.u32 %v3295, 24
        %v3297 = vsub.s32 %v3291, %v3296
        %v3298 = vsub.s32 0, %v3297
        %v3299 = vsel %vm3289, %v3298, %v3297
        %vm3300 = vcmp.lt.s32.totalorder %v3029, 0
        %v3301 = vsub.s32 0, %v3029
        %v3302 = vsel %vm3300, %v3301, %v3029
        %v3303 = vmul.u32.u64.compose %v3302, 2863311531
        %v3304 = vextract.low.u32 %v3303
        %v3305 = vextract.high.u32 %v3303
        %v3306 = vshrl.u32 %v3305, 4
        %v3307 = vmul.u32 %v3306, 24
        %v3308 = vsub.s32 %v3302, %v3307
        %v3309 = vsub.s32 0, %v3308
        %v3310 = vsel %vm3300, %v3309, %v3308
        %vm3311 = vcmp.lt.s32.totalorder %v3030, 0
        %v3312 = vsub.s32 0, %v3030
        %v3313 = vsel %vm3311, %v3312, %v3030
        %v3314 = vmul.u32.u64.compose %v3313, 2863311531
        %v3315 = vextract.low.u32 %v3314
        %v3316 = vextract.high.u32 %v3314
        %v3317 = vshrl.u32 %v3316, 4
        %v3318 = vmul.u32 %v3317, 24
        %v3319 = vsub.s32 %v3313, %v3318
        %v3320 = vsub.s32 0, %v3319
        %v3321 = vsel %vm3311, %v3320, %v3319
        %vm3322 = vcmp.lt.s32.totalorder %v3031, 0
        %v3323 = vsub.s32 0, %v3031
        %v3324 = vsel %vm3322, %v3323, %v3031
        %v3325 = vmul.u32.u64.compose %v3324, 2863311531
        %v3326 = vextract.low.u32 %v3325
        %v3327 = vextract.high.u32 %v3325
        %v3328 = vshrl.u32 %v3327, 4
        %v3329 = vmul.u32 %v3328, 24
        %v3330 = vsub.s32 %v3324, %v3329
        %v3331 = vsub.s32 0, %v3330
        %v3332 = vsel %vm3322, %v3331, %v3330
        %vm3333 = vcmp.lt.s32.totalorder %v3032, 0
        %v3334 = vsub.s32 0, %v3032
        %v3335 = vsel %vm3333, %v3334, %v3032
        %v3336 = vmul.u32.u64.compose %v3335, 2863311531
        %v3337 = vextract.low.u32 %v3336
        %v3338 = vextract.high.u32 %v3336
        %v3339 = vshrl.u32 %v3338, 4
        %v3340 = vmul.u32 %v3339, 24
        %v3341 = vsub.s32 %v3335, %v3340
        %v3342 = vsub.s32 0, %v3341
        %v3343 = vsel %vm3333, %v3342, %v3341
        %vm3344 = vcmp.lt.s32.totalorder %v3033, 0
        %v3345 = vsub.s32 0, %v3033
        %v3346 = vsel %vm3344, %v3345, %v3033
        %v3347 = vmul.u32.u64.compose %v3346, 2863311531
        %v3348 = vextract.low.u32 %v3347
        %v3349 = vextract.high.u32 %v3347
        %v3350 = vshrl.u32 %v3349, 4
        %v3351 = vmul.u32 %v3350, 24
        %v3352 = vsub.s32 %v3346, %v3351
        %v3353 = vsub.s32 0, %v3352
        %v3354 = vsel %vm3344, %v3353, %v3352
        %vm3355 = vcmp.lt.s32.totalorder %v3034, 0
        %v3356 = vsub.s32 0, %v3034
        %v3357 = vsel %vm3355, %v3356, %v3034
        %v3358 = vmul.u32.u64.compose %v3357, 2863311531
        %v3359 = vextract.low.u32 %v3358
        %v3360 = vextract.high.u32 %v3358
        %v3361 = vshrl.u32 %v3360, 4
        %v3362 = vmul.u32 %v3361, 24
        %v3363 = vsub.s32 %v3357, %v3362
        %v3364 = vsub.s32 0, %v3363
        %v3365 = vsel %vm3355, %v3364, %v3363
        %vm3366 = vcmp.lt.s32.totalorder %v3035, 0
        %v3367 = vsub.s32 0, %v3035
        %v3368 = vsel %vm3366, %v3367, %v3035
        %v3369 = vmul.u32.u64.compose %v3368, 2863311531
        %v3370 = vextract.low.u32 %v3369
        %v3371 = vextract.high.u32 %v3369
        %v3372 = vshrl.u32 %v3371, 4
        %v3373 = vmul.u32 %v3372, 24
        %v3374 = vsub.s32 %v3368, %v3373
        %v3375 = vsub.s32 0, %v3374
        %v3376 = vsel %vm3366, %v3375, %v3374
        %vm3377 = vcmp.ne.s32.totalorder %v3046, 0
        %vm3378 = vcmp.ne.s32.totalorder %v3057, 0
        %vm3379 = vcmp.ne.s32.totalorder %v3068, 0
        %vm3380 = vcmp.ne.s32.totalorder %v3079, 0
        %vm3381 = vcmp.ne.s32.totalorder %v3090, 0
        %vm3382 = vcmp.ne.s32.totalorder %v3101, 0
        %vm3383 = vcmp.ne.s32.totalorder %v3112, 0
        %vm3384 = vcmp.ne.s32.totalorder %v3123, 0
        %vm3385 = vcmp.ne.s32.totalorder %v3134, 0
        %vm3386 = vcmp.ne.s32.totalorder %v3145, 0
        %vm3387 = vcmp.ne.s32.totalorder %v3156, 0
        %vm3388 = vcmp.ne.s32.totalorder %v3167, 0
        %vm3389 = vcmp.ne.s32.totalorder %v3178, 0
        %vm3390 = vcmp.ne.s32.totalorder %v3189, 0
        %vm3391 = vcmp.ne.s32.totalorder %v3200, 0
        %vm3392 = vcmp.ne.s32.totalorder %v3211, 0
        %vm3393 = vcmp.ne.s32.totalorder %v3222, 0
        %vm3394 = vcmp.ne.s32.totalorder %v3233, 0
        %vm3395 = vcmp.ne.s32.totalorder %v3244, 0
        %vm3396 = vcmp.ne.s32.totalorder %v3255, 0
        %vm3397 = vcmp.ne.s32.totalorder %v3266, 0
        %vm3398 = vcmp.ne.s32.totalorder %v3277, 0
        %vm3399 = vcmp.ne.s32.totalorder %v3288, 0
        %vm3400 = vcmp.ne.s32.totalorder %v3299, 0
        %vm3401 = vcmp.ne.s32.totalorder %v3310, 0
        %vm3402 = vcmp.ne.s32.totalorder %v3321, 0
        %vm3403 = vcmp.ne.s32.totalorder %v3332, 0
        %vm3404 = vcmp.ne.s32.totalorder %v3343, 0
        %vm3405 = vcmp.ne.s32.totalorder %v3354, 0
        %vm3406 = vcmp.ne.s32.totalorder %v3365, 0
        %vm3407 = vcmp.ne.s32.totalorder %v3376, 0
        %vm3408 = vcmp.lt.s32.totalorder %v3046, 0
        %vm3409 = vcmp.lt.s32.totalorder %v3057, 0
        %vm3410 = vcmp.lt.s32.totalorder %v3068, 0
        %vm3411 = vcmp.lt.s32.totalorder %v3079, 0
        %vm3412 = vcmp.lt.s32.totalorder %v3090, 0
        %vm3413 = vcmp.lt.s32.totalorder %v3101, 0
        %vm3414 = vcmp.lt.s32.totalorder %v3112, 0
        %vm3415 = vcmp.lt.s32.totalorder %v3123, 0
        %vm3416 = vcmp.lt.s32.totalorder %v3134, 0
        %vm3417 = vcmp.lt.s32.totalorder %v3145, 0
        %vm3418 = vcmp.lt.s32.totalorder %v3156, 0
        %vm3419 = vcmp.lt.s32.totalorder %v3167, 0
        %vm3420 = vcmp.lt.s32.totalorder %v3178, 0
        %vm3421 = vcmp.lt.s32.totalorder %v3189, 0
        %vm3422 = vcmp.lt.s32.totalorder %v3200, 0
        %vm3423 = vcmp.lt.s32.totalorder %v3211, 0
        %vm3424 = vcmp.lt.s32.totalorder %v3222, 0
        %vm3425 = vcmp.lt.s32.totalorder %v3233, 0
        %vm3426 = vcmp.lt.s32.totalorder %v3244, 0
        %vm3427 = vcmp.lt.s32.totalorder %v3255, 0
        %vm3428 = vcmp.lt.s32.totalorder %v3266, 0
        %vm3429 = vcmp.lt.s32.totalorder %v3277, 0
        %vm3430 = vcmp.lt.s32.totalorder %v3288, 0
        %vm3431 = vcmp.lt.s32.totalorder %v3299, 0
        %vm3432 = vcmp.lt.s32.totalorder %v3310, 0
        %vm3433 = vcmp.lt.s32.totalorder %v3321, 0
        %vm3434 = vcmp.lt.s32.totalorder %v3332, 0
        %vm3435 = vcmp.lt.s32.totalorder %v3343, 0
        %vm3436 = vcmp.lt.s32.totalorder %v3354, 0
        %vm3437 = vcmp.lt.s32.totalorder %v3365, 0
        %vm3438 = vcmp.lt.s32.totalorder %v3376, 0
        %vm3439 = vmand %vm3408, %vm3377
        %vm3440 = vmand %vm3409, %vm3378
        %vm3441 = vmand %vm3410, %vm3379
        %vm3442 = vmand %vm3411, %vm3380
        %vm3443 = vmand %vm3412, %vm3381
        %vm3444 = vmand %vm3413, %vm3382
        %vm3445 = vmand %vm3414, %vm3383
        %vm3446 = vmand %vm3415, %vm3384
        %vm3447 = vmand %vm3416, %vm3385
        %vm3448 = vmand %vm3417, %vm3386
        %vm3449 = vmand %vm3418, %vm3387
        %vm3450 = vmand %vm3419, %vm3388
        %vm3451 = vmand %vm3420, %vm3389
        %vm3452 = vmand %vm3421, %vm3390
        %vm3453 = vmand %vm3422, %vm3391
        %vm3454 = vmand %vm3423, %vm3392
        %vm3455 = vmand %vm3424, %vm3393
        %vm3456 = vmand %vm3425, %vm3394
        %vm3457 = vmand %vm3426, %vm3395
        %vm3458 = vmand %vm3427, %vm3396
        %vm3459 = vmand %vm3428, %vm3397
        %vm3460 = vmand %vm3429, %vm3398
        %vm3461 = vmand %vm3430, %vm3399
        %vm3462 = vmand %vm3431, %vm3400
        %vm3463 = vmand %vm3432, %vm3401
        %vm3464 = vmand %vm3433, %vm3402
        %vm3465 = vmand %vm3434, %vm3403
        %vm3466 = vmand %vm3435, %vm3404
        %vm3467 = vmand %vm3436, %vm3405
        %vm3468 = vmand %vm3437, %vm3406
        %vm3469 = vmand %vm3438, %vm3407
        %v3470 = vadd.s32 %v3046, 24
        %v3471 = vadd.s32 %v3057, 24
        %v3472 = vadd.s32 %v3068, 24
        %v3473 = vadd.s32 %v3079, 24
        %v3474 = vadd.s32 %v3090, 24
        %v3475 = vadd.s32 %v3101, 24
        %v3476 = vadd.s32 %v3112, 24
        %v3477 = vadd.s32 %v3123, 24
        %v3478 = vadd.s32 %v3134, 24
        %v3479 = vadd.s32 %v3145, 24
        %v3480 = vadd.s32 %v3156, 24
        %v3481 = vadd.s32 %v3167, 24
        %v3482 = vadd.s32 %v3178, 24
        %v3483 = vadd.s32 %v3189, 24
        %v3484 = vadd.s32 %v3200, 24
        %v3485 = vadd.s32 %v3211, 24
        %v3486 = vadd.s32 %v3222, 24
        %v3487 = vadd.s32 %v3233, 24
        %v3488 = vadd.s32 %v3244, 24
        %v3489 = vadd.s32 %v3255, 24
        %v3490 = vadd.s32 %v3266, 24
        %v3491 = vadd.s32 %v3277, 24
        %v3492 = vadd.s32 %v3288, 24
        %v3493 = vadd.s32 %v3299, 24
        %v3494 = vadd.s32 %v3310, 24
        %v3495 = vadd.s32 %v3321, 24
        %v3496 = vadd.s32 %v3332, 24
        %v3497 = vadd.s32 %v3343, 24
        %v3498 = vadd.s32 %v3354, 24
        %v3499 = vadd.s32 %v3365, 24
        %v3500 = vadd.s32 %v3376, 24
        %v3501 = vsel %vm3439, %v3470, %v3046
        %v3502 = vsel %vm3440, %v3471, %v3057
        %v3503 = vsel %vm3441, %v3472, %v3068
        %v3504 = vsel %vm3442, %v3473, %v3079
        %v3505 = vsel %vm3443, %v3474, %v3090
        %v3506 = vsel %vm3444, %v3475, %v3101
        %v3507 = vsel %vm3445, %v3476, %v3112
        %v3508 = vsel %vm3446, %v3477, %v3123
        %v3509 = vsel %vm3447, %v3478, %v3134
        %v3510 = vsel %vm3448, %v3479, %v3145
        %v3511 = vsel %vm3449, %v3480, %v3156
        %v3512 = vsel %vm3450, %v3481, %v3167
        %v3513 = vsel %vm3451, %v3482, %v3178
        %v3514 = vsel %vm3452, %v3483, %v3189
        %v3515 = vsel %vm3453, %v3484, %v3200
        %v3516 = vsel %vm3454, %v3485, %v3211
        %v3517 = vsel %vm3455, %v3486, %v3222
        %v3518 = vsel %vm3456, %v3487, %v3233
        %v3519 = vsel %vm3457, %v3488, %v3244
        %v3520 = vsel %vm3458, %v3489, %v3255
        %v3521 = vsel %vm3459, %v3490, %v3266
        %v3522 = vsel %vm3460, %v3491, %v3277
        %v3523 = vsel %vm3461, %v3492, %v3288
        %v3524 = vsel %vm3462, %v3493, %v3299
        %v3525 = vsel %vm3463, %v3494, %v3310
        %v3526 = vsel %vm3464, %v3495, %v3321
        %v3527 = vsel %vm3465, %v3496, %v3332
        %v3528 = vsel %vm3466, %v3497, %v3343
        %v3529 = vsel %vm3467, %v3498, %v3354
        %v3530 = vsel %vm3468, %v3499, %v3365
        %v3531 = vsel %vm3469, %v3500, %v3376
        %p3532 = scmp.eq.s32.totalorder %s32, 0
        %s3533 = scalar_select %p3532, 24, 0
        %p3534 = scmp.eq.s32.totalorder %s32, 1
        %s3535 = scalar_select %p3534, 216, 240
        %v3536 = vstv %s3533
        %vm3537 = vcmp.ge.s32.totalorder %v3005, %v3536
        %vm3538 = vcmp.ge.s32.totalorder %v3006, %v3536
        %vm3539 = vcmp.ge.s32.totalorder %v3007, %v3536
        %vm3540 = vcmp.ge.s32.totalorder %v3008, %v3536
        %vm3541 = vcmp.ge.s32.totalorder %v3009, %v3536
        %vm3542 = vcmp.ge.s32.totalorder %v3010, %v3536
        %vm3543 = vcmp.ge.s32.totalorder %v3011, %v3536
        %vm3544 = vcmp.ge.s32.totalorder %v3012, %v3536
        %vm3545 = vcmp.ge.s32.totalorder %v3013, %v3536
        %vm3546 = vcmp.ge.s32.totalorder %v3014, %v3536
        %vm3547 = vcmp.ge.s32.totalorder %v3015, %v3536
        %vm3548 = vcmp.ge.s32.totalorder %v3016, %v3536
        %vm3549 = vcmp.ge.s32.totalorder %v3017, %v3536
        %vm3550 = vcmp.ge.s32.totalorder %v3018, %v3536
        %vm3551 = vcmp.ge.s32.totalorder %v3019, %v3536
        %vm3552 = vcmp.ge.s32.totalorder %v3020, %v3536
        %vm3553 = vcmp.ge.s32.totalorder %v3021, %v3536
        %vm3554 = vcmp.ge.s32.totalorder %v3022, %v3536
        %vm3555 = vcmp.ge.s32.totalorder %v3023, %v3536
        %vm3556 = vcmp.ge.s32.totalorder %v3024, %v3536
        %vm3557 = vcmp.ge.s32.totalorder %v3025, %v3536
        %vm3558 = vcmp.ge.s32.totalorder %v3026, %v3536
        %vm3559 = vcmp.ge.s32.totalorder %v3027, %v3536
        %vm3560 = vcmp.ge.s32.totalorder %v3028, %v3536
        %vm3561 = vcmp.ge.s32.totalorder %v3029, %v3536
        %vm3562 = vcmp.ge.s32.totalorder %v3030, %v3536
        %vm3563 = vcmp.ge.s32.totalorder %v3031, %v3536
        %vm3564 = vcmp.ge.s32.totalorder %v3032, %v3536
        %vm3565 = vcmp.ge.s32.totalorder %v3033, %v3536
        %vm3566 = vcmp.ge.s32.totalorder %v3034, %v3536
        %vm3567 = vcmp.ge.s32.totalorder %v3035, %v3536
        %v3568 = vstv %s3535
        %vm3569 = vcmp.lt.s32.totalorder %v3005, %v3568
        %vm3570 = vcmp.lt.s32.totalorder %v3006, %v3568
        %vm3571 = vcmp.lt.s32.totalorder %v3007, %v3568
        %vm3572 = vcmp.lt.s32.totalorder %v3008, %v3568
        %vm3573 = vcmp.lt.s32.totalorder %v3009, %v3568
        %vm3574 = vcmp.lt.s32.totalorder %v3010, %v3568
        %vm3575 = vcmp.lt.s32.totalorder %v3011, %v3568
        %vm3576 = vcmp.lt.s32.totalorder %v3012, %v3568
        %vm3577 = vcmp.lt.s32.totalorder %v3013, %v3568
        %vm3578 = vcmp.lt.s32.totalorder %v3014, %v3568
        %vm3579 = vcmp.lt.s32.totalorder %v3015, %v3568
        %vm3580 = vcmp.lt.s32.totalorder %v3016, %v3568
        %vm3581 = vcmp.lt.s32.totalorder %v3017, %v3568
        %vm3582 = vcmp.lt.s32.totalorder %v3018, %v3568
        %vm3583 = vcmp.lt.s32.totalorder %v3019, %v3568
        %vm3584 = vcmp.lt.s32.totalorder %v3020, %v3568
        %vm3585 = vcmp.lt.s32.totalorder %v3021, %v3568
        %vm3586 = vcmp.lt.s32.totalorder %v3022, %v3568
        %vm3587 = vcmp.lt.s32.totalorder %v3023, %v3568
        %vm3588 = vcmp.lt.s32.totalorder %v3024, %v3568
        %vm3589 = vcmp.lt.s32.totalorder %v3025, %v3568
        %vm3590 = vcmp.lt.s32.totalorder %v3026, %v3568
        %vm3591 = vcmp.lt.s32.totalorder %v3027, %v3568
        %vm3592 = vcmp.lt.s32.totalorder %v3028, %v3568
        %vm3593 = vcmp.lt.s32.totalorder %v3029, %v3568
        %vm3594 = vcmp.lt.s32.totalorder %v3030, %v3568
        %vm3595 = vcmp.lt.s32.totalorder %v3031, %v3568
        %vm3596 = vcmp.lt.s32.totalorder %v3032, %v3568
        %vm3597 = vcmp.lt.s32.totalorder %v3033, %v3568
        %vm3598 = vcmp.lt.s32.totalorder %v3034, %v3568
        %vm3599 = vcmp.lt.s32.totalorder %v3035, %v3568
        %vm3600 = vmand %vm3537, %vm3569
        %vm3601 = vmand %vm3538, %vm3570
        %vm3602 = vmand %vm3539, %vm3571
        %vm3603 = vmand %vm3540, %vm3572
        %vm3604 = vmand %vm3541, %vm3573
        %vm3605 = vmand %vm3542, %vm3574
        %vm3606 = vmand %vm3543, %vm3575
        %vm3607 = vmand %vm3544, %vm3576
        %vm3608 = vmand %vm3545, %vm3577
        %vm3609 = vmand %vm3546, %vm3578
        %vm3610 = vmand %vm3547, %vm3579
        %vm3611 = vmand %vm3548, %vm3580
        %vm3612 = vmand %vm3549, %vm3581
        %vm3613 = vmand %vm3550, %vm3582
        %vm3614 = vmand %vm3551, %vm3583
        %vm3615 = vmand %vm3552, %vm3584
        %vm3616 = vmand %vm3553, %vm3585
        %vm3617 = vmand %vm3554, %vm3586
        %vm3618 = vmand %vm3555, %vm3587
        %vm3619 = vmand %vm3556, %vm3588
        %vm3620 = vmand %vm3557, %vm3589
        %vm3621 = vmand %vm3558, %vm3590
        %vm3622 = vmand %vm3559, %vm3591
        %vm3623 = vmand %vm3560, %vm3592
        %vm3624 = vmand %vm3561, %vm3593
        %vm3625 = vmand %vm3562, %vm3594
        %vm3626 = vmand %vm3563, %vm3595
        %vm3627 = vmand %vm3564, %vm3596
        %vm3628 = vmand %vm3565, %vm3597
        %vm3629 = vmand %vm3566, %vm3598
        %vm3630 = vmand %vm3567, %vm3599
        %vm3631 = vcmp.ge.s32.totalorder %v3501, 1
        %vm3632 = vcmp.ge.s32.totalorder %v3502, 1
        %vm3633 = vcmp.ge.s32.totalorder %v3503, 1
        %vm3634 = vcmp.ge.s32.totalorder %v3504, 1
        %vm3635 = vcmp.ge.s32.totalorder %v3505, 1
        %vm3636 = vcmp.ge.s32.totalorder %v3506, 1
        %vm3637 = vcmp.ge.s32.totalorder %v3507, 1
        %vm3638 = vcmp.ge.s32.totalorder %v3508, 1
        %vm3639 = vcmp.ge.s32.totalorder %v3509, 1
        %vm3640 = vcmp.ge.s32.totalorder %v3510, 1
        %vm3641 = vcmp.ge.s32.totalorder %v3511, 1
        %vm3642 = vcmp.ge.s32.totalorder %v3512, 1
        %vm3643 = vcmp.ge.s32.totalorder %v3513, 1
        %vm3644 = vcmp.ge.s32.totalorder %v3514, 1
        %vm3645 = vcmp.ge.s32.totalorder %v3515, 1
        %vm3646 = vcmp.ge.s32.totalorder %v3516, 1
        %vm3647 = vcmp.ge.s32.totalorder %v3517, 1
        %vm3648 = vcmp.ge.s32.totalorder %v3518, 1
        %vm3649 = vcmp.ge.s32.totalorder %v3519, 1
        %vm3650 = vcmp.ge.s32.totalorder %v3520, 1
        %vm3651 = vcmp.ge.s32.totalorder %v3521, 1
        %vm3652 = vcmp.ge.s32.totalorder %v3522, 1
        %vm3653 = vcmp.ge.s32.totalorder %v3523, 1
        %vm3654 = vcmp.ge.s32.totalorder %v3524, 1
        %vm3655 = vcmp.ge.s32.totalorder %v3525, 1
        %vm3656 = vcmp.ge.s32.totalorder %v3526, 1
        %vm3657 = vcmp.ge.s32.totalorder %v3527, 1
        %vm3658 = vcmp.ge.s32.totalorder %v3528, 1
        %vm3659 = vcmp.ge.s32.totalorder %v3529, 1
        %vm3660 = vcmp.ge.s32.totalorder %v3530, 1
        %vm3661 = vcmp.ge.s32.totalorder %v3531, 1
        %vm3662 = vmand %vm3600, %vm3631
        %vm3663 = vmand %vm3601, %vm3632
        %vm3664 = vmand %vm3602, %vm3633
        %vm3665 = vmand %vm3603, %vm3634
        %vm3666 = vmand %vm3604, %vm3635
        %vm3667 = vmand %vm3605, %vm3636
        %vm3668 = vmand %vm3606, %vm3637
        %vm3669 = vmand %vm3607, %vm3638
        %vm3670 = vmand %vm3608, %vm3639
        %vm3671 = vmand %vm3609, %vm3640
        %vm3672 = vmand %vm3610, %vm3641
        %vm3673 = vmand %vm3611, %vm3642
        %vm3674 = vmand %vm3612, %vm3643
        %vm3675 = vmand %vm3613, %vm3644
        %vm3676 = vmand %vm3614, %vm3645
        %vm3677 = vmand %vm3615, %vm3646
        %vm3678 = vmand %vm3616, %vm3647
        %vm3679 = vmand %vm3617, %vm3648
        %vm3680 = vmand %vm3618, %vm3649
        %vm3681 = vmand %vm3619, %vm3650
        %vm3682 = vmand %vm3620, %vm3651
        %vm3683 = vmand %vm3621, %vm3652
        %vm3684 = vmand %vm3622, %vm3653
        %vm3685 = vmand %vm3623, %vm3654
        %vm3686 = vmand %vm3624, %vm3655
        %vm3687 = vmand %vm3625, %vm3656
        %vm3688 = vmand %vm3626, %vm3657
        %vm3689 = vmand %vm3627, %vm3658
        %vm3690 = vmand %vm3628, %vm3659
        %vm3691 = vmand %vm3629, %vm3660
        %vm3692 = vmand %vm3630, %vm3661
        %vm3693 = vcmp.le.s32.totalorder %v3501, 16
        %vm3694 = vcmp.le.s32.totalorder %v3502, 16
        %vm3695 = vcmp.le.s32.totalorder %v3503, 16
        %vm3696 = vcmp.le.s32.totalorder %v3504, 16
        %vm3697 = vcmp.le.s32.totalorder %v3505, 16
        %vm3698 = vcmp.le.s32.totalorder %v3506, 16
        %vm3699 = vcmp.le.s32.totalorder %v3507, 16
        %vm3700 = vcmp.le.s32.totalorder %v3508, 16
        %vm3701 = vcmp.le.s32.totalorder %v3509, 16
        %vm3702 = vcmp.le.s32.totalorder %v3510, 16
        %vm3703 = vcmp.le.s32.totalorder %v3511, 16
        %vm3704 = vcmp.le.s32.totalorder %v3512, 16
        %vm3705 = vcmp.le.s32.totalorder %v3513, 16
        %vm3706 = vcmp.le.s32.totalorder %v3514, 16
        %vm3707 = vcmp.le.s32.totalorder %v3515, 16
        %vm3708 = vcmp.le.s32.totalorder %v3516, 16
        %vm3709 = vcmp.le.s32.totalorder %v3517, 16
        %vm3710 = vcmp.le.s32.totalorder %v3518, 16
        %vm3711 = vcmp.le.s32.totalorder %v3519, 16
        %vm3712 = vcmp.le.s32.totalorder %v3520, 16
        %vm3713 = vcmp.le.s32.totalorder %v3521, 16
        %vm3714 = vcmp.le.s32.totalorder %v3522, 16
        %vm3715 = vcmp.le.s32.totalorder %v3523, 16
        %vm3716 = vcmp.le.s32.totalorder %v3524, 16
        %vm3717 = vcmp.le.s32.totalorder %v3525, 16
        %vm3718 = vcmp.le.s32.totalorder %v3526, 16
        %vm3719 = vcmp.le.s32.totalorder %v3527, 16
        %vm3720 = vcmp.le.s32.totalorder %v3528, 16
        %vm3721 = vcmp.le.s32.totalorder %v3529, 16
        %vm3722 = vcmp.le.s32.totalorder %v3530, 16
        %vm3723 = vcmp.le.s32.totalorder %v3531, 16
        %vm3724 = vmand %vm3662, %vm3693
        %vm3725 = vmand %vm3663, %vm3694
        %vm3726 = vmand %vm3664, %vm3695
        %vm3727 = vmand %vm3665, %vm3696
        %vm3728 = vmand %vm3666, %vm3697
        %vm3729 = vmand %vm3667, %vm3698
        %vm3730 = vmand %vm3668, %vm3699
        %vm3731 = vmand %vm3669, %vm3700
        %vm3732 = vmand %vm3670, %vm3701
        %vm3733 = vmand %vm3671, %vm3702
        %vm3734 = vmand %vm3672, %vm3703
        %vm3735 = vmand %vm3673, %vm3704
        %vm3736 = vmand %vm3674, %vm3705
        %vm3737 = vmand %vm3675, %vm3706
        %vm3738 = vmand %vm3676, %vm3707
        %vm3739 = vmand %vm3677, %vm3708
        %vm3740 = vmand %vm3678, %vm3709
        %vm3741 = vmand %vm3679, %vm3710
        %vm3742 = vmand %vm3680, %vm3711
        %vm3743 = vmand %vm3681, %vm3712
        %vm3744 = vmand %vm3682, %vm3713
        %vm3745 = vmand %vm3683, %vm3714
        %vm3746 = vmand %vm3684, %vm3715
        %vm3747 = vmand %vm3685, %vm3716
        %vm3748 = vmand %vm3686, %vm3717
        %vm3749 = vmand %vm3687, %vm3718
        %vm3750 = vmand %vm3688, %vm3719
        %vm3751 = vmand %vm3689, %vm3720
        %vm3752 = vmand %vm3690, %vm3721
        %vm3753 = vmand %vm3691, %vm3722
        %vm3754 = vmand %vm3692, %vm3723
        %v3755 = vsel %vm3724, 1, 0
        %v3756 = vsel %vm3725, 1, 0
        %v3757 = vsel %vm3726, 1, 0
        %v3758 = vsel %vm3727, 1, 0
        %v3759 = vsel %vm3728, 1, 0
        %v3760 = vsel %vm3729, 1, 0
        %v3761 = vsel %vm3730, 1, 0
        %v3762 = vsel %vm3731, 1, 0
        %v3763 = vsel %vm3732, 1, 0
        %v3764 = vsel %vm3733, 1, 0
        %v3765 = vsel %vm3734, 1, 0
        %v3766 = vsel %vm3735, 1, 0
        %v3767 = vsel %vm3736, 1, 0
        %v3768 = vsel %vm3737, 1, 0
        %v3769 = vsel %vm3738, 1, 0
        %v3770 = vsel %vm3739, 1, 0
        %v3771 = vsel %vm3740, 1, 0
        %v3772 = vsel %vm3741, 1, 0
        %v3773 = vsel %vm3742, 1, 0
        %v3774 = vsel %vm3743, 1, 0
        %v3775 = vsel %vm3744, 1, 0
        %v3776 = vsel %vm3745, 1, 0
        %v3777 = vsel %vm3746, 1, 0
        %v3778 = vsel %vm3747, 1, 0
        %v3779 = vsel %vm3748, 1, 0
        %v3780 = vsel %vm3749, 1, 0
        %v3781 = vsel %vm3750, 1, 0
        %v3782 = vsel %vm3751, 1, 0
        %v3783 = vsel %vm3752, 1, 0
        %v3784 = vsel %vm3753, 1, 0
        %v3785 = vsel %vm3754, 1, 0
        %vm3786 = vcmp.eq.s32.totalorder %v3755, 1
        %vm3787 = vcmp.eq.s32.totalorder %v3756, 1
        %vm3788 = vcmp.eq.s32.totalorder %v3757, 1
        %vm3789 = vcmp.eq.s32.totalorder %v3758, 1
        %vm3790 = vcmp.eq.s32.totalorder %v3759, 1
        %vm3791 = vcmp.eq.s32.totalorder %v3760, 1
        %vm3792 = vcmp.eq.s32.totalorder %v3761, 1
        %vm3793 = vcmp.eq.s32.totalorder %v3762, 1
        %vm3794 = vcmp.eq.s32.totalorder %v3763, 1
        %vm3795 = vcmp.eq.s32.totalorder %v3764, 1
        %vm3796 = vcmp.eq.s32.totalorder %v3765, 1
        %vm3797 = vcmp.eq.s32.totalorder %v3766, 1
        %vm3798 = vcmp.eq.s32.totalorder %v3767, 1
        %vm3799 = vcmp.eq.s32.totalorder %v3768, 1
        %vm3800 = vcmp.eq.s32.totalorder %v3769, 1
        %vm3801 = vcmp.eq.s32.totalorder %v3770, 1
        %vm3802 = vcmp.eq.s32.totalorder %v3771, 1
        %vm3803 = vcmp.eq.s32.totalorder %v3772, 1
        %vm3804 = vcmp.eq.s32.totalorder %v3773, 1
        %vm3805 = vcmp.eq.s32.totalorder %v3774, 1
        %vm3806 = vcmp.eq.s32.totalorder %v3775, 1
        %vm3807 = vcmp.eq.s32.totalorder %v3776, 1
        %vm3808 = vcmp.eq.s32.totalorder %v3777, 1
        %vm3809 = vcmp.eq.s32.totalorder %v3778, 1
        %vm3810 = vcmp.eq.s32.totalorder %v3779, 1
        %vm3811 = vcmp.eq.s32.totalorder %v3780, 1
        %vm3812 = vcmp.eq.s32.totalorder %v3781, 1
        %vm3813 = vcmp.eq.s32.totalorder %v3782, 1
        %vm3814 = vcmp.eq.s32.totalorder %v3783, 1
        %vm3815 = vcmp.eq.s32.totalorder %v3784, 1
        %vm3816 = vcmp.eq.s32.totalorder %v3785, 1
        %v3817 = vsel %vm3786, %v2973, 0.0
        %v3818 = vsel %vm3787, %v2974, 0.0
        %v3819 = vsel %vm3788, %v2975, 0.0
        %v3820 = vsel %vm3789, %v2976, 0.0
        %v3821 = vsel %vm3790, %v2977, 0.0
        %v3822 = vsel %vm3791, %v2978, 0.0
        %v3823 = vsel %vm3792, %v2979, 0.0
        %v3824 = vsel %vm3793, %v2980, 0.0
        %v3825 = vsel %vm3794, %v2981, 0.0
        %v3826 = vsel %vm3795, %v2982, 0.0
        %v3827 = vsel %vm3796, %v2983, 0.0
        %v3828 = vsel %vm3797, %v2984, 0.0
        %v3829 = vsel %vm3798, %v2985, 0.0
        %v3830 = vsel %vm3799, %v2986, 0.0
        %v3831 = vsel %vm3800, %v2987, 0.0
        %v3832 = vsel %vm3801, %v2988, 0.0
        %v3833 = vsel %vm3802, %v2989, 0.0
        %v3834 = vsel %vm3803, %v2990, 0.0
        %v3835 = vsel %vm3804, %v2991, 0.0
        %v3836 = vsel %vm3805, %v2992, 0.0
        %v3837 = vsel %vm3806, %v2993, 0.0
        %v3838 = vsel %vm3807, %v2994, 0.0
        %v3839 = vsel %vm3808, %v2995, 0.0
        %v3840 = vsel %vm3809, %v2996, 0.0
        %v3841 = vsel %vm3810, %v2997, 0.0
        %v3842 = vsel %vm3811, %v2998, 0.0
        %v3843 = vsel %vm3812, %v2999, 0.0
        %v3844 = vsel %vm3813, %v3000, 0.0
        %v3845 = vsel %vm3814, %v3001, 0.0
        %v3846 = vsel %vm3815, %v3002, 0.0
        %v3847 = vsel %vm3816, %v3003, 0.0
        %v3848 = vpack.c.bf16 %v3818, %v3817
        %v3849 = vpack.c.bf16 %v3820, %v3819
        %v3850 = vpack.c.bf16 %v3822, %v3821
        %v3851 = vpack.c.bf16 %v3824, %v3823
        %v3852 = vpack.c.bf16 %v3826, %v3825
        %v3853 = vpack.c.bf16 %v3828, %v3827
        %v3854 = vpack.c.bf16 %v3830, %v3829
        %v3855 = vpack.c.bf16 %v3832, %v3831
        %v3856 = vpack.c.bf16 %v3834, %v3833
        %v3857 = vpack.c.bf16 %v3836, %v3835
        %v3858 = vpack.c.bf16 %v3838, %v3837
        %v3859 = vpack.c.bf16 %v3840, %v3839
        %v3860 = vpack.c.bf16 %v3842, %v3841
        %v3861 = vpack.c.bf16 %v3844, %v3843
        %v3862 = vpack.c.bf16 %v3846, %v3845
        %v3863 = vpack.c.bf16 %v3847, %v3847
        %v3864 = vld [vmem:[#allocation10] sm:$0xf]
        %v3865 = vld [vmem:[#allocation10 + $0x4] sm:$0xf]
        %v3866 = vld [vmem:[#allocation10 + $0x8] sm:$0xf]
        %v3867 = vld [vmem:[#allocation10 + $0xc] sm:$0xf]
        %v3868 = vld [vmem:[#allocation10 + $0x10] sm:$0xf]
        %v3869 = vld [vmem:[#allocation10 + $0x14] sm:$0xf]
        %v3870 = vld [vmem:[#allocation10 + $0x18] sm:$0xf]
        %v3871 = vld [vmem:[#allocation10 + $0x1c] sm:$0xf]
        %v3872 = vld [vmem:[#allocation10 + $0x20] sm:$0xf]
        %v3873 = vld [vmem:[#allocation10 + $0x24] sm:$0xf]
        %v3874 = vld [vmem:[#allocation10 + $0x28] sm:$0xf]
        %v3875 = vld [vmem:[#allocation10 + $0x2c] sm:$0xf]
        %v3876 = vld [vmem:[#allocation10 + $0x30] sm:$0xf]
        %v3877 = vld [vmem:[#allocation10 + $0x34] sm:$0xf]
        %v3878 = vld [vmem:[#allocation10 + $0x38] sm:$0xf]
        %v3879 = vld [vmem:[#allocation10 + $0x3c] sm:$0xf]
        %s3880 = scalar_lea.vmem [#allocation10], 64
        %v3881 = vld [vmem:[%s3880] sm:$0xf]
        %v3882 = vld [vmem:[%s3880 + $0x4] sm:$0xf]
        %v3883 = vld [vmem:[%s3880 + $0x8] sm:$0xf]
        %v3884 = vld [vmem:[%s3880 + $0xc] sm:$0xf]
        %v3885 = vld [vmem:[%s3880 + $0x10] sm:$0xf]
        %v3886 = vld [vmem:[%s3880 + $0x14] sm:$0xf]
        %v3887 = vld [vmem:[%s3880 + $0x18] sm:$0xf]
        %v3888 = vld [vmem:[%s3880 + $0x1c] sm:$0xf]
        %v3889 = vld [vmem:[%s3880 + $0x20] sm:$0xf]
        %v3890 = vld [vmem:[%s3880 + $0x24] sm:$0xf]
        %v3891 = vld [vmem:[%s3880 + $0x28] sm:$0xf]
        %v3892 = vld [vmem:[%s3880 + $0x2c] sm:$0xf]
        %v3893 = vld [vmem:[%s3880 + $0x30] sm:$0xf]
        %v3894 = vld [vmem:[%s3880 + $0x34] sm:$0xf]
        %v3895 = vld [vmem:[%s3880 + $0x38] sm:$0xf]
        %v3896 = vld [vmem:[%s3880 + $0x3c] sm:$0xf]
        %v3898 = vshrl.u32 %v3848, 16
        %v3900 = vshll.u32 %v3848, 16
        %v3902 = vrot.slane %v3900, 1
        %v3903 = vor.u32 %v3898, %v3902
        %v3905 = vshll.u32 %v3849, 16
        %v3907 = vrot.slane %v3905, 1
        %v3908 = vsel %vm513, %v3903, %v3907
        %v3909 = vshrl.u32 %v3849, 16
        %v3911 = vor.u32 %v3909, %v3907
        %v3913 = vshll.u32 %v3850, 16
        %v3915 = vrot.slane %v3913, 1
        %v3916 = vsel %vm513, %v3911, %v3915
        %v3917 = vshrl.u32 %v3850, 16
        %v3919 = vor.u32 %v3917, %v3915
        %v3921 = vshll.u32 %v3851, 16
        %v3923 = vrot.slane %v3921, 1
        %v3924 = vsel %vm513, %v3919, %v3923
        %v3925 = vshrl.u32 %v3851, 16
        %v3927 = vor.u32 %v3925, %v3923
        %v3929 = vshll.u32 %v3852, 16
        %v3931 = vrot.slane %v3929, 1
        %v3932 = vsel %vm513, %v3927, %v3931
        %v3933 = vshrl.u32 %v3852, 16
        %v3935 = vor.u32 %v3933, %v3931
        %v3937 = vshll.u32 %v3853, 16
        %v3939 = vrot.slane %v3937, 1
        %v3940 = vsel %vm513, %v3935, %v3939
        %v3941 = vshrl.u32 %v3853, 16
        %v3943 = vor.u32 %v3941, %v3939
        %v3945 = vshll.u32 %v3854, 16
        %v3947 = vrot.slane %v3945, 1
        %v3948 = vsel %vm513, %v3943, %v3947
        %v3949 = vshrl.u32 %v3854, 16
        %v3951 = vor.u32 %v3949, %v3947
        %v3953 = vshll.u32 %v3855, 16
        %v3955 = vrot.slane %v3953, 1
        %v3956 = vsel %vm513, %v3951, %v3955
        %v3957 = vshrl.u32 %v3855, 16
        %v3959 = vor.u32 %v3957, %v3955
        %v3961 = vshll.u32 %v3856, 16
        %v3963 = vrot.slane %v3961, 1
        %v3964 = vsel %vm513, %v3959, %v3963
        %v3965 = vshrl.u32 %v3856, 16
        %v3967 = vor.u32 %v3965, %v3963
        %v3969 = vshll.u32 %v3857, 16
        %v3971 = vrot.slane %v3969, 1
        %v3972 = vsel %vm513, %v3967, %v3971
        %v3973 = vshrl.u32 %v3857, 16
        %v3975 = vor.u32 %v3973, %v3971
        %v3977 = vshll.u32 %v3858, 16
        %v3979 = vrot.slane %v3977, 1
        %v3980 = vsel %vm513, %v3975, %v3979
        %v3981 = vshrl.u32 %v3858, 16
        %v3983 = vor.u32 %v3981, %v3979
        %v3985 = vshll.u32 %v3859, 16
        %v3987 = vrot.slane %v3985, 1
        %v3988 = vsel %vm513, %v3983, %v3987
        %v3989 = vshrl.u32 %v3859, 16
        %v3991 = vor.u32 %v3989, %v3987
        %v3993 = vshll.u32 %v3860, 16
        %v3995 = vrot.slane %v3993, 1
        %v3996 = vsel %vm513, %v3991, %v3995
        %v4025 = vunpack.c.l.b16 %v3881
        %v4026 = vunpack.c.l.b16 %v3882
        %v4027 = vunpack.c.l.b16 %v3883
        %v4028 = vunpack.c.l.b16 %v3884
        %v4029 = vunpack.c.l.b16 %v3885
        %v4030 = vunpack.c.l.b16 %v3886
        %v4031 = vunpack.c.l.b16 %v3887
        %v4032 = vunpack.c.l.b16 %v3888
        %v4033 = vunpack.c.l.b16 %v3889
        %v4034 = vunpack.c.l.b16 %v3890
        %v4035 = vunpack.c.l.b16 %v3891
        %v4036 = vunpack.c.l.b16 %v3892
        %v4037 = vunpack.c.l.b16 %v3893
        %v4038 = vunpack.c.l.b16 %v3894
        %v4039 = vunpack.c.l.b16 %v3895
        %v4040 = vunpack.c.l.b16 %v3896
        %v4041 = vpack.c.b16 %v4026, %v4025
        %v4042 = vpack.c.b16 %v4028, %v4027
        %v4043 = vpack.c.b16 %v4030, %v4029
        %v4044 = vpack.c.b16 %v4032, %v4031
        %v4045 = vpack.c.b16 %v4034, %v4033
        %v4046 = vpack.c.b16 %v4036, %v4035
        %v4047 = vpack.c.b16 %v4038, %v4037
        %v4048 = vpack.c.b16 %v4040, %v4039
        %4057 = vmatprep.subr.bf16.mxu0 0
        %4058 = vmatpush1.bf16.msra.mxu0 %v4041
        %4059 = vmatprep.subr.bf16.mxu0 0
        %4060 = vmatpush1.bf16.msra.mxu0 %v4042
        %4061 = vmatprep.subr.bf16.mxu0 0
        %4062 = vmatpush1.bf16.msra.mxu0 %v4043
        %4063 = vmatprep.subr.bf16.mxu0 0
        %4064 = vmatpush1.bf16.msra.mxu0 %v4044
        %4065 = vmatprep.subr.bf16.mxu0 0
        %4066 = vmatpush1.bf16.msra.mxu0 %v4045
        %4067 = vmatprep.subr.bf16.mxu0 0
        %4068 = vmatpush1.bf16.msra.mxu0 %v4046
        %4069 = vmatprep.subr.bf16.mxu0 0
        %4070 = vmatpush1.bf16.msra.mxu0 %v4047
        %4071 = vmatprep.subr.bf16.mxu0 0
        %4072 = vmatpush1.bf16.msra.mxu0 %v4048
        %4073 = vmatprep.subr.bf16.mxu0 0
        %4074 = vmatpush1.bf16.msra.mxu0 0
        %4075 = vmatprep.subr.bf16.mxu0 0
        %4076 = vmatpush1.bf16.msra.mxu0 0
        %4077 = vmatprep.subr.bf16.mxu0 0
        %4078 = vmatpush1.bf16.msra.mxu0 0
        %4079 = vmatprep.subr.bf16.mxu0 0
        %4080 = vmatpush1.bf16.msra.mxu0 0
        %4081 = vmatprep.subr.bf16.mxu0 0
        %4082 = vmatpush1.bf16.msra.mxu0 0
        %4083 = vmatprep.subr.bf16.mxu0 0
        %4084 = vmatpush1.bf16.msra.mxu0 0
        %4085 = vmatprep.subr.bf16.mxu0 0
        %4086 = vmatpush1.bf16.msra.mxu0 0
        %4087 = vmatprep.subr.bf16.mxu0 0
        %4088 = vmatpush1.bf16.msra.mxu0 0
        %4089 = vmatprep.mubr.bf16.mxu0 0
        %4090 = vmatmul.mubr.bf16.gmra.mrb[0].mxu0 %v3908
        %v4091 = vpop.f32.mrb[0].mxu0
        %v4092 = vadd.f32 0.0, %v4091
        %v4093 = vpop.f32.mrb[0].mxu0
        %v4094 = vpop.f32.mrb[0].mxu0
        %v4095 = vadd.f32 0.0, %v4094
        %v4096 = vpop.f32.mrb[0].mxu0
        %4097 = vmatprep.mubr.bf16.mxu0 0
        %4098 = vmatmul.mubr.bf16.gmra.mrb[0].mxu0 %v3916
        %v4099 = vpop.f32.mrb[0].mxu0
        %v4100 = vadd.f32 0.0, %v4099
        %v4101 = vpop.f32.mrb[0].mxu0
        %v4102 = vpop.f32.mrb[0].mxu0
        %v4103 = vadd.f32 0.0, %v4102
        %v4104 = vpop.f32.mrb[0].mxu0
        %4105 = vmatprep.mubr.bf16.mxu0 0
        %4106 = vmatmul.mubr.bf16.gmra.mrb[0].mxu0 %v3924
        %v4107 = vpop.f32.mrb[0].mxu0
        %v4108 = vadd.f32 0.0, %v4107
        %v4109 = vpop.f32.mrb[0].mxu0
        %v4110 = vpop.f32.mrb[0].mxu0
        %v4111 = vadd.f32 0.0, %v4110
        %v4112 = vpop.f32.mrb[0].mxu0
        %4113 = vmatprep.mubr.bf16.mxu0 0
        %4114 = vmatmul.mubr.bf16.gmra.mrb[0].mxu0 %v3932
        %v4115 = vpop.f32.mrb[0].mxu0
        %v4116 = vadd.f32 0.0, %v4115
        %v4117 = vpop.f32.mrb[0].mxu0
        %v4118 = vpop.f32.mrb[0].mxu0
        %v4119 = vadd.f32 0.0, %v4118
        %v4120 = vpop.f32.mrb[0].mxu0
        %4121 = vmatprep.mubr.bf16.mxu0 0
        %4122 = vmatmul.mubr.bf16.gmra.mrb[0].mxu0 %v3940
        %v4123 = vpop.f32.mrb[0].mxu0
        %v4124 = vadd.f32 0.0, %v4123
        %v4125 = vpop.f32.mrb[0].mxu0
        %v4126 = vpop.f32.mrb[0].mxu0
        %v4127 = vadd.f32 0.0, %v4126
        %v4128 = vpop.f32.mrb[0].mxu0
        %4129 = vmatprep.mubr.bf16.mxu0 0
        %4130 = vmatmul.mubr.bf16.gmra.mrb[0].mxu0 %v3948
        %v4131 = vpop.f32.mrb[0].mxu0
        %v4132 = vadd.f32 0.0, %v4131
        %v4133 = vpop.f32.mrb[0].mxu0
        %v4134 = vpop.f32.mrb[0].mxu0
        %v4135 = vadd.f32 0.0, %v4134
        %v4136 = vpop.f32.mrb[0].mxu0
        %4137 = vmatprep.mubr.bf16.mxu0 0
        %4138 = vmatmul.mubr.bf16.gmra.mrb[0].mxu0 %v3956
        %v4139 = vpop.f32.mrb[0].mxu0
        %v4140 = vadd.f32 0.0, %v4139
        %v4141 = vpop.f32.mrb[0].mxu0
        %v4142 = vpop.f32.mrb[0].mxu0
        %v4143 = vadd.f32 0.0, %v4142
        %v4144 = vpop.f32.mrb[0].mxu0
        %4145 = vmatprep.mubr.bf16.mxu0 0
        %4146 = vmatmul.mubr.bf16.gmra.mrb[0].mxu0 %v3964
        %v4147 = vpop.f32.mrb[0].mxu0
        %v4148 = vadd.f32 0.0, %v4147
        %v4149 = vpop.f32.mrb[0].mxu0
        %v4150 = vpop.f32.mrb[0].mxu0
        %v4151 = vadd.f32 0.0, %v4150
        %v4152 = vpop.f32.mrb[0].mxu0
        %4153 = vmatprep.mubr.bf16.mxu0 0
        %4154 = vmatmul.mubr.bf16.gmra.mrb[0].mxu0 %v3972
        %v4155 = vpop.f32.mrb[0].mxu0
        %v4156 = vadd.f32 0.0, %v4155
        %v4157 = vpop.f32.mrb[0].mxu0
        %v4158 = vpop.f32.mrb[0].mxu0
        %v4159 = vadd.f32 0.0, %v4158
        %v4160 = vpop.f32.mrb[0].mxu0
        %4161 = vmatprep.mubr.bf16.mxu0 0
        %4162 = vmatmul.mubr.bf16.gmra.mrb[0].mxu0 %v3980
        %v4163 = vpop.f32.mrb[0].mxu0
        %v4164 = vadd.f32 0.0, %v4163
        %v4165 = vpop.f32.mrb[0].mxu0
        %v4166 = vpop.f32.mrb[0].mxu0
        %v4167 = vadd.f32 0.0, %v4166
        %v4168 = vpop.f32.mrb[0].mxu0
        %4169 = vmatprep.mubr.bf16.mxu0 0
        %4170 = vmatmul.mubr.bf16.gmra.mrb[0].mxu0 %v3988
        %v4171 = vpop.f32.mrb[0].mxu0
        %v4172 = vadd.f32 0.0, %v4171
        %v4173 = vpop.f32.mrb[0].mxu0
        %v4174 = vpop.f32.mrb[0].mxu0
        %v4175 = vadd.f32 0.0, %v4174
        %v4176 = vpop.f32.mrb[0].mxu0
        %4177 = vmatprep.mubr.bf16.mxu0 0
        %4178 = vmatmul.mubr.bf16.gmra.mrb[0].mxu0 %v3996
        %v4179 = vpop.f32.mrb[0].mxu0
        %v4180 = vadd.f32 0.0, %v4179
        %v4181 = vpop.f32.mrb[0].mxu0
        %v4182 = vpop.f32.mrb[0].mxu0
        %v4183 = vadd.f32 0.0, %v4182
        %v4184 = vpop.f32.mrb[0].mxu0
        %4185 = vdwg.mxu0
        %v4202 = vunpack.c.l.b16 %v3864
        %v4203 = vunpack.c.l.b16 %v3865
        %v4204 = vunpack.c.l.b16 %v3866
        %v4205 = vunpack.c.l.b16 %v3867
        %v4206 = vunpack.c.l.b16 %v3868
        %v4207 = vunpack.c.l.b16 %v3869
        %v4208 = vunpack.c.l.b16 %v3870
        %v4209 = vunpack.c.l.b16 %v3871
        %v4210 = vunpack.c.l.b16 %v3872
        %v4211 = vunpack.c.l.b16 %v3873
        %v4212 = vunpack.c.l.b16 %v3874
        %v4213 = vunpack.c.l.b16 %v3875
        %v4214 = vunpack.c.l.b16 %v3876
        %v4215 = vunpack.c.l.b16 %v3877
        %v4216 = vunpack.c.l.b16 %v3878
        %v4217 = vunpack.c.l.b16 %v3879
        %v4218 = vpack.c.b16 %v4203, %v4202
        %v4219 = vpack.c.b16 %v4205, %v4204
        %v4220 = vpack.c.b16 %v4207, %v4206
        %v4221 = vpack.c.b16 %v4209, %v4208
        %v4222 = vpack.c.b16 %v4211, %v4210
        %v4223 = vpack.c.b16 %v4213, %v4212
        %v4224 = vpack.c.b16 %v4215, %v4214
        %v4225 = vpack.c.b16 %v4217, %v4216
        %4234 = vmatprep.subr.bf16.mxu0 0
        %4235 = vmatpush1.bf16.msra.mxu0 %v4218
        %4236 = vmatprep.subr.bf16.mxu0 0
        %4237 = vmatpush1.bf16.msra.mxu0 %v4219
        %4238 = vmatprep.subr.bf16.mxu0 0
        %4239 = vmatpush1.bf16.msra.mxu0 %v4220
        %4240 = vmatprep.subr.bf16.mxu0 0
        %4241 = vmatpush1.bf16.msra.mxu0 %v4221
        %4242 = vmatprep.subr.bf16.mxu0 0
        %4243 = vmatpush1.bf16.msra.mxu0 %v4222
        %4244 = vmatprep.subr.bf16.mxu0 0
        %4245 = vmatpush1.bf16.msra.mxu0 %v4223
        %4246 = vmatprep.subr.bf16.mxu0 0
        %4247 = vmatpush1.bf16.msra.mxu0 %v4224
        %4248 = vmatprep.subr.bf16.mxu0 0
        %4249 = vmatpush1.bf16.msra.mxu0 %v4225
        %4250 = vmatprep.subr.bf16.mxu0 0
        %4251 = vmatpush1.bf16.msra.mxu0 0
        %4252 = vmatprep.subr.bf16.mxu0 0
        %4253 = vmatpush1.bf16.msra.mxu0 0
        %4254 = vmatprep.subr.bf16.mxu0 0
        %4255 = vmatpush1.bf16.msra.mxu0 0
        %4256 = vmatprep.subr.bf16.mxu0 0
        %4257 = vmatpush1.bf16.msra.mxu0 0
        %4258 = vmatprep.subr.bf16.mxu0 0
        %4259 = vmatpush1.bf16.msra.mxu0 0
        %4260 = vmatprep.subr.bf16.mxu0 0
        %4261 = vmatpush1.bf16.msra.mxu0 0
        %4262 = vmatprep.subr.bf16.mxu0 0
        %4263 = vmatpush1.bf16.msra.mxu0 0
        %4264 = vmatprep.subr.bf16.mxu0 0
        %4265 = vmatpush1.bf16.msra.mxu0 0
        %4266 = vmatprep.mubr.bf16.mxu0 0
        %4267 = vmatmul.mubr.bf16.gmra.mrb[0].mxu0 %v3848
        %v4268 = vpop.f32.mrb[0].mxu0
        %v4269 = vadd.f32 %v4092, %v4268
        %v4270 = vpop.f32.mrb[0].mxu0
        %v4271 = vpop.f32.mrb[0].mxu0
        %v4272 = vadd.f32 %v4095, %v4271
        %v4273 = vpop.f32.mrb[0].mxu0
        %4274 = vmatprep.mubr.bf16.mxu0 0
        %4275 = vmatmul.mubr.bf16.gmra.mrb[0].mxu0 %v3849
        %v4276 = vpop.f32.mrb[0].mxu0
        %v4277 = vadd.f32 %v4100, %v4276
        %v4278 = vpop.f32.mrb[0].mxu0
        %v4279 = vpop.f32.mrb[0].mxu0
        %v4280 = vadd.f32 %v4103, %v4279
        %v4281 = vpop.f32.mrb[0].mxu0
        %4282 = vmatprep.mubr.bf16.mxu0 0
        %4283 = vmatmul.mubr.bf16.gmra.mrb[0].mxu0 %v3850
        %v4284 = vpop.f32.mrb[0].mxu0
        %v4285 = vadd.f32 %v4108, %v4284
        %v4286 = vpop.f32.mrb[0].mxu0
        %v4287 = vpop.f32.mrb[0].mxu0
        %v4288 = vadd.f32 %v4111, %v4287
        %v4289 = vpop.f32.mrb[0].mxu0
        %4290 = vmatprep.mubr.bf16.mxu0 0
        %4291 = vmatmul.mubr.bf16.gmra.mrb[0].mxu0 %v3851
        %v4292 = vpop.f32.mrb[0].mxu0
        %v4293 = vadd.f32 %v4116, %v4292
        %v4294 = vpop.f32.mrb[0].mxu0
        %v4295 = vpop.f32.mrb[0].mxu0
        %v4296 = vadd.f32 %v4119, %v4295
        %v4297 = vpop.f32.mrb[0].mxu0
        %4298 = vmatprep.mubr.bf16.mxu0 0
        %4299 = vmatmul.mubr.bf16.gmra.mrb[0].mxu0 %v3852
        %v4300 = vpop.f32.mrb[0].mxu0
        %v4301 = vadd.f32 %v4124, %v4300
        %v4302 = vpop.f32.mrb[0].mxu0
        %v4303 = vpop.f32.mrb[0].mxu0
        %v4304 = vadd.f32 %v4127, %v4303
        %v4305 = vpop.f32.mrb[0].mxu0
        %4306 = vmatprep.mubr.bf16.mxu0 0
        %4307 = vmatmul.mubr.bf16.gmra.mrb[0].mxu0 %v3853
        %v4308 = vpop.f32.mrb[0].mxu0
        %v4309 = vadd.f32 %v4132, %v4308
        %v4310 = vpop.f32.mrb[0].mxu0
        %v4311 = vpop.f32.mrb[0].mxu0
        %v4312 = vadd.f32 %v4135, %v4311
        %v4313 = vpop.f32.mrb[0].mxu0
        %4314 = vmatprep.mubr.bf16.mxu0 0
        %4315 = vmatmul.mubr.bf16.gmra.mrb[0].mxu0 %v3854
        %v4316 = vpop.f32.mrb[0].mxu0
        %v4317 = vadd.f32 %v4140, %v4316
        %v4318 = vpop.f32.mrb[0].mxu0
        %v4319 = vpop.f32.mrb[0].mxu0
        %v4320 = vadd.f32 %v4143, %v4319
        %v4321 = vpop.f32.mrb[0].mxu0
        %4322 = vmatprep.mubr.bf16.mxu0 0
        %4323 = vmatmul.mubr.bf16.gmra.mrb[0].mxu0 %v3855
        %v4324 = vpop.f32.mrb[0].mxu0
        %v4325 = vadd.f32 %v4148, %v4324
        %v4326 = vpop.f32.mrb[0].mxu0
        %v4327 = vpop.f32.mrb[0].mxu0
        %v4328 = vadd.f32 %v4151, %v4327
        %v4329 = vpop.f32.mrb[0].mxu0
        %4330 = vmatprep.mubr.bf16.mxu0 0
        %4331 = vmatmul.mubr.bf16.gmra.mrb[0].mxu0 %v3856
        %v4332 = vpop.f32.mrb[0].mxu0
        %v4333 = vadd.f32 %v4156, %v4332
        %v4334 = vpop.f32.mrb[0].mxu0
        %v4335 = vpop.f32.mrb[0].mxu0
        %v4336 = vadd.f32 %v4159, %v4335
        %v4337 = vpop.f32.mrb[0].mxu0
        %4338 = vmatprep.mubr.bf16.mxu0 0
        %4339 = vmatmul.mubr.bf16.gmra.mrb[0].mxu0 %v3857
        %v4340 = vpop.f32.mrb[0].mxu0
        %v4341 = vadd.f32 %v4164, %v4340
        %v4342 = vpop.f32.mrb[0].mxu0
        %v4343 = vpop.f32.mrb[0].mxu0
        %v4344 = vadd.f32 %v4167, %v4343
        %v4345 = vpop.f32.mrb[0].mxu0
        %4346 = vmatprep.mubr.bf16.mxu0 0
        %4347 = vmatmul.mubr.bf16.gmra.mrb[0].mxu0 %v3858
        %v4348 = vpop.f32.mrb[0].mxu0
        %v4349 = vadd.f32 %v4172, %v4348
        %v4350 = vpop.f32.mrb[0].mxu0
        %v4351 = vpop.f32.mrb[0].mxu0
        %v4352 = vadd.f32 %v4175, %v4351
        %v4353 = vpop.f32.mrb[0].mxu0
        %4354 = vmatprep.mubr.bf16.mxu0 0
        %4355 = vmatmul.mubr.bf16.gmra.mrb[0].mxu0 %v3859
        %v4356 = vpop.f32.mrb[0].mxu0
        %v4357 = vadd.f32 %v4180, %v4356
        %v4358 = vpop.f32.mrb[0].mxu0
        %v4359 = vpop.f32.mrb[0].mxu0
        %v4360 = vadd.f32 %v4183, %v4359
        %v4361 = vpop.f32.mrb[0].mxu0
        %4362 = vdwg.mxu0
        %s4363 = scalar_lea.vmem [#allocation10], 128
        %v4364 = vld [vmem:[%s4363] sm:$0xf]
        %v4365 = vld [vmem:[%s4363 + $0x4] sm:$0xf]
        %v4366 = vld [vmem:[%s4363 + $0x8] sm:$0xf]
        %v4367 = vld [vmem:[%s4363 + $0xc] sm:$0xf]
        %v4368 = vld [vmem:[%s4363 + $0x10] sm:$0xf]
        %v4369 = vld [vmem:[%s4363 + $0x14] sm:$0xf]
        %v4370 = vld [vmem:[%s4363 + $0x18] sm:$0xf]
        %v4371 = vld [vmem:[%s4363 + $0x1c] sm:$0xf]
        %v4372 = vld [vmem:[%s4363 + $0x20] sm:$0xf]
        %v4373 = vld [vmem:[%s4363 + $0x24] sm:$0xf]
        %v4374 = vld [vmem:[%s4363 + $0x28] sm:$0xf]
        %v4375 = vld [vmem:[%s4363 + $0x2c] sm:$0xf]
        %v4376 = vld [vmem:[%s4363 + $0x30] sm:$0xf]
        %v4377 = vld [vmem:[%s4363 + $0x34] sm:$0xf]
        %v4378 = vld [vmem:[%s4363 + $0x38] sm:$0xf]
        %v4379 = vld [vmem:[%s4363 + $0x3c] sm:$0xf]
        %v4393 = vrot.slane %v3848, 1
        %v4394 = vrot.slane %v3849, 1
        %v4395 = vsel %vm1051, %v4393, %v4394
        %v4396 = vrot.slane %v3850, 1
        %v4397 = vsel %vm1051, %v4394, %v4396
        %v4398 = vrot.slane %v3851, 1
        %v4399 = vsel %vm1051, %v4396, %v4398
        %v4400 = vrot.slane %v3852, 1
        %v4401 = vsel %vm1051, %v4398, %v4400
        %v4402 = vrot.slane %v3853, 1
        %v4403 = vsel %vm1051, %v4400, %v4402
        %v4404 = vrot.slane %v3854, 1
        %v4405 = vsel %vm1051, %v4402, %v4404
        %v4406 = vrot.slane %v3855, 1
        %v4407 = vsel %vm1051, %v4404, %v4406
        %v4408 = vrot.slane %v3856, 1
        %v4409 = vsel %vm1051, %v4406, %v4408
        %v4410 = vrot.slane %v3857, 1
        %v4411 = vsel %vm1051, %v4408, %v4410
        %v4412 = vrot.slane %v3858, 1
        %v4413 = vsel %vm1051, %v4410, %v4412
        %v4414 = vrot.slane %v3859, 1
        %v4415 = vsel %vm1051, %v4412, %v4414
        %v4416 = vrot.slane %v3860, 1
        %v4417 = vsel %vm1051, %v4414, %v4416
        %v4446 = vunpack.c.l.b16 %v4364
        %v4447 = vunpack.c.l.b16 %v4365
        %v4448 = vunpack.c.l.b16 %v4366
        %v4449 = vunpack.c.l.b16 %v4367
        %v4450 = vunpack.c.l.b16 %v4368
        %v4451 = vunpack.c.l.b16 %v4369
        %v4452 = vunpack.c.l.b16 %v4370
        %v4453 = vunpack.c.l.b16 %v4371
        %v4454 = vunpack.c.l.b16 %v4372
        %v4455 = vunpack.c.l.b16 %v4373
        %v4456 = vunpack.c.l.b16 %v4374
        %v4457 = vunpack.c.l.b16 %v4375
        %v4458 = vunpack.c.l.b16 %v4376
        %v4459 = vunpack.c.l.b16 %v4377
        %v4460 = vunpack.c.l.b16 %v4378
        %v4461 = vunpack.c.l.b16 %v4379
        %v4462 = vpack.c.b16 %v4447, %v4446
        %v4463 = vpack.c.b16 %v4449, %v4448
        %v4464 = vpack.c.b16 %v4451, %v4450
        %v4465 = vpack.c.b16 %v4453, %v4452
        %v4466 = vpack.c.b16 %v4455, %v4454
        %v4467 = vpack.c.b16 %v4457, %v4456
        %v4468 = vpack.c.b16 %v4459, %v4458
        %v4469 = vpack.c.b16 %v4461, %v4460
        %4478 = vmatprep.subr.bf16.mxu0 0
        %4479 = vmatpush1.bf16.msra.mxu0 %v4462
        %4480 = vmatprep.subr.bf16.mxu0 0
        %4481 = vmatpush1.bf16.msra.mxu0 %v4463
        %4482 = vmatprep.subr.bf16.mxu0 0
        %4483 = vmatpush1.bf16.msra.mxu0 %v4464
        %4484 = vmatprep.subr.bf16.mxu0 0
        %4485 = vmatpush1.bf16.msra.mxu0 %v4465
        %4486 = vmatprep.subr.bf16.mxu0 0
        %4487 = vmatpush1.bf16.msra.mxu0 %v4466
        %4488 = vmatprep.subr.bf16.mxu0 0
        %4489 = vmatpush1.bf16.msra.mxu0 %v4467
        %4490 = vmatprep.subr.bf16.mxu0 0
        %4491 = vmatpush1.bf16.msra.mxu0 %v4468
        %4492 = vmatprep.subr.bf16.mxu0 0
        %4493 = vmatpush1.bf16.msra.mxu0 %v4469
        %4494 = vmatprep.subr.bf16.mxu0 0
        %4495 = vmatpush1.bf16.msra.mxu0 0
        %4496 = vmatprep.subr.bf16.mxu0 0
        %4497 = vmatpush1.bf16.msra.mxu0 0
        %4498 = vmatprep.subr.bf16.mxu0 0
        %4499 = vmatpush1.bf16.msra.mxu0 0
        %4500 = vmatprep.subr.bf16.mxu0 0
        %4501 = vmatpush1.bf16.msra.mxu0 0
        %4502 = vmatprep.subr.bf16.mxu0 0
        %4503 = vmatpush1.bf16.msra.mxu0 0
        %4504 = vmatprep.subr.bf16.mxu0 0
        %4505 = vmatpush1.bf16.msra.mxu0 0
        %4506 = vmatprep.subr.bf16.mxu0 0
        %4507 = vmatpush1.bf16.msra.mxu0 0
        %4508 = vmatprep.subr.bf16.mxu0 0
        %4509 = vmatpush1.bf16.msra.mxu0 0
        %4510 = vmatprep.mubr.bf16.mxu0 0
        %4511 = vmatmul.mubr.bf16.gmra.mrb[0].mxu0 %v4395
        %v4512 = vpop.f32.mrb[0].mxu0
        %v4513 = vadd.f32 0.0, %v4512
        %v4514 = vpop.f32.mrb[0].mxu0
        %v4515 = vpop.f32.mrb[0].mxu0
        %v4516 = vadd.f32 0.0, %v4515
        %v4517 = vpop.f32.mrb[0].mxu0
        %4518 = vmatprep.mubr.bf16.mxu0 0
        %4519 = vmatmul.mubr.bf16.gmra.mrb[0].mxu0 %v4397
        %v4520 = vpop.f32.mrb[0].mxu0
        %v4521 = vadd.f32 0.0, %v4520
        %v4522 = vpop.f32.mrb[0].mxu0
        %v4523 = vpop.f32.mrb[0].mxu0
        %v4524 = vadd.f32 0.0, %v4523
        %v4525 = vpop.f32.mrb[0].mxu0
        %4526 = vmatprep.mubr.bf16.mxu0 0
        %4527 = vmatmul.mubr.bf16.gmra.mrb[0].mxu0 %v4399
        %v4528 = vpop.f32.mrb[0].mxu0
        %v4529 = vadd.f32 0.0, %v4528
        %v4530 = vpop.f32.mrb[0].mxu0
        %v4531 = vpop.f32.mrb[0].mxu0
        %v4532 = vadd.f32 0.0, %v4531
        %v4533 = vpop.f32.mrb[0].mxu0
        %4534 = vmatprep.mubr.bf16.mxu0 0
        %4535 = vmatmul.mubr.bf16.gmra.mrb[0].mxu0 %v4401
        %v4536 = vpop.f32.mrb[0].mxu0
        %v4537 = vadd.f32 0.0, %v4536
        %v4538 = vpop.f32.mrb[0].mxu0
        %v4539 = vpop.f32.mrb[0].mxu0
        %v4540 = vadd.f32 0.0, %v4539
        %v4541 = vpop.f32.mrb[0].mxu0
        %4542 = vmatprep.mubr.bf16.mxu0 0
        %4543 = vmatmul.mubr.bf16.gmra.mrb[0].mxu0 %v4403
        %v4544 = vpop.f32.mrb[0].mxu0
        %v4545 = vadd.f32 0.0, %v4544
        %v4546 = vpop.f32.mrb[0].mxu0
        %v4547 = vpop.f32.mrb[0].mxu0
        %v4548 = vadd.f32 0.0, %v4547
        %v4549 = vpop.f32.mrb[0].mxu0
        %4550 = vmatprep.mubr.bf16.mxu0 0
        %4551 = vmatmul.mubr.bf16.gmra.mrb[0].mxu0 %v4405
        %v4552 = vpop.f32.mrb[0].mxu0
        %v4553 = vadd.f32 0.0, %v4552
        %v4554 = vpop.f32.mrb[0].mxu0
        %v4555 = vpop.f32.mrb[0].mxu0
        %v4556 = vadd.f32 0.0, %v4555
        %v4557 = vpop.f32.mrb[0].mxu0
        %4558 = vmatprep.mubr.bf16.mxu0 0
        %4559 = vmatmul.mubr.bf16.gmra.mrb[0].mxu0 %v4407
        %v4560 = vpop.f32.mrb[0].mxu0
        %v4561 = vadd.f32 0.0, %v4560
        %v4562 = vpop.f32.mrb[0].mxu0
        %v4563 = vpop.f32.mrb[0].mxu0
        %v4564 = vadd.f32 0.0, %v4563
        %v4565 = vpop.f32.mrb[0].mxu0
        %4566 = vmatprep.mubr.bf16.mxu0 0
        %4567 = vmatmul.mubr.bf16.gmra.mrb[0].mxu0 %v4409
        %v4568 = vpop.f32.mrb[0].mxu0
        %v4569 = vadd.f32 0.0, %v4568
        %v4570 = vpop.f32.mrb[0].mxu0
        %v4571 = vpop.f32.mrb[0].mxu0
        %v4572 = vadd.f32 0.0, %v4571
        %v4573 = vpop.f32.mrb[0].mxu0
        %4574 = vmatprep.mubr.bf16.mxu0 0
        %4575 = vmatmul.mubr.bf16.gmra.mrb[0].mxu0 %v4411
        %v4576 = vpop.f32.mrb[0].mxu0
        %v4577 = vadd.f32 0.0, %v4576
        %v4578 = vpop.f32.mrb[0].mxu0
        %v4579 = vpop.f32.mrb[0].mxu0
        %v4580 = vadd.f32 0.0, %v4579
        %v4581 = vpop.f32.mrb[0].mxu0
        %4582 = vmatprep.mubr.bf16.mxu0 0
        %4583 = vmatmul.mubr.bf16.gmra.mrb[0].mxu0 %v4413
        %v4584 = vpop.f32.mrb[0].mxu0
        %v4585 = vadd.f32 0.0, %v4584
        %v4586 = vpop.f32.mrb[0].mxu0
        %v4587 = vpop.f32.mrb[0].mxu0
        %v4588 = vadd.f32 0.0, %v4587
        %v4589 = vpop.f32.mrb[0].mxu0
        %4590 = vmatprep.mubr.bf16.mxu0 0
        %4591 = vmatmul.mubr.bf16.gmra.mrb[0].mxu0 %v4415
        %v4592 = vpop.f32.mrb[0].mxu0
        %v4593 = vadd.f32 0.0, %v4592
        %v4594 = vpop.f32.mrb[0].mxu0
        %v4595 = vpop.f32.mrb[0].mxu0
        %v4596 = vadd.f32 0.0, %v4595
        %v4597 = vpop.f32.mrb[0].mxu0
        %4598 = vmatprep.mubr.bf16.mxu0 0
        %4599 = vmatmul.mubr.bf16.gmra.mrb[0].mxu0 %v4417
        %v4600 = vpop.f32.mrb[0].mxu0
        %v4601 = vadd.f32 0.0, %v4600
        %v4602 = vpop.f32.mrb[0].mxu0
        %v4603 = vpop.f32.mrb[0].mxu0
        %v4604 = vadd.f32 0.0, %v4603
        %v4605 = vpop.f32.mrb[0].mxu0
        %4606 = vdwg.mxu0
        %v4607 = vadd.f32 %v4269, %v4513
        %v4608 = vadd.f32 %v4272, %v4516
        %v4609 = vadd.f32 %v4277, %v4521
        %v4610 = vadd.f32 %v4280, %v4524
        %v4611 = vadd.f32 %v4285, %v4529
        %v4612 = vadd.f32 %v4288, %v4532
        %v4613 = vadd.f32 %v4293, %v4537
        %v4614 = vadd.f32 %v4296, %v4540
        %v4615 = vadd.f32 %v4301, %v4545
        %v4616 = vadd.f32 %v4304, %v4548
        %v4617 = vadd.f32 %v4309, %v4553
        %v4618 = vadd.f32 %v4312, %v4556
        %v4619 = vadd.f32 %v4317, %v4561
        %v4620 = vadd.f32 %v4320, %v4564
        %v4621 = vadd.f32 %v4325, %v4569
        %v4622 = vadd.f32 %v4328, %v4572
        %v4623 = vadd.f32 %v4333, %v4577
        %v4624 = vadd.f32 %v4336, %v4580
        %v4625 = vadd.f32 %v4341, %v4585
        %v4626 = vadd.f32 %v4344, %v4588
        %v4627 = vadd.f32 %v4349, %v4593
        %v4628 = vadd.f32 %v4352, %v4596
        %v4629 = vadd.f32 %v4357, %v4601
        %v4630 = vadd.f32 %v4360, %v4604
        %s4631 = scalar_lea.vmem [#allocation10], 192
        %v4632 = vld [vmem:[%s4631] sm:$0xf]
        %v4633 = vld [vmem:[%s4631 + $0x4] sm:$0xf]
        %v4634 = vld [vmem:[%s4631 + $0x8] sm:$0xf]
        %v4635 = vld [vmem:[%s4631 + $0xc] sm:$0xf]
        %v4636 = vld [vmem:[%s4631 + $0x10] sm:$0xf]
        %v4637 = vld [vmem:[%s4631 + $0x14] sm:$0xf]
        %v4638 = vld [vmem:[%s4631 + $0x18] sm:$0xf]
        %v4639 = vld [vmem:[%s4631 + $0x1c] sm:$0xf]
        %v4640 = vld [vmem:[%s4631 + $0x20] sm:$0xf]
        %v4641 = vld [vmem:[%s4631 + $0x24] sm:$0xf]
        %v4642 = vld [vmem:[%s4631 + $0x28] sm:$0xf]
        %v4643 = vld [vmem:[%s4631 + $0x2c] sm:$0xf]
        %v4644 = vld [vmem:[%s4631 + $0x30] sm:$0xf]
        %v4645 = vld [vmem:[%s4631 + $0x34] sm:$0xf]
        %v4646 = vld [vmem:[%s4631 + $0x38] sm:$0xf]
        %v4647 = vld [vmem:[%s4631 + $0x3c] sm:$0xf]
        %vm4649 = vcmask 1043456
        %v4650 = vrot.slane %v3849, 4
        %v4651 = vrot.slane %v3850, 4
        %v4652 = vsel %vm4649, %v4650, %v4651
        %v4653 = vrot.slane %v3851, 4
        %v4654 = vsel %vm4649, %v4651, %v4653
        %v4655 = vrot.slane %v3852, 4
        %v4656 = vsel %vm4649, %v4653, %v4655
        %v4657 = vrot.slane %v3853, 4
        %v4658 = vsel %vm4649, %v4655, %v4657
        %v4659 = vrot.slane %v3854, 4
        %v4660 = vsel %vm4649, %v4657, %v4659
        %v4661 = vrot.slane %v3855, 4
        %v4662 = vsel %vm4649, %v4659, %v4661
        %v4663 = vrot.slane %v3856, 4
        %v4664 = vsel %vm4649, %v4661, %v4663
        %v4665 = vrot.slane %v3857, 4
        %v4666 = vsel %vm4649, %v4663, %v4665
        %v4667 = vrot.slane %v3858, 4
        %v4668 = vsel %vm4649, %v4665, %v4667
        %v4669 = vrot.slane %v3859, 4
        %v4670 = vsel %vm4649, %v4667, %v4669
        %v4671 = vrot.slane %v3860, 4
        %v4672 = vsel %vm4649, %v4669, %v4671
        %v4673 = vrot.slane %v3861, 4
        %v4674 = vsel %vm4649, %v4671, %v4673
        %v4703 = vunpack.c.l.b16 %v4632
        %v4704 = vunpack.c.l.b16 %v4633
        %v4705 = vunpack.c.l.b16 %v4634
        %v4706 = vunpack.c.l.b16 %v4635
        %v4707 = vunpack.c.l.b16 %v4636
        %v4708 = vunpack.c.l.b16 %v4637
        %v4709 = vunpack.c.l.b16 %v4638
        %v4710 = vunpack.c.l.b16 %v4639
        %v4711 = vunpack.c.l.b16 %v4640
        %v4712 = vunpack.c.l.b16 %v4641
        %v4713 = vunpack.c.l.b16 %v4642
        %v4714 = vunpack.c.l.b16 %v4643
        %v4715 = vunpack.c.l.b16 %v4644
        %v4716 = vunpack.c.l.b16 %v4645
        %v4717 = vunpack.c.l.b16 %v4646
        %v4718 = vunpack.c.l.b16 %v4647
        %v4719 = vpack.c.b16 %v4704, %v4703
        %v4720 = vpack.c.b16 %v4706, %v4705
        %v4721 = vpack.c.b16 %v4708, %v4707
        %v4722 = vpack.c.b16 %v4710, %v4709
        %v4723 = vpack.c.b16 %v4712, %v4711
        %v4724 = vpack.c.b16 %v4714, %v4713
        %v4725 = vpack.c.b16 %v4716, %v4715
        %v4726 = vpack.c.b16 %v4718, %v4717
        %4735 = vmatprep.subr.bf16.mxu0 0
        %4736 = vmatpush1.bf16.msra.mxu0 %v4719
        %4737 = vmatprep.subr.bf16.mxu0 0
        %4738 = vmatpush1.bf16.msra.mxu0 %v4720
        %4739 = vmatprep.subr.bf16.mxu0 0
        %4740 = vmatpush1.bf16.msra.mxu0 %v4721
        %4741 = vmatprep.subr.bf16.mxu0 0
        %4742 = vmatpush1.bf16.msra.mxu0 %v4722
        %4743 = vmatprep.subr.bf16.mxu0 0
        %4744 = vmatpush1.bf16.msra.mxu0 %v4723
        %4745 = vmatprep.subr.bf16.mxu0 0
        %4746 = vmatpush1.bf16.msra.mxu0 %v4724
        %4747 = vmatprep.subr.bf16.mxu0 0
        %4748 = vmatpush1.bf16.msra.mxu0 %v4725
        %4749 = vmatprep.subr.bf16.mxu0 0
        %4750 = vmatpush1.bf16.msra.mxu0 %v4726
        %4751 = vmatprep.subr.bf16.mxu0 0
        %4752 = vmatpush1.bf16.msra.mxu0 0
        %4753 = vmatprep.subr.bf16.mxu0 0
        %4754 = vmatpush1.bf16.msra.mxu0 0
        %4755 = vmatprep.subr.bf16.mxu0 0
        %4756 = vmatpush1.bf16.msra.mxu0 0
        %4757 = vmatprep.subr.bf16.mxu0 0
        %4758 = vmatpush1.bf16.msra.mxu0 0
        %4759 = vmatprep.subr.bf16.mxu0 0
        %4760 = vmatpush1.bf16.msra.mxu0 0
        %4761 = vmatprep.subr.bf16.mxu0 0
        %4762 = vmatpush1.bf16.msra.mxu0 0
        %4763 = vmatprep.subr.bf16.mxu0 0
        %4764 = vmatpush1.bf16.msra.mxu0 0
        %4765 = vmatprep.subr.bf16.mxu0 0
        %4766 = vmatpush1.bf16.msra.mxu0 0
        %4767 = vmatprep.mubr.bf16.mxu0 0
        %4768 = vmatmul.mubr.bf16.gmra.mrb[0].mxu0 %v4652
        %v4769 = vpop.f32.mrb[0].mxu0
        %v4770 = vadd.f32 0.0, %v4769
        %v4771 = vpop.f32.mrb[0].mxu0
        %v4772 = vpop.f32.mrb[0].mxu0
        %v4773 = vadd.f32 0.0, %v4772
        %v4774 = vpop.f32.mrb[0].mxu0
        %4775 = vmatprep.mubr.bf16.mxu0 0
        %4776 = vmatmul.mubr.bf16.gmra.mrb[0].mxu0 %v4654
        %v4777 = vpop.f32.mrb[0].mxu0
        %v4778 = vadd.f32 0.0, %v4777
        %v4779 = vpop.f32.mrb[0].mxu0
        %v4780 = vpop.f32.mrb[0].mxu0
        %v4781 = vadd.f32 0.0, %v4780
        %v4782 = vpop.f32.mrb[0].mxu0
        %4783 = vmatprep.mubr.bf16.mxu0 0
        %4784 = vmatmul.mubr.bf16.gmra.mrb[0].mxu0 %v4656
        %v4785 = vpop.f32.mrb[0].mxu0
        %v4786 = vadd.f32 0.0, %v4785
        %v4787 = vpop.f32.mrb[0].mxu0
        %v4788 = vpop.f32.mrb[0].mxu0
        %v4789 = vadd.f32 0.0, %v4788
        %v4790 = vpop.f32.mrb[0].mxu0
        %4791 = vmatprep.mubr.bf16.mxu0 0
        %4792 = vmatmul.mubr.bf16.gmra.mrb[0].mxu0 %v4658
        %v4793 = vpop.f32.mrb[0].mxu0
        %v4794 = vadd.f32 0.0, %v4793
        %v4795 = vpop.f32.mrb[0].mxu0
        %v4796 = vpop.f32.mrb[0].mxu0
        %v4797 = vadd.f32 0.0, %v4796
        %v4798 = vpop.f32.mrb[0].mxu0
        %4799 = vmatprep.mubr.bf16.mxu0 0
        %4800 = vmatmul.mubr.bf16.gmra.mrb[0].mxu0 %v4660
        %v4801 = vpop.f32.mrb[0].mxu0
        %v4802 = vadd.f32 0.0, %v4801
        %v4803 = vpop.f32.mrb[0].mxu0
        %v4804 = vpop.f32.mrb[0].mxu0
        %v4805 = vadd.f32 0.0, %v4804
        %v4806 = vpop.f32.mrb[0].mxu0
        %4807 = vmatprep.mubr.bf16.mxu0 0
        %4808 = vmatmul.mubr.bf16.gmra.mrb[0].mxu0 %v4662
        %v4809 = vpop.f32.mrb[0].mxu0
        %v4810 = vadd.f32 0.0, %v4809
        %v4811 = vpop.f32.mrb[0].mxu0
        %v4812 = vpop.f32.mrb[0].mxu0
        %v4813 = vadd.f32 0.0, %v4812
        %v4814 = vpop.f32.mrb[0].mxu0
        %4815 = vmatprep.mubr.bf16.mxu0 0
        %4816 = vmatmul.mubr.bf16.gmra.mrb[0].mxu0 %v4664
        %v4817 = vpop.f32.mrb[0].mxu0
        %v4818 = vadd.f32 0.0, %v4817
        %v4819 = vpop.f32.mrb[0].mxu0
        %v4820 = vpop.f32.mrb[0].mxu0
        %v4821 = vadd.f32 0.0, %v4820
        %v4822 = vpop.f32.mrb[0].mxu0
        %4823 = vmatprep.mubr.bf16.mxu0 0
        %4824 = vmatmul.mubr.bf16.gmra.mrb[0].mxu0 %v4666
        %v4825 = vpop.f32.mrb[0].mxu0
        %v4826 = vadd.f32 0.0, %v4825
        %v4827 = vpop.f32.mrb[0].mxu0
        %v4828 = vpop.f32.mrb[0].mxu0
        %v4829 = vadd.f32 0.0, %v4828
        %v4830 = vpop.f32.mrb[0].mxu0
        %4831 = vmatprep.mubr.bf16.mxu0 0
        %4832 = vmatmul.mubr.bf16.gmra.mrb[0].mxu0 %v4668
        %v4833 = vpop.f32.mrb[0].mxu0
        %v4834 = vadd.f32 0.0, %v4833
        %v4835 = vpop.f32.mrb[0].mxu0
        %v4836 = vpop.f32.mrb[0].mxu0
        %v4837 = vadd.f32 0.0, %v4836
        %v4838 = vpop.f32.mrb[0].mxu0
        %4839 = vmatprep.mubr.bf16.mxu0 0
        %4840 = vmatmul.mubr.bf16.gmra.mrb[0].mxu0 %v4670
        %v4841 = vpop.f32.mrb[0].mxu0
        %v4842 = vadd.f32 0.0, %v4841
        %v4843 = vpop.f32.mrb[0].mxu0
        %v4844 = vpop.f32.mrb[0].mxu0
        %v4845 = vadd.f32 0.0, %v4844
        %v4846 = vpop.f32.mrb[0].mxu0
        %4847 = vmatprep.mubr.bf16.mxu0 0
        %4848 = vmatmul.mubr.bf16.gmra.mrb[0].mxu0 %v4672
        %v4849 = vpop.f32.mrb[0].mxu0
        %v4850 = vadd.f32 0.0, %v4849
        %v4851 = vpop.f32.mrb[0].mxu0
        %v4852 = vpop.f32.mrb[0].mxu0
        %v4853 = vadd.f32 0.0, %v4852
        %v4854 = vpop.f32.mrb[0].mxu0
        %4855 = vmatprep.mubr.bf16.mxu0 0
        %4856 = vmatmul.mubr.bf16.gmra.mrb[0].mxu0 %v4674
        %v4857 = vpop.f32.mrb[0].mxu0
        %v4858 = vadd.f32 0.0, %v4857
        %v4859 = vpop.f32.mrb[0].mxu0
        %v4860 = vpop.f32.mrb[0].mxu0
        %v4861 = vadd.f32 0.0, %v4860
        %v4862 = vpop.f32.mrb[0].mxu0
        %4863 = vdwg.mxu0
        %v4864 = vadd.f32 %v4607, %v4770
        %v4865 = vadd.f32 %v4608, %v4773
        %v4866 = vadd.f32 %v4609, %v4778
        %v4867 = vadd.f32 %v4610, %v4781
        %v4868 = vadd.f32 %v4611, %v4786
        %v4869 = vadd.f32 %v4612, %v4789
        %v4870 = vadd.f32 %v4613, %v4794
        %v4871 = vadd.f32 %v4614, %v4797
        %v4872 = vadd.f32 %v4615, %v4802
        %v4873 = vadd.f32 %v4616, %v4805
        %v4874 = vadd.f32 %v4617, %v4810
        %v4875 = vadd.f32 %v4618, %v4813
        %v4876 = vadd.f32 %v4619, %v4818
        %v4877 = vadd.f32 %v4620, %v4821
        %v4878 = vadd.f32 %v4621, %v4826
        %v4879 = vadd.f32 %v4622, %v4829
        %v4880 = vadd.f32 %v4623, %v4834
        %v4881 = vadd.f32 %v4624, %v4837
        %v4882 = vadd.f32 %v4625, %v4842
        %v4883 = vadd.f32 %v4626, %v4845
        %v4884 = vadd.f32 %v4627, %v4850
        %v4885 = vadd.f32 %v4628, %v4853
        %v4886 = vadd.f32 %v4629, %v4858
        %v4887 = vadd.f32 %v4630, %v4861
        %s4888 = scalar_lea.vmem [#allocation10], 256
        %v4889 = vld [vmem:[%s4888] sm:$0xf]
        %v4890 = vld [vmem:[%s4888 + $0x4] sm:$0xf]
        %v4891 = vld [vmem:[%s4888 + $0x8] sm:$0xf]
        %v4892 = vld [vmem:[%s4888 + $0xc] sm:$0xf]
        %v4893 = vld [vmem:[%s4888 + $0x10] sm:$0xf]
        %v4894 = vld [vmem:[%s4888 + $0x14] sm:$0xf]
        %v4895 = vld [vmem:[%s4888 + $0x18] sm:$0xf]
        %v4896 = vld [vmem:[%s4888 + $0x1c] sm:$0xf]
        %v4897 = vld [vmem:[%s4888 + $0x20] sm:$0xf]
        %v4898 = vld [vmem:[%s4888 + $0x24] sm:$0xf]
        %v4899 = vld [vmem:[%s4888 + $0x28] sm:$0xf]
        %v4900 = vld [vmem:[%s4888 + $0x2c] sm:$0xf]
        %v4901 = vld [vmem:[%s4888 + $0x30] sm:$0xf]
        %v4902 = vld [vmem:[%s4888 + $0x34] sm:$0xf]
        %v4903 = vld [vmem:[%s4888 + $0x38] sm:$0xf]
        %v4904 = vld [vmem:[%s4888 + $0x3c] sm:$0xf]
        %vm4905 = vsmask.f32 3328
        %v4906 = vrot.slane %v3909, 4
        %v4907 = vrot.slane %v3905, 5
        %v4908 = vor.u32 %v4906, %v4907
        %v4909 = vrot.slane %v3917, 4
        %v4910 = vrot.slane %v3913, 5
        %v4911 = vor.u32 %v4909, %v4910
        %v4912 = vsel %vm4905, %v4908, %v4911
        %v4913 = vrot.slane %v3925, 4
        %v4914 = vrot.slane %v3921, 5
        %v4915 = vor.u32 %v4913, %v4914
        %v4916 = vsel %vm4905, %v4911, %v4915
        %v4917 = vrot.slane %v3933, 4
        %v4918 = vrot.slane %v3929, 5
        %v4919 = vor.u32 %v4917, %v4918
        %v4920 = vsel %vm4905, %v4915, %v4919
        %v4921 = vrot.slane %v3941, 4
        %v4922 = vrot.slane %v3937, 5
        %v4923 = vor.u32 %v4921, %v4922
        %v4924 = vsel %vm4905, %v4919, %v4923
        %v4925 = vrot.slane %v3949, 4
        %v4926 = vrot.slane %v3945, 5
        %v4927 = vor.u32 %v4925, %v4926
        %v4928 = vsel %vm4905, %v4923, %v4927
        %v4929 = vrot.slane %v3957, 4
        %v4930 = vrot.slane %v3953, 5
        %v4931 = vor.u32 %v4929, %v4930
        %v4932 = vsel %vm4905, %v4927, %v4931
        %v4933 = vrot.slane %v3965, 4
        %v4934 = vrot.slane %v3961, 5
        %v4935 = vor.u32 %v4933, %v4934
        %v4936 = vsel %vm4905, %v4931, %v4935
        %v4937 = vrot.slane %v3973, 4
        %v4938 = vrot.slane %v3969, 5
        %v4939 = vor.u32 %v4937, %v4938
        %v4940 = vsel %vm4905, %v4935, %v4939
        %v4941 = vrot.slane %v3981, 4
        %v4942 = vrot.slane %v3977, 5
        %v4943 = vor.u32 %v4941, %v4942
        %v4944 = vsel %vm4905, %v4939, %v4943
        %v4945 = vrot.slane %v3989, 4
        %v4946 = vrot.slane %v3985, 5
        %v4947 = vor.u32 %v4945, %v4946
        %v4948 = vsel %vm4905, %v4943, %v4947
        %v4949 = vshrl.u32 %v3860, 16
        %v4951 = vrot.slane %v4949, 4
        %v4952 = vrot.slane %v3993, 5
        %v4953 = vor.u32 %v4951, %v4952
        %v4954 = vsel %vm4905, %v4947, %v4953
        %v4956 = vshrl.u32 %v3861, 16
        %v4958 = vrot.slane %v4956, 4
        %v4959 = vshll.u32 %v3861, 16
        %v4961 = vrot.slane %v4959, 5
        %v4962 = vor.u32 %v4958, %v4961
        %v4963 = vsel %vm4905, %v4953, %v4962
        %v4992 = vunpack.c.l.b16 %v4889
        %v4993 = vunpack.c.l.b16 %v4890
        %v4994 = vunpack.c.l.b16 %v4891
        %v4995 = vunpack.c.l.b16 %v4892
        %v4996 = vunpack.c.l.b16 %v4893
        %v4997 = vunpack.c.l.b16 %v4894
        %v4998 = vunpack.c.l.b16 %v4895
        %v4999 = vunpack.c.l.b16 %v4896
        %v5000 = vunpack.c.l.b16 %v4897
        %v5001 = vunpack.c.l.b16 %v4898
        %v5002 = vunpack.c.l.b16 %v4899
        %v5003 = vunpack.c.l.b16 %v4900
        %v5004 = vunpack.c.l.b16 %v4901
        %v5005 = vunpack.c.l.b16 %v4902
        %v5006 = vunpack.c.l.b16 %v4903
        %v5007 = vunpack.c.l.b16 %v4904
        %v5008 = vpack.c.b16 %v4993, %v4992
        %v5009 = vpack.c.b16 %v4995, %v4994
        %v5010 = vpack.c.b16 %v4997, %v4996
        %v5011 = vpack.c.b16 %v4999, %v4998
        %v5012 = vpack.c.b16 %v5001, %v5000
        %v5013 = vpack.c.b16 %v5003, %v5002
        %v5014 = vpack.c.b16 %v5005, %v5004
        %v5015 = vpack.c.b16 %v5007, %v5006
        %5024 = vmatprep.subr.bf16.mxu0 0
        %5025 = vmatpush1.bf16.msra.mxu0 %v5008
        %5026 = vmatprep.subr.bf16.mxu0 0
        %5027 = vmatpush1.bf16.msra.mxu0 %v5009
        %5028 = vmatprep.subr.bf16.mxu0 0
        %5029 = vmatpush1.bf16.msra.mxu0 %v5010
        %5030 = vmatprep.subr.bf16.mxu0 0
        %5031 = vmatpush1.bf16.msra.mxu0 %v5011
        %5032 = vmatprep.subr.bf16.mxu0 0
        %5033 = vmatpush1.bf16.msra.mxu0 %v5012
        %5034 = vmatprep.subr.bf16.mxu0 0
        %5035 = vmatpush1.bf16.msra.mxu0 %v5013
        %5036 = vmatprep.subr.bf16.mxu0 0
        %5037 = vmatpush1.bf16.msra.mxu0 %v5014
        %5038 = vmatprep.subr.bf16.mxu0 0
        %5039 = vmatpush1.bf16.msra.mxu0 %v5015
        %5040 = vmatprep.subr.bf16.mxu0 0
        %5041 = vmatpush1.bf16.msra.mxu0 0
        %5042 = vmatprep.subr.bf16.mxu0 0
        %5043 = vmatpush1.bf16.msra.mxu0 0
        %5044 = vmatprep.subr.bf16.mxu0 0
        %5045 = vmatpush1.bf16.msra.mxu0 0
        %5046 = vmatprep.subr.bf16.mxu0 0
        %5047 = vmatpush1.bf16.msra.mxu0 0
        %5048 = vmatprep.subr.bf16.mxu0 0
        %5049 = vmatpush1.bf16.msra.mxu0 0
        %5050 = vmatprep.subr.bf16.mxu0 0
        %5051 = vmatpush1.bf16.msra.mxu0 0
        %5052 = vmatprep.subr.bf16.mxu0 0
        %5053 = vmatpush1.bf16.msra.mxu0 0
        %5054 = vmatprep.subr.bf16.mxu0 0
        %5055 = vmatpush1.bf16.msra.mxu0 0
        %5056 = vmatprep.mubr.bf16.mxu0 0
        %5057 = vmatmul.mubr.bf16.gmra.mrb[0].mxu0 %v4912
        %v5058 = vpop.f32.mrb[0].mxu0
        %v5059 = vadd.f32 0.0, %v5058
        %v5060 = vpop.f32.mrb[0].mxu0
        %v5061 = vpop.f32.mrb[0].mxu0
        %v5062 = vadd.f32 0.0, %v5061
        %v5063 = vpop.f32.mrb[0].mxu0
        %5064 = vmatprep.mubr.bf16.mxu0 0
        %5065 = vmatmul.mubr.bf16.gmra.mrb[0].mxu0 %v4916
        %v5066 = vpop.f32.mrb[0].mxu0
        %v5067 = vadd.f32 0.0, %v5066
        %v5068 = vpop.f32.mrb[0].mxu0
        %v5069 = vpop.f32.mrb[0].mxu0
        %v5070 = vadd.f32 0.0, %v5069
        %v5071 = vpop.f32.mrb[0].mxu0
        %5072 = vmatprep.mubr.bf16.mxu0 0
        %5073 = vmatmul.mubr.bf16.gmra.mrb[0].mxu0 %v4920
        %v5074 = vpop.f32.mrb[0].mxu0
        %v5075 = vadd.f32 0.0, %v5074
        %v5076 = vpop.f32.mrb[0].mxu0
        %v5077 = vpop.f32.mrb[0].mxu0
        %v5078 = vadd.f32 0.0, %v5077
        %v5079 = vpop.f32.mrb[0].mxu0
        %5080 = vmatprep.mubr.bf16.mxu0 0
        %5081 = vmatmul.mubr.bf16.gmra.mrb[0].mxu0 %v4924
        %v5082 = vpop.f32.mrb[0].mxu0
        %v5083 = vadd.f32 0.0, %v5082
        %v5084 = vpop.f32.mrb[0].mxu0
        %v5085 = vpop.f32.mrb[0].mxu0
        %v5086 = vadd.f32 0.0, %v5085
        %v5087 = vpop.f32.mrb[0].mxu0
        %5088 = vmatprep.mubr.bf16.mxu0 0
        %5089 = vmatmul.mubr.bf16.gmra.mrb[0].mxu0 %v4928
        %v5090 = vpop.f32.mrb[0].mxu0
        %v5091 = vadd.f32 0.0, %v5090
        %v5092 = vpop.f32.mrb[0].mxu0
        %v5093 = vpop.f32.mrb[0].mxu0
        %v5094 = vadd.f32 0.0, %v5093
        %v5095 = vpop.f32.mrb[0].mxu0
        %5096 = vmatprep.mubr.bf16.mxu0 0
        %5097 = vmatmul.mubr.bf16.gmra.mrb[0].mxu0 %v4932
        %v5098 = vpop.f32.mrb[0].mxu0
        %v5099 = vadd.f32 0.0, %v5098
        %v5100 = vpop.f32.mrb[0].mxu0
        %v5101 = vpop.f32.mrb[0].mxu0
        %v5102 = vadd.f32 0.0, %v5101
        %v5103 = vpop.f32.mrb[0].mxu0
        %5104 = vmatprep.mubr.bf16.mxu0 0
        %5105 = vmatmul.mubr.bf16.gmra.mrb[0].mxu0 %v4936
        %v5106 = vpop.f32.mrb[0].mxu0
        %v5107 = vadd.f32 0.0, %v5106
        %v5108 = vpop.f32.mrb[0].mxu0
        %v5109 = vpop.f32.mrb[0].mxu0
        %v5110 = vadd.f32 0.0, %v5109
        %v5111 = vpop.f32.mrb[0].mxu0
        %5112 = vmatprep.mubr.bf16.mxu0 0
        %5113 = vmatmul.mubr.bf16.gmra.mrb[0].mxu0 %v4940
        %v5114 = vpop.f32.mrb[0].mxu0
        %v5115 = vadd.f32 0.0, %v5114
        %v5116 = vpop.f32.mrb[0].mxu0
        %v5117 = vpop.f32.mrb[0].mxu0
        %v5118 = vadd.f32 0.0, %v5117
        %v5119 = vpop.f32.mrb[0].mxu0
        %5120 = vmatprep.mubr.bf16.mxu0 0
        %5121 = vmatmul.mubr.bf16.gmra.mrb[0].mxu0 %v4944
        %v5122 = vpop.f32.mrb[0].mxu0
        %v5123 = vadd.f32 0.0, %v5122
        %v5124 = vpop.f32.mrb[0].mxu0
        %v5125 = vpop.f32.mrb[0].mxu0
        %v5126 = vadd.f32 0.0, %v5125
        %v5127 = vpop.f32.mrb[0].mxu0
        %5128 = vmatprep.mubr.bf16.mxu0 0
        %5129 = vmatmul.mubr.bf16.gmra.mrb[0].mxu0 %v4948
        %v5130 = vpop.f32.mrb[0].mxu0
        %v5131 = vadd.f32 0.0, %v5130
        %v5132 = vpop.f32.mrb[0].mxu0
        %v5133 = vpop.f32.mrb[0].mxu0
        %v5134 = vadd.f32 0.0, %v5133
        %v5135 = vpop.f32.mrb[0].mxu0
        %5136 = vmatprep.mubr.bf16.mxu0 0
        %5137 = vmatmul.mubr.bf16.gmra.mrb[0].mxu0 %v4954
        %v5138 = vpop.f32.mrb[0].mxu0
        %v5139 = vadd.f32 0.0, %v5138
        %v5140 = vpop.f32.mrb[0].mxu0
        %v5141 = vpop.f32.mrb[0].mxu0
        %v5142 = vadd.f32 0.0, %v5141
        %v5143 = vpop.f32.mrb[0].mxu0
        %5144 = vmatprep.mubr.bf16.mxu0 0
        %5145 = vmatmul.mubr.bf16.gmra.mrb[0].mxu0 %v4963
        %v5146 = vpop.f32.mrb[0].mxu0
        %v5147 = vadd.f32 0.0, %v5146
        %v5148 = vpop.f32.mrb[0].mxu0
        %v5149 = vpop.f32.mrb[0].mxu0
        %v5150 = vadd.f32 0.0, %v5149
        %v5151 = vpop.f32.mrb[0].mxu0
        %5152 = vdwg.mxu0
        %v5153 = vadd.f32 %v4864, %v5059
        %v5154 = vadd.f32 %v4865, %v5062
        %v5155 = vadd.f32 %v4866, %v5067
        %v5156 = vadd.f32 %v4867, %v5070
        %v5157 = vadd.f32 %v4868, %v5075
        %v5158 = vadd.f32 %v4869, %v5078
        %v5159 = vadd.f32 %v4870, %v5083
        %v5160 = vadd.f32 %v4871, %v5086
        %v5161 = vadd.f32 %v4872, %v5091
        %v5162 = vadd.f32 %v4873, %v5094
        %v5163 = vadd.f32 %v4874, %v5099
        %v5164 = vadd.f32 %v4875, %v5102
        %v5165 = vadd.f32 %v4876, %v5107
        %v5166 = vadd.f32 %v4877, %v5110
        %v5167 = vadd.f32 %v4878, %v5115
        %v5168 = vadd.f32 %v4879, %v5118
        %v5169 = vadd.f32 %v4880, %v5123
        %v5170 = vadd.f32 %v4881, %v5126
        %v5171 = vadd.f32 %v4882, %v5131
        %v5172 = vadd.f32 %v4883, %v5134
        %v5173 = vadd.f32 %v4884, %v5139
        %v5174 = vadd.f32 %v4885, %v5142
        %v5175 = vadd.f32 %v4886, %v5147
        %v5176 = vadd.f32 %v4887, %v5150
        %s5177 = scalar_lea.vmem [#allocation10], 320
        %v5178 = vld [vmem:[%s5177] sm:$0xf]
        %v5179 = vld [vmem:[%s5177 + $0x4] sm:$0xf]
        %v5180 = vld [vmem:[%s5177 + $0x8] sm:$0xf]
        %v5181 = vld [vmem:[%s5177 + $0xc] sm:$0xf]
        %v5182 = vld [vmem:[%s5177 + $0x10] sm:$0xf]
        %v5183 = vld [vmem:[%s5177 + $0x14] sm:$0xf]
        %v5184 = vld [vmem:[%s5177 + $0x18] sm:$0xf]
        %v5185 = vld [vmem:[%s5177 + $0x1c] sm:$0xf]
        %v5186 = vld [vmem:[%s5177 + $0x20] sm:$0xf]
        %v5187 = vld [vmem:[%s5177 + $0x24] sm:$0xf]
        %v5188 = vld [vmem:[%s5177 + $0x28] sm:$0xf]
        %v5189 = vld [vmem:[%s5177 + $0x2c] sm:$0xf]
        %v5190 = vld [vmem:[%s5177 + $0x30] sm:$0xf]
        %v5191 = vld [vmem:[%s5177 + $0x34] sm:$0xf]
        %v5192 = vld [vmem:[%s5177 + $0x38] sm:$0xf]
        %v5193 = vld [vmem:[%s5177 + $0x3c] sm:$0xf]
        %vm5194 = vcmask 1042432
        %v5195 = vrot.slane %v3849, 5
        %v5196 = vrot.slane %v3850, 5
        %v5197 = vsel %vm5194, %v5195, %v5196
        %v5198 = vrot.slane %v3851, 5
        %v5199 = vsel %vm5194, %v5196, %v5198
        %v5200 = vrot.slane %v3852, 5
        %v5201 = vsel %vm5194, %v5198, %v5200
        %v5202 = vrot.slane %v3853, 5
        %v5203 = vsel %vm5194, %v5200, %v5202
        %v5204 = vrot.slane %v3854, 5
        %v5205 = vsel %vm5194, %v5202, %v5204
        %v5206 = vrot.slane %v3855, 5
        %v5207 = vsel %vm5194, %v5204, %v5206
        %v5208 = vrot.slane %v3856, 5
        %v5209 = vsel %vm5194, %v5206, %v5208
        %v5210 = vrot.slane %v3857, 5
        %v5211 = vsel %vm5194, %v5208, %v5210
        %v5212 = vrot.slane %v3858, 5
        %v5213 = vsel %vm5194, %v5210, %v5212
        %v5214 = vrot.slane %v3859, 5
        %v5215 = vsel %vm5194, %v5212, %v5214
        %v5216 = vrot.slane %v3860, 5
        %v5217 = vsel %vm5194, %v5214, %v5216
        %v5218 = vrot.slane %v3861, 5
        %v5219 = vsel %vm5194, %v5216, %v5218
        %v5248 = vunpack.c.l.b16 %v5178
        %v5249 = vunpack.c.l.b16 %v5179
        %v5250 = vunpack.c.l.b16 %v5180
        %v5251 = vunpack.c.l.b16 %v5181
        %v5252 = vunpack.c.l.b16 %v5182
        %v5253 = vunpack.c.l.b16 %v5183
        %v5254 = vunpack.c.l.b16 %v5184
        %v5255 = vunpack.c.l.b16 %v5185
        %v5256 = vunpack.c.l.b16 %v5186
        %v5257 = vunpack.c.l.b16 %v5187
        %v5258 = vunpack.c.l.b16 %v5188
        %v5259 = vunpack.c.l.b16 %v5189
        %v5260 = vunpack.c.l.b16 %v5190
        %v5261 = vunpack.c.l.b16 %v5191
        %v5262 = vunpack.c.l.b16 %v5192
        %v5263 = vunpack.c.l.b16 %v5193
        %v5264 = vpack.c.b16 %v5249, %v5248
        %v5265 = vpack.c.b16 %v5251, %v5250
        %v5266 = vpack.c.b16 %v5253, %v5252
        %v5267 = vpack.c.b16 %v5255, %v5254
        %v5268 = vpack.c.b16 %v5257, %v5256
        %v5269 = vpack.c.b16 %v5259, %v5258
        %v5270 = vpack.c.b16 %v5261, %v5260
        %v5271 = vpack.c.b16 %v5263, %v5262
        %5280 = vmatprep.subr.bf16.mxu0 0
        %5281 = vmatpush1.bf16.msra.mxu0 %v5264
        %5282 = vmatprep.subr.bf16.mxu0 0
        %5283 = vmatpush1.bf16.msra.mxu0 %v5265
        %5284 = vmatprep.subr.bf16.mxu0 0
        %5285 = vmatpush1.bf16.msra.mxu0 %v5266
        %5286 = vmatprep.subr.bf16.mxu0 0
        %5287 = vmatpush1.bf16.msra.mxu0 %v5267
        %5288 = vmatprep.subr.bf16.mxu0 0
        %5289 = vmatpush1.bf16.msra.mxu0 %v5268
        %5290 = vmatprep.subr.bf16.mxu0 0
        %5291 = vmatpush1.bf16.msra.mxu0 %v5269
        %5292 = vmatprep.subr.bf16.mxu0 0
        %5293 = vmatpush1.bf16.msra.mxu0 %v5270
        %5294 = vmatprep.subr.bf16.mxu0 0
        %5295 = vmatpush1.bf16.msra.mxu0 %v5271
        %5296 = vmatprep.subr.bf16.mxu0 0
        %5297 = vmatpush1.bf16.msra.mxu0 0
        %5298 = vmatprep.subr.bf16.mxu0 0
        %5299 = vmatpush1.bf16.msra.mxu0 0
        %5300 = vmatprep.subr.bf16.mxu0 0
        %5301 = vmatpush1.bf16.msra.mxu0 0
        %5302 = vmatprep.subr.bf16.mxu0 0
        %5303 = vmatpush1.bf16.msra.mxu0 0
        %5304 = vmatprep.subr.bf16.mxu0 0
        %5305 = vmatpush1.bf16.msra.mxu0 0
        %5306 = vmatprep.subr.bf16.mxu0 0
        %5307 = vmatpush1.bf16.msra.mxu0 0
        %5308 = vmatprep.subr.bf16.mxu0 0
        %5309 = vmatpush1.bf16.msra.mxu0 0
        %5310 = vmatprep.subr.bf16.mxu0 0
        %5311 = vmatpush1.bf16.msra.mxu0 0
        %5312 = vmatprep.mubr.bf16.mxu0 0
        %5313 = vmatmul.mubr.bf16.gmra.mrb[0].mxu0 %v5197
        %v5314 = vpop.f32.mrb[0].mxu0
        %v5315 = vadd.f32 0.0, %v5314
        %v5316 = vpop.f32.mrb[0].mxu0
        %v5317 = vpop.f32.mrb[0].mxu0
        %v5318 = vadd.f32 0.0, %v5317
        %v5319 = vpop.f32.mrb[0].mxu0
        %5320 = vmatprep.mubr.bf16.mxu0 0
        %5321 = vmatmul.mubr.bf16.gmra.mrb[0].mxu0 %v5199
        %v5322 = vpop.f32.mrb[0].mxu0
        %v5323 = vadd.f32 0.0, %v5322
        %v5324 = vpop.f32.mrb[0].mxu0
        %v5325 = vpop.f32.mrb[0].mxu0
        %v5326 = vadd.f32 0.0, %v5325
        %v5327 = vpop.f32.mrb[0].mxu0
        %5328 = vmatprep.mubr.bf16.mxu0 0
        %5329 = vmatmul.mubr.bf16.gmra.mrb[0].mxu0 %v5201
        %v5330 = vpop.f32.mrb[0].mxu0
        %v5331 = vadd.f32 0.0, %v5330
        %v5332 = vpop.f32.mrb[0].mxu0
        %v5333 = vpop.f32.mrb[0].mxu0
        %v5334 = vadd.f32 0.0, %v5333
        %v5335 = vpop.f32.mrb[0].mxu0
        %5336 = vmatprep.mubr.bf16.mxu0 0
        %5337 = vmatmul.mubr.bf16.gmra.mrb[0].mxu0 %v5203
        %v5338 = vpop.f32.mrb[0].mxu0
        %v5339 = vadd.f32 0.0, %v5338
        %v5340 = vpop.f32.mrb[0].mxu0
        %v5341 = vpop.f32.mrb[0].mxu0
        %v5342 = vadd.f32 0.0, %v5341
        %v5343 = vpop.f32.mrb[0].mxu0
        %5344 = vmatprep.mubr.bf16.mxu0 0
        %5345 = vmatmul.mubr.bf16.gmra.mrb[0].mxu0 %v5205
        %v5346 = vpop.f32.mrb[0].mxu0
        %v5347 = vadd.f32 0.0, %v5346
        %v5348 = vpop.f32.mrb[0].mxu0
        %v5349 = vpop.f32.mrb[0].mxu0
        %v5350 = vadd.f32 0.0, %v5349
        %v5351 = vpop.f32.mrb[0].mxu0
        %5352 = vmatprep.mubr.bf16.mxu0 0
        %5353 = vmatmul.mubr.bf16.gmra.mrb[0].mxu0 %v5207
        %v5354 = vpop.f32.mrb[0].mxu0
        %v5355 = vadd.f32 0.0, %v5354
        %v5356 = vpop.f32.mrb[0].mxu0
        %v5357 = vpop.f32.mrb[0].mxu0
        %v5358 = vadd.f32 0.0, %v5357
        %v5359 = vpop.f32.mrb[0].mxu0
        %5360 = vmatprep.mubr.bf16.mxu0 0
        %5361 = vmatmul.mubr.bf16.gmra.mrb[0].mxu0 %v5209
        %v5362 = vpop.f32.mrb[0].mxu0
        %v5363 = vadd.f32 0.0, %v5362
        %v5364 = vpop.f32.mrb[0].mxu0
        %v5365 = vpop.f32.mrb[0].mxu0
        %v5366 = vadd.f32 0.0, %v5365
        %v5367 = vpop.f32.mrb[0].mxu0
        %5368 = vmatprep.mubr.bf16.mxu0 0
        %5369 = vmatmul.mubr.bf16.gmra.mrb[0].mxu0 %v5211
        %v5370 = vpop.f32.mrb[0].mxu0
        %v5371 = vadd.f32 0.0, %v5370
        %v5372 = vpop.f32.mrb[0].mxu0
        %v5373 = vpop.f32.mrb[0].mxu0
        %v5374 = vadd.f32 0.0, %v5373
        %v5375 = vpop.f32.mrb[0].mxu0
        %5376 = vmatprep.mubr.bf16.mxu0 0
        %5377 = vmatmul.mubr.bf16.gmra.mrb[0].mxu0 %v5213
        %v5378 = vpop.f32.mrb[0].mxu0
        %v5379 = vadd.f32 0.0, %v5378
        %v5380 = vpop.f32.mrb[0].mxu0
        %v5381 = vpop.f32.mrb[0].mxu0
        %v5382 = vadd.f32 0.0, %v5381
        %v5383 = vpop.f32.mrb[0].mxu0
        %5384 = vmatprep.mubr.bf16.mxu0 0
        %5385 = vmatmul.mubr.bf16.gmra.mrb[0].mxu0 %v5215
        %v5386 = vpop.f32.mrb[0].mxu0
        %v5387 = vadd.f32 0.0, %v5386
        %v5388 = vpop.f32.mrb[0].mxu0
        %v5389 = vpop.f32.mrb[0].mxu0
        %v5390 = vadd.f32 0.0, %v5389
        %v5391 = vpop.f32.mrb[0].mxu0
        %5392 = vmatprep.mubr.bf16.mxu0 0
        %5393 = vmatmul.mubr.bf16.gmra.mrb[0].mxu0 %v5217
        %v5394 = vpop.f32.mrb[0].mxu0
        %v5395 = vadd.f32 0.0, %v5394
        %v5396 = vpop.f32.mrb[0].mxu0
        %v5397 = vpop.f32.mrb[0].mxu0
        %v5398 = vadd.f32 0.0, %v5397
        %v5399 = vpop.f32.mrb[0].mxu0
        %5400 = vmatprep.mubr.bf16.mxu0 0
        %5401 = vmatmul.mubr.bf16.gmra.mrb[0].mxu0 %v5219
        %v5402 = vpop.f32.mrb[0].mxu0
        %v5403 = vadd.f32 0.0, %v5402
        %v5404 = vpop.f32.mrb[0].mxu0
        %v5405 = vpop.f32.mrb[0].mxu0
        %v5406 = vadd.f32 0.0, %v5405
        %v5407 = vpop.f32.mrb[0].mxu0
        %5408 = vdwg.mxu0
        %v5409 = vadd.f32 %v5153, %v5315
        %v5410 = vadd.f32 %v5154, %v5318
        %v5411 = vadd.f32 %v5155, %v5323
        %v5412 = vadd.f32 %v5156, %v5326
        %v5413 = vadd.f32 %v5157, %v5331
        %v5414 = vadd.f32 %v5158, %v5334
        %v5415 = vadd.f32 %v5159, %v5339
        %v5416 = vadd.f32 %v5160, %v5342
        %v5417 = vadd.f32 %v5161, %v5347
        %v5418 = vadd.f32 %v5162, %v5350
        %v5419 = vadd.f32 %v5163, %v5355
        %v5420 = vadd.f32 %v5164, %v5358
        %v5421 = vadd.f32 %v5165, %v5363
        %v5422 = vadd.f32 %v5166, %v5366
        %v5423 = vadd.f32 %v5167, %v5371
        %v5424 = vadd.f32 %v5168, %v5374
        %v5425 = vadd.f32 %v5169, %v5379
        %v5426 = vadd.f32 %v5170, %v5382
        %v5427 = vadd.f32 %v5171, %v5387
        %v5428 = vadd.f32 %v5172, %v5390
        %v5429 = vadd.f32 %v5173, %v5395
        %v5430 = vadd.f32 %v5174, %v5398
        %v5431 = vadd.f32 %v5175, %v5403
        %v5432 = vadd.f32 %v5176, %v5406
        %s5433 = scalar_lea.vmem [#allocation10], 384
        %v5434 = vld [vmem:[%s5433] sm:$0xf]
        %v5435 = vld [vmem:[%s5433 + $0x4] sm:$0xf]
        %v5436 = vld [vmem:[%s5433 + $0x8] sm:$0xf]
        %v5437 = vld [vmem:[%s5433 + $0xc] sm:$0xf]
        %v5438 = vld [vmem:[%s5433 + $0x10] sm:$0xf]
        %v5439 = vld [vmem:[%s5433 + $0x14] sm:$0xf]
        %v5440 = vld [vmem:[%s5433 + $0x18] sm:$0xf]
        %v5441 = vld [vmem:[%s5433 + $0x1c] sm:$0xf]
        %v5442 = vld [vmem:[%s5433 + $0x20] sm:$0xf]
        %v5443 = vld [vmem:[%s5433 + $0x24] sm:$0xf]
        %v5444 = vld [vmem:[%s5433 + $0x28] sm:$0xf]
        %v5445 = vld [vmem:[%s5433 + $0x2c] sm:$0xf]
        %v5446 = vld [vmem:[%s5433 + $0x30] sm:$0xf]
        %v5447 = vld [vmem:[%s5433 + $0x34] sm:$0xf]
        %v5448 = vld [vmem:[%s5433 + $0x38] sm:$0xf]
        %v5449 = vld [vmem:[%s5433 + $0x3c] sm:$0xf]
        %v5466 = vunpack.c.l.b16 %v5434
        %v5467 = vunpack.c.l.b16 %v5435
        %v5468 = vunpack.c.l.b16 %v5436
        %v5469 = vunpack.c.l.b16 %v5437
        %v5470 = vunpack.c.l.b16 %v5438
        %v5471 = vunpack.c.l.b16 %v5439
        %v5472 = vunpack.c.l.b16 %v5440
        %v5473 = vunpack.c.l.b16 %v5441
        %v5474 = vunpack.c.l.b16 %v5442
        %v5475 = vunpack.c.l.b16 %v5443
        %v5476 = vunpack.c.l.b16 %v5444
        %v5477 = vunpack.c.l.b16 %v5445
        %v5478 = vunpack.c.l.b16 %v5446
        %v5479 = vunpack.c.l.b16 %v5447
        %v5480 = vunpack.c.l.b16 %v5448
        %v5481 = vunpack.c.l.b16 %v5449
        %v5482 = vpack.c.b16 %v5467, %v5466
        %v5483 = vpack.c.b16 %v5469, %v5468
        %v5484 = vpack.c.b16 %v5471, %v5470
        %v5485 = vpack.c.b16 %v5473, %v5472
        %v5486 = vpack.c.b16 %v5475, %v5474
        %v5487 = vpack.c.b16 %v5477, %v5476
        %v5488 = vpack.c.b16 %v5479, %v5478
        %v5489 = vpack.c.b16 %v5481, %v5480
        %5498 = vmatprep.subr.bf16.mxu0 0
        %5499 = vmatpush1.bf16.msra.mxu0 %v5482
        %5500 = vmatprep.subr.bf16.mxu0 0
        %5501 = vmatpush1.bf16.msra.mxu0 %v5483
        %5502 = vmatprep.subr.bf16.mxu0 0
        %5503 = vmatpush1.bf16.msra.mxu0 %v5484
        %5504 = vmatprep.subr.bf16.mxu0 0
        %5505 = vmatpush1.bf16.msra.mxu0 %v5485
        %5506 = vmatprep.subr.bf16.mxu0 0
        %5507 = vmatpush1.bf16.msra.mxu0 %v5486
        %5508 = vmatprep.subr.bf16.mxu0 0
        %5509 = vmatpush1.bf16.msra.mxu0 %v5487
        %5510 = vmatprep.subr.bf16.mxu0 0
        %5511 = vmatpush1.bf16.msra.mxu0 %v5488
        %5512 = vmatprep.subr.bf16.mxu0 0
        %5513 = vmatpush1.bf16.msra.mxu0 %v5489
        %5514 = vmatprep.subr.bf16.mxu0 0
        %5515 = vmatpush1.bf16.msra.mxu0 0
        %5516 = vmatprep.subr.bf16.mxu0 0
        %5517 = vmatpush1.bf16.msra.mxu0 0
        %5518 = vmatprep.subr.bf16.mxu0 0
        %5519 = vmatpush1.bf16.msra.mxu0 0
        %5520 = vmatprep.subr.bf16.mxu0 0
        %5521 = vmatpush1.bf16.msra.mxu0 0
        %5522 = vmatprep.subr.bf16.mxu0 0
        %5523 = vmatpush1.bf16.msra.mxu0 0
        %5524 = vmatprep.subr.bf16.mxu0 0
        %5525 = vmatpush1.bf16.msra.mxu0 0
        %5526 = vmatprep.subr.bf16.mxu0 0
        %5527 = vmatpush1.bf16.msra.mxu0 0
        %5528 = vmatprep.subr.bf16.mxu0 0
        %5529 = vmatpush1.bf16.msra.mxu0 0
        %5530 = vmatprep.mubr.bf16.mxu0 0
        %5531 = vmatmul.mubr.bf16.gmra.mrb[0].mxu0 %v3851
        %v5532 = vpop.f32.mrb[0].mxu0
        %v5533 = vadd.f32 0.0, %v5532
        %v5534 = vpop.f32.mrb[0].mxu0
        %v5535 = vpop.f32.mrb[0].mxu0
        %v5536 = vadd.f32 0.0, %v5535
        %v5537 = vpop.f32.mrb[0].mxu0
        %5538 = vmatprep.mubr.bf16.mxu0 0
        %5539 = vmatmul.mubr.bf16.gmra.mrb[0].mxu0 %v3852
        %v5540 = vpop.f32.mrb[0].mxu0
        %v5541 = vadd.f32 0.0, %v5540
        %v5542 = vpop.f32.mrb[0].mxu0
        %v5543 = vpop.f32.mrb[0].mxu0
        %v5544 = vadd.f32 0.0, %v5543
        %v5545 = vpop.f32.mrb[0].mxu0
        %5546 = vmatprep.mubr.bf16.mxu0 0
        %5547 = vmatmul.mubr.bf16.gmra.mrb[0].mxu0 %v3853
        %v5548 = vpop.f32.mrb[0].mxu0
        %v5549 = vadd.f32 0.0, %v5548
        %v5550 = vpop.f32.mrb[0].mxu0
        %v5551 = vpop.f32.mrb[0].mxu0
        %v5552 = vadd.f32 0.0, %v5551
        %v5553 = vpop.f32.mrb[0].mxu0
        %5554 = vmatprep.mubr.bf16.mxu0 0
        %5555 = vmatmul.mubr.bf16.gmra.mrb[0].mxu0 %v3854
        %v5556 = vpop.f32.mrb[0].mxu0
        %v5557 = vadd.f32 0.0, %v5556
        %v5558 = vpop.f32.mrb[0].mxu0
        %v5559 = vpop.f32.mrb[0].mxu0
        %v5560 = vadd.f32 0.0, %v5559
        %v5561 = vpop.f32.mrb[0].mxu0
        %5562 = vmatprep.mubr.bf16.mxu0 0
        %5563 = vmatmul.mubr.bf16.gmra.mrb[0].mxu0 %v3855
        %v5564 = vpop.f32.mrb[0].mxu0
        %v5565 = vadd.f32 0.0, %v5564
        %v5566 = vpop.f32.mrb[0].mxu0
        %v5567 = vpop.f32.mrb[0].mxu0
        %v5568 = vadd.f32 0.0, %v5567
        %v5569 = vpop.f32.mrb[0].mxu0
        %5570 = vmatprep.mubr.bf16.mxu0 0
        %5571 = vmatmul.mubr.bf16.gmra.mrb[0].mxu0 %v3856
        %v5572 = vpop.f32.mrb[0].mxu0
        %v5573 = vadd.f32 0.0, %v5572
        %v5574 = vpop.f32.mrb[0].mxu0
        %v5575 = vpop.f32.mrb[0].mxu0
        %v5576 = vadd.f32 0.0, %v5575
        %v5577 = vpop.f32.mrb[0].mxu0
        %5578 = vmatprep.mubr.bf16.mxu0 0
        %5579 = vmatmul.mubr.bf16.gmra.mrb[0].mxu0 %v3857
        %v5580 = vpop.f32.mrb[0].mxu0
        %v5581 = vadd.f32 0.0, %v5580
        %v5582 = vpop.f32.mrb[0].mxu0
        %v5583 = vpop.f32.mrb[0].mxu0
        %v5584 = vadd.f32 0.0, %v5583
        %v5585 = vpop.f32.mrb[0].mxu0
        %5586 = vmatprep.mubr.bf16.mxu0 0
        %5587 = vmatmul.mubr.bf16.gmra.mrb[0].mxu0 %v3858
        %v5588 = vpop.f32.mrb[0].mxu0
        %v5589 = vadd.f32 0.0, %v5588
        %v5590 = vpop.f32.mrb[0].mxu0
        %v5591 = vpop.f32.mrb[0].mxu0
        %v5592 = vadd.f32 0.0, %v5591
        %v5593 = vpop.f32.mrb[0].mxu0
        %5594 = vmatprep.mubr.bf16.mxu0 0
        %5595 = vmatmul.mubr.bf16.gmra.mrb[0].mxu0 %v3859
        %v5596 = vpop.f32.mrb[0].mxu0
        %v5597 = vadd.f32 0.0, %v5596
        %v5598 = vpop.f32.mrb[0].mxu0
        %v5599 = vpop.f32.mrb[0].mxu0
        %v5600 = vadd.f32 0.0, %v5599
        %v5601 = vpop.f32.mrb[0].mxu0
        %5602 = vmatprep.mubr.bf16.mxu0 0
        %5603 = vmatmul.mubr.bf16.gmra.mrb[0].mxu0 %v3860
        %v5604 = vpop.f32.mrb[0].mxu0
        %v5605 = vadd.f32 0.0, %v5604
        %v5606 = vpop.f32.mrb[0].mxu0
        %v5607 = vpop.f32.mrb[0].mxu0
        %v5608 = vadd.f32 0.0, %v5607
        %v5609 = vpop.f32.mrb[0].mxu0
        %5610 = vmatprep.mubr.bf16.mxu0 0
        %5611 = vmatmul.mubr.bf16.gmra.mrb[0].mxu0 %v3861
        %v5612 = vpop.f32.mrb[0].mxu0
        %v5613 = vadd.f32 0.0, %v5612
        %v5614 = vpop.f32.mrb[0].mxu0
        %v5615 = vpop.f32.mrb[0].mxu0
        %v5616 = vadd.f32 0.0, %v5615
        %v5617 = vpop.f32.mrb[0].mxu0
        %5618 = vmatprep.mubr.bf16.mxu0 0
        %5619 = vmatmul.mubr.bf16.gmra.mrb[0].mxu0 %v3862
        %v5620 = vpop.f32.mrb[0].mxu0
        %v5621 = vadd.f32 0.0, %v5620
        %v5622 = vpop.f32.mrb[0].mxu0
        %v5623 = vpop.f32.mrb[0].mxu0
        %v5624 = vadd.f32 0.0, %v5623
        %v5625 = vpop.f32.mrb[0].mxu0
        %5626 = vdwg.mxu0
        %v5627 = vadd.f32 %v5409, %v5533
        %v5628 = vadd.f32 %v5410, %v5536
        %v5629 = vadd.f32 %v5411, %v5541
        %v5630 = vadd.f32 %v5412, %v5544
        %v5631 = vadd.f32 %v5413, %v5549
        %v5632 = vadd.f32 %v5414, %v5552
        %v5633 = vadd.f32 %v5415, %v5557
        %v5634 = vadd.f32 %v5416, %v5560
        %v5635 = vadd.f32 %v5417, %v5565
        %v5636 = vadd.f32 %v5418, %v5568
        %v5637 = vadd.f32 %v5419, %v5573
        %v5638 = vadd.f32 %v5420, %v5576
        %v5639 = vadd.f32 %v5421, %v5581
        %v5640 = vadd.f32 %v5422, %v5584
        %v5641 = vadd.f32 %v5423, %v5589
        %v5642 = vadd.f32 %v5424, %v5592
        %v5643 = vadd.f32 %v5425, %v5597
        %v5644 = vadd.f32 %v5426, %v5600
        %v5645 = vadd.f32 %v5427, %v5605
        %v5646 = vadd.f32 %v5428, %v5608
        %v5647 = vadd.f32 %v5429, %v5613
        %v5648 = vadd.f32 %v5430, %v5616
        %v5649 = vadd.f32 %v5431, %v5621
        %v5650 = vadd.f32 %v5432, %v5624
        %s5651 = scalar_lea.vmem [#allocation10], 448
        %v5652 = vld [vmem:[%s5651] sm:$0xf]
        %v5653 = vld [vmem:[%s5651 + $0x4] sm:$0xf]
        %v5654 = vld [vmem:[%s5651 + $0x8] sm:$0xf]
        %v5655 = vld [vmem:[%s5651 + $0xc] sm:$0xf]
        %v5656 = vld [vmem:[%s5651 + $0x10] sm:$0xf]
        %v5657 = vld [vmem:[%s5651 + $0x14] sm:$0xf]
        %v5658 = vld [vmem:[%s5651 + $0x18] sm:$0xf]
        %v5659 = vld [vmem:[%s5651 + $0x1c] sm:$0xf]
        %v5660 = vld [vmem:[%s5651 + $0x20] sm:$0xf]
        %v5661 = vld [vmem:[%s5651 + $0x24] sm:$0xf]
        %v5662 = vld [vmem:[%s5651 + $0x28] sm:$0xf]
        %v5663 = vld [vmem:[%s5651 + $0x2c] sm:$0xf]
        %v5664 = vld [vmem:[%s5651 + $0x30] sm:$0xf]
        %v5665 = vld [vmem:[%s5651 + $0x34] sm:$0xf]
        %v5666 = vld [vmem:[%s5651 + $0x38] sm:$0xf]
        %v5667 = vld [vmem:[%s5651 + $0x3c] sm:$0xf]
        %v5668 = vor.u32 %v4949, %v3995
        %v5669 = vrot.slane %v4959, 1
        %v5670 = vsel %vm513, %v5668, %v5669
        %v5671 = vor.u32 %v4956, %v5669
        %v5673 = vshll.u32 %v3862, 16
        %v5675 = vrot.slane %v5673, 1
        %v5676 = vsel %vm513, %v5671, %v5675
        %v5677 = vshrl.u32 %v3862, 16
        %v5679 = vor.u32 %v5677, %v5675
        %v5681 = vshll.u32 %v3863, 16
        %v5683 = vrot.slane %v5681, 1
        %v5684 = vsel %vm513, %v5679, %v5683
        %v5704 = vunpack.c.l.b16 %v5652
        %v5705 = vunpack.c.l.b16 %v5653
        %v5706 = vunpack.c.l.b16 %v5654
        %v5707 = vunpack.c.l.b16 %v5655
        %v5708 = vunpack.c.l.b16 %v5656
        %v5709 = vunpack.c.l.b16 %v5657
        %v5710 = vunpack.c.l.b16 %v5658
        %v5711 = vunpack.c.l.b16 %v5659
        %v5712 = vunpack.c.l.b16 %v5660
        %v5713 = vunpack.c.l.b16 %v5661
        %v5714 = vunpack.c.l.b16 %v5662
        %v5715 = vunpack.c.l.b16 %v5663
        %v5716 = vunpack.c.l.b16 %v5664
        %v5717 = vunpack.c.l.b16 %v5665
        %v5718 = vunpack.c.l.b16 %v5666
        %v5719 = vunpack.c.l.b16 %v5667
        %v5720 = vpack.c.b16 %v5705, %v5704
        %v5721 = vpack.c.b16 %v5707, %v5706
        %v5722 = vpack.c.b16 %v5709, %v5708
        %v5723 = vpack.c.b16 %v5711, %v5710
        %v5724 = vpack.c.b16 %v5713, %v5712
        %v5725 = vpack.c.b16 %v5715, %v5714
        %v5726 = vpack.c.b16 %v5717, %v5716
        %v5727 = vpack.c.b16 %v5719, %v5718
        %5736 = vmatprep.subr.bf16.mxu0 0
        %5737 = vmatpush1.bf16.msra.mxu0 %v5720
        %5738 = vmatprep.subr.bf16.mxu0 0
        %5739 = vmatpush1.bf16.msra.mxu0 %v5721
        %5740 = vmatprep.subr.bf16.mxu0 0
        %5741 = vmatpush1.bf16.msra.mxu0 %v5722
        %5742 = vmatprep.subr.bf16.mxu0 0
        %5743 = vmatpush1.bf16.msra.mxu0 %v5723
        %5744 = vmatprep.subr.bf16.mxu0 0
        %5745 = vmatpush1.bf16.msra.mxu0 %v5724
        %5746 = vmatprep.subr.bf16.mxu0 0
        %5747 = vmatpush1.bf16.msra.mxu0 %v5725
        %5748 = vmatprep.subr.bf16.mxu0 0
        %5749 = vmatpush1.bf16.msra.mxu0 %v5726
        %5750 = vmatprep.subr.bf16.mxu0 0
        %5751 = vmatpush1.bf16.msra.mxu0 %v5727
        %5752 = vmatprep.subr.bf16.mxu0 0
        %5753 = vmatpush1.bf16.msra.mxu0 0
        %5754 = vmatprep.subr.bf16.mxu0 0
        %5755 = vmatpush1.bf16.msra.mxu0 0
        %5756 = vmatprep.subr.bf16.mxu0 0
        %5757 = vmatpush1.bf16.msra.mxu0 0
        %5758 = vmatprep.subr.bf16.mxu0 0
        %5759 = vmatpush1.bf16.msra.mxu0 0
        %5760 = vmatprep.subr.bf16.mxu0 0
        %5761 = vmatpush1.bf16.msra.mxu0 0
        %5762 = vmatprep.subr.bf16.mxu0 0
        %5763 = vmatpush1.bf16.msra.mxu0 0
        %5764 = vmatprep.subr.bf16.mxu0 0
        %5765 = vmatpush1.bf16.msra.mxu0 0
        %5766 = vmatprep.subr.bf16.mxu0 0
        %5767 = vmatpush1.bf16.msra.mxu0 0
        %5768 = vmatprep.mubr.bf16.mxu0 0
        %5769 = vmatmul.mubr.bf16.gmra.mrb[0].mxu0 %v3932
        %v5770 = vpop.f32.mrb[0].mxu0
        %v5771 = vadd.f32 0.0, %v5770
        %v5772 = vpop.f32.mrb[0].mxu0
        %v5773 = vpop.f32.mrb[0].mxu0
        %v5774 = vadd.f32 0.0, %v5773
        %v5775 = vpop.f32.mrb[0].mxu0
        %5776 = vmatprep.mubr.bf16.mxu0 0
        %5777 = vmatmul.mubr.bf16.gmra.mrb[0].mxu0 %v3940
        %v5778 = vpop.f32.mrb[0].mxu0
        %v5779 = vadd.f32 0.0, %v5778
        %v5780 = vpop.f32.mrb[0].mxu0
        %v5781 = vpop.f32.mrb[0].mxu0
        %v5782 = vadd.f32 0.0, %v5781
        %v5783 = vpop.f32.mrb[0].mxu0
        %5784 = vmatprep.mubr.bf16.mxu0 0
        %5785 = vmatmul.mubr.bf16.gmra.mrb[0].mxu0 %v3948
        %v5786 = vpop.f32.mrb[0].mxu0
        %v5787 = vadd.f32 0.0, %v5786
        %v5788 = vpop.f32.mrb[0].mxu0
        %v5789 = vpop.f32.mrb[0].mxu0
        %v5790 = vadd.f32 0.0, %v5789
        %v5791 = vpop.f32.mrb[0].mxu0
        %5792 = vmatprep.mubr.bf16.mxu0 0
        %5793 = vmatmul.mubr.bf16.gmra.mrb[0].mxu0 %v3956
        %v5794 = vpop.f32.mrb[0].mxu0
        %v5795 = vadd.f32 0.0, %v5794
        %v5796 = vpop.f32.mrb[0].mxu0
        %v5797 = vpop.f32.mrb[0].mxu0
        %v5798 = vadd.f32 0.0, %v5797
        %v5799 = vpop.f32.mrb[0].mxu0
        %5800 = vmatprep.mubr.bf16.mxu0 0
        %5801 = vmatmul.mubr.bf16.gmra.mrb[0].mxu0 %v3964
        %v5802 = vpop.f32.mrb[0].mxu0
        %v5803 = vadd.f32 0.0, %v5802
        %v5804 = vpop.f32.mrb[0].mxu0
        %v5805 = vpop.f32.mrb[0].mxu0
        %v5806 = vadd.f32 0.0, %v5805
        %v5807 = vpop.f32.mrb[0].mxu0
        %5808 = vmatprep.mubr.bf16.mxu0 0
        %5809 = vmatmul.mubr.bf16.gmra.mrb[0].mxu0 %v3972
        %v5810 = vpop.f32.mrb[0].mxu0
        %v5811 = vadd.f32 0.0, %v5810
        %v5812 = vpop.f32.mrb[0].mxu0
        %v5813 = vpop.f32.mrb[0].mxu0
        %v5814 = vadd.f32 0.0, %v5813
        %v5815 = vpop.f32.mrb[0].mxu0
        %5816 = vmatprep.mubr.bf16.mxu0 0
        %5817 = vmatmul.mubr.bf16.gmra.mrb[0].mxu0 %v3980
        %v5818 = vpop.f32.mrb[0].mxu0
        %v5819 = vadd.f32 0.0, %v5818
        %v5820 = vpop.f32.mrb[0].mxu0
        %v5821 = vpop.f32.mrb[0].mxu0
        %v5822 = vadd.f32 0.0, %v5821
        %v5823 = vpop.f32.mrb[0].mxu0
        %5824 = vmatprep.mubr.bf16.mxu0 0
        %5825 = vmatmul.mubr.bf16.gmra.mrb[0].mxu0 %v3988
        %v5826 = vpop.f32.mrb[0].mxu0
        %v5827 = vadd.f32 0.0, %v5826
        %v5828 = vpop.f32.mrb[0].mxu0
        %v5829 = vpop.f32.mrb[0].mxu0
        %v5830 = vadd.f32 0.0, %v5829
        %v5831 = vpop.f32.mrb[0].mxu0
        %5832 = vmatprep.mubr.bf16.mxu0 0
        %5833 = vmatmul.mubr.bf16.gmra.mrb[0].mxu0 %v3996
        %v5834 = vpop.f32.mrb[0].mxu0
        %v5835 = vadd.f32 0.0, %v5834
        %v5836 = vpop.f32.mrb[0].mxu0
        %v5837 = vpop.f32.mrb[0].mxu0
        %v5838 = vadd.f32 0.0, %v5837
        %v5839 = vpop.f32.mrb[0].mxu0
        %5840 = vmatprep.mubr.bf16.mxu0 0
        %5841 = vmatmul.mubr.bf16.gmra.mrb[0].mxu0 %v5670
        %v5842 = vpop.f32.mrb[0].mxu0
        %v5843 = vadd.f32 0.0, %v5842
        %v5844 = vpop.f32.mrb[0].mxu0
        %v5845 = vpop.f32.mrb[0].mxu0
        %v5846 = vadd.f32 0.0, %v5845
        %v5847 = vpop.f32.mrb[0].mxu0
        %5848 = vmatprep.mubr.bf16.mxu0 0
        %5849 = vmatmul.mubr.bf16.gmra.mrb[0].mxu0 %v5676
        %v5850 = vpop.f32.mrb[0].mxu0
        %v5851 = vadd.f32 0.0, %v5850
        %v5852 = vpop.f32.mrb[0].mxu0
        %v5853 = vpop.f32.mrb[0].mxu0
        %v5854 = vadd.f32 0.0, %v5853
        %v5855 = vpop.f32.mrb[0].mxu0
        %5856 = vmatprep.mubr.bf16.mxu0 0
        %5857 = vmatmul.mubr.bf16.gmra.mrb[0].mxu0 %v5684
        %v5858 = vpop.f32.mrb[0].mxu0
        %v5859 = vadd.f32 0.0, %v5858
        %v5860 = vpop.f32.mrb[0].mxu0
        %v5861 = vpop.f32.mrb[0].mxu0
        %v5862 = vadd.f32 0.0, %v5861
        %v5863 = vpop.f32.mrb[0].mxu0
        %5864 = vdwg.mxu0
        %v5865 = vadd.f32 %v5627, %v5771
        %v5866 = vadd.f32 %v5628, %v5774
        %v5867 = vadd.f32 %v5629, %v5779
        %v5868 = vadd.f32 %v5630, %v5782
        %v5869 = vadd.f32 %v5631, %v5787
        %v5870 = vadd.f32 %v5632, %v5790
        %v5871 = vadd.f32 %v5633, %v5795
        %v5872 = vadd.f32 %v5634, %v5798
        %v5873 = vadd.f32 %v5635, %v5803
        %v5874 = vadd.f32 %v5636, %v5806
        %v5875 = vadd.f32 %v5637, %v5811
        %v5876 = vadd.f32 %v5638, %v5814
        %v5877 = vadd.f32 %v5639, %v5819
        %v5878 = vadd.f32 %v5640, %v5822
        %v5879 = vadd.f32 %v5641, %v5827
        %v5880 = vadd.f32 %v5642, %v5830
        %v5881 = vadd.f32 %v5643, %v5835
        %v5882 = vadd.f32 %v5644, %v5838
        %v5883 = vadd.f32 %v5645, %v5843
        %v5884 = vadd.f32 %v5646, %v5846
        %v5885 = vadd.f32 %v5647, %v5851
        %v5886 = vadd.f32 %v5648, %v5854
        %v5887 = vadd.f32 %v5649, %v5859
        %v5888 = vadd.f32 %v5650, %v5862
        %s5889 = scalar_lea.vmem [#allocation10], 512
        %v5890 = vld [vmem:[%s5889] sm:$0xf]
        %v5891 = vld [vmem:[%s5889 + $0x4] sm:$0xf]
        %v5892 = vld [vmem:[%s5889 + $0x8] sm:$0xf]
        %v5893 = vld [vmem:[%s5889 + $0xc] sm:$0xf]
        %v5894 = vld [vmem:[%s5889 + $0x10] sm:$0xf]
        %v5895 = vld [vmem:[%s5889 + $0x14] sm:$0xf]
        %v5896 = vld [vmem:[%s5889 + $0x18] sm:$0xf]
        %v5897 = vld [vmem:[%s5889 + $0x1c] sm:$0xf]
        %v5898 = vld [vmem:[%s5889 + $0x20] sm:$0xf]
        %v5899 = vld [vmem:[%s5889 + $0x24] sm:$0xf]
        %v5900 = vld [vmem:[%s5889 + $0x28] sm:$0xf]
        %v5901 = vld [vmem:[%s5889 + $0x2c] sm:$0xf]
        %v5902 = vld [vmem:[%s5889 + $0x30] sm:$0xf]
        %v5903 = vld [vmem:[%s5889 + $0x34] sm:$0xf]
        %v5904 = vld [vmem:[%s5889 + $0x38] sm:$0xf]
        %v5905 = vld [vmem:[%s5889 + $0x3c] sm:$0xf]
        %v5908 = vrot.slane %v3861, 1
        %v5909 = vsel %vm1051, %v4416, %v5908
        %v5910 = vrot.slane %v3862, 1
        %v5911 = vsel %vm1051, %v5908, %v5910
        %v5912 = vrot.slane %v3863, 1
        %v5913 = vsel %vm1051, %v5910, %v5912
        %v5933 = vunpack.c.l.b16 %v5890
        %v5934 = vunpack.c.l.b16 %v5891
        %v5935 = vunpack.c.l.b16 %v5892
        %v5936 = vunpack.c.l.b16 %v5893
        %v5937 = vunpack.c.l.b16 %v5894
        %v5938 = vunpack.c.l.b16 %v5895
        %v5939 = vunpack.c.l.b16 %v5896
        %v5940 = vunpack.c.l.b16 %v5897
        %v5941 = vunpack.c.l.b16 %v5898
        %v5942 = vunpack.c.l.b16 %v5899
        %v5943 = vunpack.c.l.b16 %v5900
        %v5944 = vunpack.c.l.b16 %v5901
        %v5945 = vunpack.c.l.b16 %v5902
        %v5946 = vunpack.c.l.b16 %v5903
        %v5947 = vunpack.c.l.b16 %v5904
        %v5948 = vunpack.c.l.b16 %v5905
        %v5949 = vpack.c.b16 %v5934, %v5933
        %v5950 = vpack.c.b16 %v5936, %v5935
        %v5951 = vpack.c.b16 %v5938, %v5937
        %v5952 = vpack.c.b16 %v5940, %v5939
        %v5953 = vpack.c.b16 %v5942, %v5941
        %v5954 = vpack.c.b16 %v5944, %v5943
        %v5955 = vpack.c.b16 %v5946, %v5945
        %v5956 = vpack.c.b16 %v5948, %v5947
        %5965 = vmatprep.subr.bf16.mxu0 0
        %5966 = vmatpush1.bf16.msra.mxu0 %v5949
        %5967 = vmatprep.subr.bf16.mxu0 0
        %5968 = vmatpush1.bf16.msra.mxu0 %v5950
        %5969 = vmatprep.subr.bf16.mxu0 0
        %5970 = vmatpush1.bf16.msra.mxu0 %v5951
        %5971 = vmatprep.subr.bf16.mxu0 0
        %5972 = vmatpush1.bf16.msra.mxu0 %v5952
        %5973 = vmatprep.subr.bf16.mxu0 0
        %5974 = vmatpush1.bf16.msra.mxu0 %v5953
        %5975 = vmatprep.subr.bf16.mxu0 0
        %5976 = vmatpush1.bf16.msra.mxu0 %v5954
        %5977 = vmatprep.subr.bf16.mxu0 0
        %5978 = vmatpush1.bf16.msra.mxu0 %v5955
        %5979 = vmatprep.subr.bf16.mxu0 0
        %5980 = vmatpush1.bf16.msra.mxu0 %v5956
        %5981 = vmatprep.subr.bf16.mxu0 0
        %5982 = vmatpush1.bf16.msra.mxu0 0
        %5983 = vmatprep.subr.bf16.mxu0 0
        %5984 = vmatpush1.bf16.msra.mxu0 0
        %5985 = vmatprep.subr.bf16.mxu0 0
        %5986 = vmatpush1.bf16.msra.mxu0 0
        %5987 = vmatprep.subr.bf16.mxu0 0
        %5988 = vmatpush1.bf16.msra.mxu0 0
        %5989 = vmatprep.subr.bf16.mxu0 0
        %5990 = vmatpush1.bf16.msra.mxu0 0
        %5991 = vmatprep.subr.bf16.mxu0 0
        %5992 = vmatpush1.bf16.msra.mxu0 0
        %5993 = vmatprep.subr.bf16.mxu0 0
        %5994 = vmatpush1.bf16.msra.mxu0 0
        %5995 = vmatprep.subr.bf16.mxu0 0
        %5996 = vmatpush1.bf16.msra.mxu0 0
        %5997 = vmatprep.mubr.bf16.mxu0 0
        %5998 = vmatmul.mubr.bf16.gmra.mrb[0].mxu0 %v4401
        %v5999 = vpop.f32.mrb[0].mxu0
        %v6000 = vadd.f32 0.0, %v5999
        %v6001 = vpop.f32.mrb[0].mxu0
        %v6002 = vpop.f32.mrb[0].mxu0
        %v6003 = vadd.f32 0.0, %v6002
        %v6004 = vpop.f32.mrb[0].mxu0
        %6005 = vmatprep.mubr.bf16.mxu0 0
        %6006 = vmatmul.mubr.bf16.gmra.mrb[0].mxu0 %v4403
        %v6007 = vpop.f32.mrb[0].mxu0
        %v6008 = vadd.f32 0.0, %v6007
        %v6009 = vpop.f32.mrb[0].mxu0
        %v6010 = vpop.f32.mrb[0].mxu0
        %v6011 = vadd.f32 0.0, %v6010
        %v6012 = vpop.f32.mrb[0].mxu0
        %6013 = vmatprep.mubr.bf16.mxu0 0
        %6014 = vmatmul.mubr.bf16.gmra.mrb[0].mxu0 %v4405
        %v6015 = vpop.f32.mrb[0].mxu0
        %v6016 = vadd.f32 0.0, %v6015
        %v6017 = vpop.f32.mrb[0].mxu0
        %v6018 = vpop.f32.mrb[0].mxu0
        %v6019 = vadd.f32 0.0, %v6018
        %v6020 = vpop.f32.mrb[0].mxu0
        %6021 = vmatprep.mubr.bf16.mxu0 0
        %6022 = vmatmul.mubr.bf16.gmra.mrb[0].mxu0 %v4407
        %v6023 = vpop.f32.mrb[0].mxu0
        %v6024 = vadd.f32 0.0, %v6023
        %v6025 = vpop.f32.mrb[0].mxu0
        %v6026 = vpop.f32.mrb[0].mxu0
        %v6027 = vadd.f32 0.0, %v6026
        %v6028 = vpop.f32.mrb[0].mxu0
        %6029 = vmatprep.mubr.bf16.mxu0 0
        %6030 = vmatmul.mubr.bf16.gmra.mrb[0].mxu0 %v4409
        %v6031 = vpop.f32.mrb[0].mxu0
        %v6032 = vadd.f32 0.0, %v6031
        %v6033 = vpop.f32.mrb[0].mxu0
        %v6034 = vpop.f32.mrb[0].mxu0
        %v6035 = vadd.f32 0.0, %v6034
        %v6036 = vpop.f32.mrb[0].mxu0
        %6037 = vmatprep.mubr.bf16.mxu0 0
        %6038 = vmatmul.mubr.bf16.gmra.mrb[0].mxu0 %v4411
        %v6039 = vpop.f32.mrb[0].mxu0
        %v6040 = vadd.f32 0.0, %v6039
        %v6041 = vpop.f32.mrb[0].mxu0
        %v6042 = vpop.f32.mrb[0].mxu0
        %v6043 = vadd.f32 0.0, %v6042
        %v6044 = vpop.f32.mrb[0].mxu0
        %6045 = vmatprep.mubr.bf16.mxu0 0
        %6046 = vmatmul.mubr.bf16.gmra.mrb[0].mxu0 %v4413
        %v6047 = vpop.f32.mrb[0].mxu0
        %v6048 = vadd.f32 0.0, %v6047
        %v6049 = vpop.f32.mrb[0].mxu0
        %v6050 = vpop.f32.mrb[0].mxu0
        %v6051 = vadd.f32 0.0, %v6050
        %v6052 = vpop.f32.mrb[0].mxu0
        %6053 = vmatprep.mubr.bf16.mxu0 0
        %6054 = vmatmul.mubr.bf16.gmra.mrb[0].mxu0 %v4415
        %v6055 = vpop.f32.mrb[0].mxu0
        %v6056 = vadd.f32 0.0, %v6055
        %v6057 = vpop.f32.mrb[0].mxu0
        %v6058 = vpop.f32.mrb[0].mxu0
        %v6059 = vadd.f32 0.0, %v6058
        %v6060 = vpop.f32.mrb[0].mxu0
        %6061 = vmatprep.mubr.bf16.mxu0 0
        %6062 = vmatmul.mubr.bf16.gmra.mrb[0].mxu0 %v4417
        %v6063 = vpop.f32.mrb[0].mxu0
        %v6064 = vadd.f32 0.0, %v6063
        %v6065 = vpop.f32.mrb[0].mxu0
        %v6066 = vpop.f32.mrb[0].mxu0
        %v6067 = vadd.f32 0.0, %v6066
        %v6068 = vpop.f32.mrb[0].mxu0
        %6069 = vmatprep.mubr.bf16.mxu0 0
        %6070 = vmatmul.mubr.bf16.gmra.mrb[0].mxu0 %v5909
        %v6071 = vpop.f32.mrb[0].mxu0
        %v6072 = vadd.f32 0.0, %v6071
        %v6073 = vpop.f32.mrb[0].mxu0
        %v6074 = vpop.f32.mrb[0].mxu0
        %v6075 = vadd.f32 0.0, %v6074
        %v6076 = vpop.f32.mrb[0].mxu0
        %6077 = vmatprep.mubr.bf16.mxu0 0
        %6078 = vmatmul.mubr.bf16.gmra.mrb[0].mxu0 %v5911
        %v6079 = vpop.f32.mrb[0].mxu0
        %v6080 = vadd.f32 0.0, %v6079
        %v6081 = vpop.f32.mrb[0].mxu0
        %v6082 = vpop.f32.mrb[0].mxu0
        %v6083 = vadd.f32 0.0, %v6082
        %v6084 = vpop.f32.mrb[0].mxu0
        %6085 = vmatprep.mubr.bf16.mxu0 0
        %6086 = vmatmul.mubr.bf16.gmra.mrb[0].mxu0 %v5913
        %v6087 = vpop.f32.mrb[0].mxu0
        %v6088 = vadd.f32 0.0, %v6087
        %v6089 = vpop.f32.mrb[0].mxu0
        %v6090 = vpop.f32.mrb[0].mxu0
        %v6091 = vadd.f32 0.0, %v6090
        %v6092 = vpop.f32.mrb[0].mxu0
        %6093 = vdwg.mxu0
        %v6094 = vadd.f32 %v5865, %v6000
        %v6095 = vadd.f32 %v5866, %v6003
        %v6096 = vadd.f32 %v5867, %v6008
        %v6097 = vadd.f32 %v5868, %v6011
        %v6098 = vadd.f32 %v5869, %v6016
        %v6099 = vadd.f32 %v5870, %v6019
        %v6100 = vadd.f32 %v5871, %v6024
        %v6101 = vadd.f32 %v5872, %v6027
        %v6102 = vadd.f32 %v5873, %v6032
        %v6103 = vadd.f32 %v5874, %v6035
        %v6104 = vadd.f32 %v5875, %v6040
        %v6105 = vadd.f32 %v5876, %v6043
        %v6106 = vadd.f32 %v5877, %v6048
        %v6107 = vadd.f32 %v5878, %v6051
        %v6108 = vadd.f32 %v5879, %v6056
        %v6109 = vadd.f32 %v5880, %v6059
        %v6110 = vadd.f32 %v5881, %v6064
        %v6111 = vadd.f32 %v5882, %v6067
        %v6112 = vadd.f32 %v5883, %v6072
        %v6113 = vadd.f32 %v5884, %v6075
        %v6114 = vadd.f32 %v5885, %v6080
        %v6115 = vadd.f32 %v5886, %v6083
        %v6116 = vadd.f32 %v5887, %v6088
        %v6117 = vadd.f32 %v5888, %v6091
        %v6118 = vld [vmem:[#allocation11] sm:$0x1]
        %v6120 = vlaneseq
        %v6121 = vshrl.u32 %v6120, 7
        %v6122 = vsub.s32 0, %v6121
        %v6123 = vrot.slane %v6118, %v6122
        %v6125 = vmul.f32 %v6094, %v6123
        %v6126 = vmul.f32 %v6095, %v6123
        %v6127 = vmul.f32 %v6096, %v6123
        %v6128 = vmul.f32 %v6097, %v6123
        %v6129 = vmul.f32 %v6098, %v6123
        %v6130 = vmul.f32 %v6099, %v6123
        %v6131 = vmul.f32 %v6100, %v6123
        %v6132 = vmul.f32 %v6101, %v6123
        %v6133 = vmul.f32 %v6102, %v6123
        %v6134 = vmul.f32 %v6103, %v6123
        %v6135 = vmul.f32 %v6104, %v6123
        %v6136 = vmul.f32 %v6105, %v6123
        %v6137 = vmul.f32 %v6106, %v6123
        %v6138 = vmul.f32 %v6107, %v6123
        %v6139 = vmul.f32 %v6108, %v6123
        %v6140 = vmul.f32 %v6109, %v6123
        %v6141 = vmul.f32 %v6110, %v6123
        %v6142 = vmul.f32 %v6111, %v6123
        %v6143 = vmul.f32 %v6112, %v6123
        %v6144 = vmul.f32 %v6113, %v6123
        %v6145 = vmul.f32 %v6114, %v6123
        %v6146 = vmul.f32 %v6115, %v6123
        %v6147 = vmul.f32 %v6116, %v6123
        %v6148 = vmul.f32 %v6117, %v6123
        %v6149 = vld [vmem:[#allocation13] sm:$0x1]
        %v6151 = vlaneseq
        %v6152 = vshrl.u32 %v6151, 7
        %v6153 = vsub.s32 0, %v6152
        %v6154 = vrot.slane %v6149, %v6153
        %v6156 = vadd.f32 %v6125, %v6154
        %v6157 = vadd.f32 %v6126, %v6154
        %v6158 = vadd.f32 %v6127, %v6154
        %v6159 = vadd.f32 %v6128, %v6154
        %v6160 = vadd.f32 %v6129, %v6154
        %v6161 = vadd.f32 %v6130, %v6154
        %v6162 = vadd.f32 %v6131, %v6154
        %v6163 = vadd.f32 %v6132, %v6154
        %v6164 = vadd.f32 %v6133, %v6154
        %v6165 = vadd.f32 %v6134, %v6154
        %v6166 = vadd.f32 %v6135, %v6154
        %v6167 = vadd.f32 %v6136, %v6154
        %v6168 = vadd.f32 %v6137, %v6154
        %v6169 = vadd.f32 %v6138, %v6154
        %v6170 = vadd.f32 %v6139, %v6154
        %v6171 = vadd.f32 %v6140, %v6154
        %v6172 = vadd.f32 %v6141, %v6154
        %v6173 = vadd.f32 %v6142, %v6154
        %v6174 = vadd.f32 %v6143, %v6154
        %v6175 = vadd.f32 %v6144, %v6154
        %v6176 = vadd.f32 %v6145, %v6154
        %v6177 = vadd.f32 %v6146, %v6154
        %v6178 = vadd.f32 %v6147, %v6154
        %v6179 = vadd.f32 %v6148, %v6154
        %v6180 = vmax.f32 %v6156, 0.0
        %v6181 = vmax.f32 %v6157, 0.0
        %v6182 = vmax.f32 %v6158, 0.0
        %v6183 = vmax.f32 %v6159, 0.0
        %v6184 = vmax.f32 %v6160, 0.0
        %v6185 = vmax.f32 %v6161, 0.0
        %v6186 = vmax.f32 %v6162, 0.0
        %v6187 = vmax.f32 %v6163, 0.0
        %v6188 = vmax.f32 %v6164, 0.0
        %v6189 = vmax.f32 %v6165, 0.0
        %v6190 = vmax.f32 %v6166, 0.0
        %v6191 = vmax.f32 %v6167, 0.0
        %v6192 = vmax.f32 %v6168, 0.0
        %v6193 = vmax.f32 %v6169, 0.0
        %v6194 = vmax.f32 %v6170, 0.0
        %v6195 = vmax.f32 %v6171, 0.0
        %v6196 = vmax.f32 %v6172, 0.0
        %v6197 = vmax.f32 %v6173, 0.0
        %v6198 = vmax.f32 %v6174, 0.0
        %v6199 = vmax.f32 %v6175, 0.0
        %v6200 = vmax.f32 %v6176, 0.0
        %v6201 = vmax.f32 %v6177, 0.0
        %v6202 = vmax.f32 %v6178, 0.0
        %v6203 = vmax.f32 %v6179, 0.0
        %v6204 = vpack.c.bf16 %v6181, %v6180
        %v6205 = vpack.c.bf16 %v6183, %v6182
        %v6206 = vpack.c.bf16 %v6185, %v6184
        %v6207 = vpack.c.bf16 %v6187, %v6186
        %v6208 = vpack.c.bf16 %v6189, %v6188
        %v6209 = vpack.c.bf16 %v6191, %v6190
        %v6210 = vpack.c.bf16 %v6193, %v6192
        %v6211 = vpack.c.bf16 %v6195, %v6194
        %v6212 = vpack.c.bf16 %v6197, %v6196
        %v6213 = vpack.c.bf16 %v6199, %v6198
        %v6214 = vpack.c.bf16 %v6201, %v6200
        %v6215 = vpack.c.bf16 %v6203, %v6202
        %v6228 = vunpack.c.l.b16 %v6204
        %v6229 = vunpack.c.h.b16 %v6204
        %v6230 = vunpack.c.l.b16 %v6205
        %v6231 = vunpack.c.h.b16 %v6205
        %v6232 = vunpack.c.l.b16 %v6206
        %v6233 = vunpack.c.h.b16 %v6206
        %v6234 = vunpack.c.l.b16 %v6207
        %v6235 = vunpack.c.h.b16 %v6207
        %v6236 = vunpack.c.l.b16 %v6208
        %v6237 = vunpack.c.h.b16 %v6208
        %v6238 = vunpack.c.l.b16 %v6209
        %v6239 = vunpack.c.h.b16 %v6209
        %v6240 = vunpack.c.l.b16 %v6210
        %v6241 = vunpack.c.h.b16 %v6210
        %v6242 = vunpack.c.l.b16 %v6211
        %v6243 = vunpack.c.h.b16 %v6211
        %v6244 = vunpack.c.l.b16 %v6212
        %v6245 = vunpack.c.h.b16 %v6212
        %v6246 = vunpack.c.l.b16 %v6213
        %v6247 = vunpack.c.h.b16 %v6213
        %v6248 = vunpack.c.l.b16 %v6214
        %v6249 = vunpack.c.h.b16 %v6214
        %v6250 = vunpack.c.l.b16 %v6215
        %v6251 = vunpack.c.h.b16 %v6215
        %v6252 = vpack.c.b16 %v6228, %v6228
        %v6253 = vpack.c.b16 %v6229, %v6229
        %v6254 = vpack.c.b16 %v6230, %v6230
        %v6255 = vpack.c.b16 %v6231, %v6231
        %v6256 = vpack.c.b16 %v6232, %v6232
        %v6257 = vpack.c.b16 %v6233, %v6233
        %v6258 = vpack.c.b16 %v6234, %v6234
        %v6259 = vpack.c.b16 %v6235, %v6235
        %v6260 = vpack.c.b16 %v6236, %v6236
        %v6261 = vpack.c.b16 %v6237, %v6237
        %v6262 = vpack.c.b16 %v6238, %v6238
        %v6263 = vpack.c.b16 %v6239, %v6239
        %v6264 = vpack.c.b16 %v6240, %v6240
        %v6265 = vpack.c.b16 %v6241, %v6241
        %v6266 = vpack.c.b16 %v6242, %v6242
        %v6267 = vpack.c.b16 %v6243, %v6243
        %v6268 = vpack.c.b16 %v6244, %v6244
        %v6269 = vpack.c.b16 %v6245, %v6245
        %v6270 = vpack.c.b16 %v6246, %v6246
        %v6271 = vpack.c.b16 %v6247, %v6247
        %v6272 = vpack.c.b16 %v6248, %v6248
        %v6273 = vpack.c.b16 %v6249, %v6249
        %v6274 = vpack.c.b16 %v6250, %v6250
        %v6275 = vpack.c.b16 %v6251, %v6251
        %6300 = vst [vmem:[%s393] sm:$0xf] %v6252
        %6301 = vst [vmem:[%s393 + $0x4] sm:$0xf] %v6253
        %6302 = vst [vmem:[%s393 + $0x8] sm:$0xf] %v6254
        %6303 = vst [vmem:[%s393 + $0xc] sm:$0xf] %v6255
        %6304 = vst [vmem:[%s393 + $0x10] sm:$0xf] %v6256
        %6305 = vst [vmem:[%s393 + $0x14] sm:$0xf] %v6257
        %6306 = vst [vmem:[%s393 + $0x18] sm:$0xf] %v6258
        %6307 = vst [vmem:[%s393 + $0x1c] sm:$0xf] %v6259
        %6308 = vst [vmem:[%s393 + $0x20] sm:$0xf] %v6260
        %6309 = vst [vmem:[%s393 + $0x24] sm:$0xf] %v6261
        %6310 = vst [vmem:[%s393 + $0x28] sm:$0xf] %v6262
        %6311 = vst [vmem:[%s393 + $0x2c] sm:$0xf] %v6263
        %6312 = vst [vmem:[%s393 + $0x30] sm:$0xf] %v6264
        %6313 = vst [vmem:[%s393 + $0x34] sm:$0xf] %v6265
        %6314 = vst [vmem:[%s393 + $0x38] sm:$0xf] %v6266
        %6315 = vst [vmem:[%s393 + $0x3c] sm:$0xf] %v6267
        %6316 = vst [vmem:[%s393 + $0x40] sm:$0xf] %v6268
        %6317 = vst [vmem:[%s393 + $0x44] sm:$0xf] %v6269
        %6318 = vst [vmem:[%s393 + $0x48] sm:$0xf] %v6270
        %6319 = vst [vmem:[%s393 + $0x4c] sm:$0xf] %v6271
        %6320 = vst [vmem:[%s393 + $0x50] sm:$0xf] %v6272
        %6321 = vst [vmem:[%s393 + $0x54] sm:$0xf] %v6273
        %6322 = vst [vmem:[%s393 + $0x58] sm:$0xf] %v6274
        %6323 = vst [vmem:[%s393 + $0x5c] sm:$0xf] %v6275
        %s6324 = sand.u32 %s203, 1
        %s6325 = scalar_lea.sflag [#allocation4], %s6324
        %s6326 = sand.u32 %s203, 1
        %s6327 = smul.addr %s6326, 96
        %s6328 = scalar_lea.vmem [#allocation14], %s6327
        // Predicated region
        $region77: #{tpu_custom_call.1} parent=47 // pred_check
          %p6329 = pneg %p213
        $region78: #{tpu_custom_call.1} parent=47 // pred_check_branch
          %6331 = sbr.rel (%p6329) target = $region80
        $region79: #{tpu_custom_call.1} parent=47 // pred_region
          %s6333 = ssub.s32 1536, 1536
          %6334 = vsyncadd %s6325, %s6333
          %s6335 = smul.addr %s32, 24
          %s6336 = smul.addr %s31, 48
          %s6337 = sadd.s32 %s6335, %s6336
          %s6338 = smul.addr %s6337, 64
          %s6339 = scalar_lea.hbm %s7, %s6338
          %s6340 = sshll.u32 %s6328, 4
          %s6341 = int_to_ptr.vmem [resolvable:$true] %s6340
          %6346 = dma.vmem_to_hbm [thread:$0]  %s6341, 1536, %s6339, %s6325, 64, 64, 4
        $region80: #{tpu_custom_call.1} parent=47 // pred_fallthru
          _
      $region48: #{tpu_custom_call.1} parent=5 // pred_fallthru
        _
      %p6347 = scmp.le.s32.totalorder 2, %s22
      // Predicated region
      $region81: #{tpu_custom_call.1} parent=5 // pred_check
        %p6348 = pneg %p6347
      $region82: #{tpu_custom_call.1} parent=5 // pred_check_branch
        %6350 = sbr.rel (%p6348) target = $region84
      $region83: #{tpu_custom_call.1} parent=5 // pred_region
        %s6351 = ssub.s32 %s22, 2
        // Predicated region
        $region85: #{tpu_custom_call.1} parent=83 // pred_check
          %p6352 = pneg %p219
        $region86: #{tpu_custom_call.1} parent=83 // pred_check_branch
          %6354 = sbr.rel (%p6352) target = $region88
        $region87: #{tpu_custom_call.1} parent=83 // pred_region
          %s6355 = sand.u32 %s204, 1
          %s6356 = scalar_lea.sflag [#allocation4], %s6355
          %s6357 = sand.u32 %s204, 1
          %s6358 = smul.addr %s6357, 96
          %s6359 = scalar_lea.vmem [#allocation14], %s6358
          %6360 = dma.done %s6356, 1536
        $region88: #{tpu_custom_call.1} parent=83 // pred_fallthru
          _
      $region84: #{tpu_custom_call.1} parent=5 // pred_fallthru
        _
    $region6: #{tpu_custom_call.1} parent=1 // loop_footer
      %s26 = sadd.s32 1, %s22
    $region7: #{tpu_custom_call.1} parent=1 // loop_footer_branch
      %21 = sbr.rel target = $region3
    $region8: #{tpu_custom_call.1} parent=1 // loop_exit
      _
    %6361 = vsyncpa [#allocation3], 1
    %s6362 = scalar_lea.sflag [#allocation3], 1
    %6363 = vsyncpa %s6362, 1
    %6364 = vsyncpa [#allocation6], 1
    %6365 = vsyncpa [#allocation9], 1
    %6366 = vsyncpa [#allocation12], 1
    %6367 = vsyncpa [#allocation4], 1
    %s6368 = scalar_lea.sflag [#allocation4], 1
    %6369 = vsyncpa %s6368, 1

</llo_original>
